<compile_context>
chip_gen: v7x
topology: tpu7x:2x2x1
jax: 0.10.0
libtpu: 0.0.40
codegen_flags: <defaults>
</compile_context>

<pallas_src>
import functools

import jax
import jax.numpy as jnp
from jax.experimental import pallas as pl
from jax.experimental.pallas import tpu as pltpu

_BF16 = jnp.bfloat16


# ----------------------------------------------------------------------------
# In-kernel value helpers (operate on loaded VMEM values, not refs).
# ----------------------------------------------------------------------------
def _pad_hw1(x):
    """Zero-pad an (H, W, C) value by 1 on each spatial side, in VMEM."""
    H, W, C = x.shape
    zr = jnp.zeros((1, W, C), x.dtype)
    x = jnp.concatenate([zr, x, zr], axis=0)            # (H+2, W, C)
    zc = jnp.zeros((H + 2, 1, C), x.dtype)
    return jnp.concatenate([zc, x, zc], axis=1)         # (H+2, W+2, C)


def _conv3x3_bn(x, w9, sb, *, stride=1, relu=False):
    """3x3 conv (padding=1) + folded BN on an (H, W, Cin) value.

    w9: HWIO (3,3,Cin,Cout) weight pre-reshaped to (9*Cin, Cout), bf16.
    sb: (2, Cout) f32 = [scale; bias] of the folded BatchNorm.
    Matmul operands are bf16, accumulation is f32 (single MXU pass).
    """
    H, W, Cin = x.shape
    Cout = w9.shape[-1]
    Ho, Wo = H // stride, W // stride
    xp = _pad_hw1(x.astype(_BF16))

    def tap(ky, kx):
        if stride == 1:
            return xp[ky:ky + H, kx:kx + W, :]
        # stride > 1: take the strided taps directly (never build full-res
        # patches and subsample afterwards).
        return jax.lax.slice(
            xp, (ky, kx, 0),
            (ky + (Ho - 1) * stride + 1, kx + (Wo - 1) * stride + 1, Cin),
            (stride, stride, 1))

    if Cin < 128:
        # Small Cin: one im2col matmul with a 9*Cin contraction.
        patches = jnp.concatenate(
            [tap(ky, kx) for ky in range(3) for kx in range(3)], axis=-1)
        acc = jnp.dot(patches.reshape(Ho * Wo, 9 * Cin), w9,
                      preferred_element_type=jnp.float32)
    else:
        # Large Cin: accumulate 9 per-tap dots (no 9x im2col VMEM blow-up).
        acc = jnp.zeros((Ho * Wo, Cout), jnp.float32)
        k = 0
        for ky in range(3):
            for kx in range(3):
                acc = acc + jnp.dot(tap(ky, kx).reshape(Ho * Wo, Cin),
                                    w9[k * Cin:(k + 1) * Cin, :],
                                    preferred_element_type=jnp.float32)
                k += 1

    y = acc * sb[0:1, :] + sb[1:2, :]
    if relu:
        y = jnp.maximum(y, 0.0)
    return y.reshape(Ho, Wo, Cout)


def _avgpool(x, r):
    """r x r average pool (stride r) of an (H, W, C) value via static slices."""
    H, W, C = x.shape
    Hp, Wp = H // r, W // r
    xr = x.reshape(Hp, r, W, C)
    acc = xr[:, 0]
    for t in range(1, r):
        acc = acc + xr[:, t]
    xc = acc.reshape(Hp, Wp, r, C)
    acc = xc[:, :, 0]
    for t in range(1, r):
        acc = acc + xc[:, :, t]
    return acc * (1.0 / (r * r))


def _upsample_nearest(x, r, H, W):
    """Nearest-neighbor upsample (Hp, Wp, C) -> (H, W, C), H=Hp*r, W=Wp*r."""
    Hp, Wp, C = x.shape
    x = jnp.broadcast_to(x[:, None, :, :], (Hp, r, Wp, C)).reshape(H, Wp, C)
    x = jnp.broadcast_to(x[:, :, None, :], (H, Wp, r, C)).reshape(H, W, C)
    return x


# ----------------------------------------------------------------------------
# Kernel 1 (stem): fused conv1_a|conv1_b (1x1) + BN + ReLU, k1, k2 head.
# ----------------------------------------------------------------------------
def _stem_kernel(x_ref, w1ab_ref, sb1a_ref, sb1b_ref, wk1_ref, sbk1_ref,
                 wk2_ref, sbk2_ref, outa_ref, outb_ref, k2_ref,
                 *, stride, pooling_r):
    _, H, W, Cin = x_ref.shape
    p2 = w1ab_ref.shape[1]
    p = p2 // 2

    xm = x_ref[...].reshape(H * W, Cin).astype(_BF16)
    # conv1_a and conv1_b share the LHS -> one MXU matmul with 2p output cols.
    ab = jnp.dot(xm, w1ab_ref[...], preferred_element_type=jnp.float32)

    sb1a = sb1a_ref[...]
    sb1b = sb1b_ref[...]
    a0 = jnp.maximum(ab[:, :p] * sb1a[0:1, :] + sb1a[1:2, :], 0.0)
    b0 = jnp.maximum(ab[:, p:] * sb1b[0:1, :] + sb1b[1:2, :], 0.0)

    # branch a: k1 = conv3x3(stride) + BN + ReLU
    out_a = _conv3x3_bn(a0.reshape(H, W, p), wk1_ref[...], sbk1_ref[...],
                        stride=stride, relu=True)
    outa_ref[...] = out_a.reshape(outa_ref.shape).astype(outa_ref.dtype)

    # branch b input of SCConv (stored bf16 in HBM)
    outb_ref[...] = b0.reshape(outb_ref.shape).astype(outb_ref.dtype)

    # SCConv k2 head: AvgPool(r) -> conv3x3 -> BN (pooled tensor stays in VMEM)
    pooled = _avgpool(b0.reshape(H, W, p), pooling_r)
    k2 = _conv3x3_bn(pooled, wk2_ref[...], sbk2_ref[...], stride=1, relu=False)
    k2_ref[...] = k2.reshape(k2_ref.shape).astype(k2_ref.dtype)


# ----------------------------------------------------------------------------
# Kernel 2 (SCConv main path + head):
#   out_b = k4( k3(x) * sigmoid(x + upsample(k2)) )
#   out   = ReLU( conv3(concat[out_a, out_b]) + bn3 + residual )
# conv3 on concat == a @ W3[:p] + b @ W3[p:]  (no concat materialized).
# ----------------------------------------------------------------------------
def _scconv_head_kernel(xb_ref, k2_ref, outa_ref, res_ref,
                        wk3_ref, sbk3_ref, wk4_ref, sbk4_ref,
                        w3a_ref, w3b_ref, sb3_ref, o_ref,
                        *, stride, pooling_r):
    _, H, W, p = xb_ref.shape
    c3 = w3a_ref.shape[1]
    Ho, Wo = H // stride, W // stride

    xb = xb_ref[...].reshape(H, W, p)                       # bf16
    xb_f32 = xb.astype(jnp.float32)

    # k3: conv3x3 + BN (kept in VMEM, gated below)
    k3 = _conv3x3_bn(xb, wk3_ref[...], sbk3_ref[...], stride=1, relu=False)

    # gate = sigmoid(identity + nearest_upsample(k2)); upsample done in VMEM.
    Hp, Wp = H // pooling_r, W // pooling_r
    k2 = k2_ref[...].reshape(Hp, Wp, p).astype(jnp.float32)
    k2u = _upsample_nearest(k2, pooling_r, H, W)
    s = xb_f32 + k2u
    gate = 1.0 / (1.0 + jnp.exp(-s))
    fused = k3 * gate

    # k4: conv3x3(stride) + BN + ReLU, computed directly at strided positions.
    out_b = _conv3x3_bn(fused, wk4_ref[...], sbk4_ref[...],
                        stride=stride, relu=True)

    # head: conv3 (1x1) + bn3 + residual + ReLU (fused epilogue, out_b never
    # round-trips through HBM).
    a = outa_ref[...].reshape(Ho * Wo, p).astype(_BF16)
    b = out_b.reshape(Ho * Wo, p).astype(_BF16)
    acc = jnp.dot(a, w3a_ref[...], preferred_element_type=jnp.float32)
    acc = acc + jnp.dot(b, w3b_ref[...], preferred_element_type=jnp.float32)
    sb3 = sb3_ref[...]
    y = acc * sb3[0:1, :] + sb3[1:2, :]
    y = y + res_ref[...].reshape(Ho * Wo, c3).astype(jnp.float32)
    y = jnp.maximum(y, 0.0)
    o_ref[...] = y.reshape(o_ref.shape).astype(o_ref.dtype)


# ----------------------------------------------------------------------------
# Wrapper
# ----------------------------------------------------------------------------
def _fold_bn(bn, eps=1e-5):
    """Inference BN folded to a single (2, C) f32 array: [scale; bias]."""
    gamma, beta, mean, var = bn
    scale = gamma / jnp.sqrt(var + eps)
    bias = beta - mean * scale
    return jnp.stack([scale, bias]).astype(jnp.float32)


def scbottleneck_forward(x_nchw, params, *, stride=1, pooling_r=4):
    """Inference-mode SCBottleneck forward (downsample=None)."""
    x = jnp.transpose(x_nchw, (0, 2, 3, 1))                 # NCHW -> NHWC
    N, H, W, Cin = x.shape
    p = params["w1a"].shape[-1]
    c3 = params["w3"].shape[-1]
    r = pooling_r
    assert H % r == 0 and W % r == 0, "H, W must be divisible by pooling_r"
    assert stride == 1 and Cin == c3, \
        "identity residual (downsample=None) needs stride=1, Cin==planes*2*expansion"

    Ho, Wo = H // stride, W // stride
    Hp, Wp = H // r, W // r

    # Fold all BatchNorms (inference) into packed (2, C) [scale; bias] consts.
    sb1a = _fold_bn(params["bn1a"])
    sb1b = _fold_bn(params["bn1b"])
    sbk1 = _fold_bn(params["bnk1"])
    sbk2 = _fold_bn(params["bnk2"])
    sbk3 = _fold_bn(params["bnk3"])
    sbk4 = _fold_bn(params["bnk4"])
    sb3 = _fold_bn(params["bn3"])

    # conv1_a|conv1_b fused into one (Cin, 2p) weight; 3x3 HWIO weights
    # pre-reshaped to (9*Cin, Cout). All matmul weights stored as bf16.
    w1ab = jnp.concatenate([params["w1a"], params["w1b"]], axis=1).astype(_BF16)
    wk1 = params["wk1"].reshape(9 * p, p).astype(_BF16)
    wk2 = params["wk2"].reshape(9 * p, p).astype(_BF16)
    wk3 = params["wk3"].reshape(9 * p, p).astype(_BF16)
    wk4 = params["wk4"].reshape(9 * p, p).astype(_BF16)
    w3a = params["w3"][:p].astype(_BF16)
    w3b = params["w3"][p:].astype(_BF16)

    def img_spec(h, w, c):
        return pl.BlockSpec((1, h, w, c), lambda n: (n, 0, 0, 0))

    def const_spec(a):
        nd = a.ndim
        return pl.BlockSpec(a.shape, lambda n: (0,) * nd)

    def cparams(est_bytes):
        # explicit scoped-VMEM limit (default 16/32 MiB is below physical);
        # clamp to 64 MiB so it is valid on v7x as well.
        lim = int(min(max(est_bytes, 32 * 1024 * 1024), 64 * 1024 * 1024))
        return pltpu.CompilerParams(dimension_semantics=("parallel",),
                                    vmem_limit_bytes=lim)

    per_img = H * W
    est1 = 6 * (4 * per_img * Cin + 2 * per_img * p * 13 + 4 * per_img * 2 * p)
    est2 = 6 * (2 * per_img * p * 11 + 4 * per_img * (c3 + 4 * p)
                + 4 * per_img * c3)

    # ---- call 1: stem (fused 1x1 convs, k1, k2 head) ------------------------
    out_a, out_b0, k2 = pl.pallas_call(
        functools.partial(_stem_kernel, stride=stride, pooling_r=r),
        out_shape=(jax.ShapeDtypeStruct((N, Ho, Wo, p), _BF16),
                   jax.ShapeDtypeStruct((N, H, W, p), _BF16),
                   jax.ShapeDtypeStruct((N, Hp, Wp, p), _BF16)),
        grid=(N,),
        in_specs=[img_spec(H, W, Cin),
                  const_spec(w1ab), const_spec(sb1a), const_spec(sb1b),
                  const_spec(wk1), const_spec(sbk1),
                  const_spec(wk2), const_spec(sbk2)],
        out_specs=(img_spec(Ho, Wo, p), img_spec(H, W, p), img_spec(Hp, Wp, p)),
        compiler_params=cparams(est1),
    )(x, w1ab, sb1a, sb1b, wk1, sbk1, wk2, sbk2)

    # ---- call 2: SCConv main path + fused head -------------------------------
    out = pl.pallas_call(
        functools.partial(_scconv_head_kernel, stride=stride, pooling_r=r),
        out_shape=jax.ShapeDtypeStruct((N, Ho, Wo, c3), x.dtype),
        grid=(N,),
        in_specs=[img_spec(H, W, p), img_spec(Hp, Wp, p), img_spec(Ho, Wo, p),
                  img_spec(H, W, c3),
                  const_spec(wk3), const_spec(sbk3),
                  const_spec(wk4), const_spec(sbk4),
                  const_spec(w3a), const_spec(w3b), const_spec(sb3)],
        out_specs=img_spec(Ho, Wo, c3),
        compiler_params=cparams(est2),
    )(out_b0, k2, out_a, x, wk3, sbk3, wk4, sbk4, w3a, w3b, sb3)

    return jnp.transpose(out, (0, 3, 1, 2))                 # NHWC -> NCHW


# ----------------------------------------------------------------------------
# Pure-JAX reference (correctness check). Matmul operands are cast to bf16 with
# f32 accumulation, matching the kernel's MXU precision.
# ----------------------------------------------------------------------------
def _conv3x3_ref(x, w, stride=1):
    return jax.lax.conv_general_dilated(
        x.astype(_BF16), w.astype(_BF16), (stride, stride), ((1, 1), (1, 1)),
        dimension_numbers=("NHWC", "HWIO", "NHWC"),
        preferred_element_type=jnp.float32)


def _bn_ref(y, bn, eps=1e-5):
    g, b, m, v = bn
    return (y - m) / jnp.sqrt(v + eps) * g + b


def scbottleneck_ref(x_nchw, params, *, stride=1, pooling_r=4):
    x = jnp.transpose(x_nchw, (0, 2, 3, 1))
    N, H, W, _ = x.shape
    p = params["w1a"].shape[-1]
    relu = lambda t: jnp.maximum(t, 0.0)
    conv1x1 = lambda t, w: jnp.einsum("nhwc,cd->nhwd",
                                      t.astype(_BF16), w.astype(_BF16),
                                      preferred_element_type=jnp.float32)

    out_a = relu(_bn_ref(conv1x1(x, params["w1a"]), params["bn1a"]))
    out_a = relu(_bn_ref(_conv3x3_ref(out_a, params["wk1"], stride),
                         params["bnk1"]))

    out_b = relu(_bn_ref(conv1x1(x, params["w1b"]), params["bn1b"]))
    r = pooling_r
    pooled = out_b.reshape(N, H // r, r, W // r, r, p).mean(axis=(2, 4))
    k2 = _bn_ref(_conv3x3_ref(pooled, params["wk2"]), params["bnk2"])
    k2_up = jnp.repeat(jnp.repeat(k2, r, axis=1), r, axis=2)
    gate = jax.nn.sigmoid(out_b + k2_up)
    k3 = _bn_ref(_conv3x3_ref(out_b, params["wk3"]), params["bnk3"])
    out_b = relu(_bn_ref(_conv3x3_ref(k3 * gate, params["wk4"], stride),
                         params["bnk4"]))

    cat = jnp.concatenate([out_a, out_b], axis=-1)
    out = _bn_ref(conv1x1(cat, params["w3"]), params["bn3"])
    out = relu(out + x)          # downsample=None, stride=1 -> identity residual
    return jnp.transpose(out, (0, 3, 1, 2))


# ----------------------------------------------------------------------------
if __name__ == "__main__":
    N, inplanes, H, W = 2, 32, 16, 16
    planes = 8                       # SCBottleneck halves it: internal p = 4
    p = planes // 2
    stride, pooling_r = 1, 4
    c3 = p * 2 * 4                   # expansion = 4 -> 32 == inplanes

    key = jax.random.PRNGKey(0)
    ks = iter(jax.random.split(key, 64))

    def make_bn(c):
        gamma = 1.0 + 0.1 * jax.random.normal(next(ks), (c,), jnp.float32)
        beta = 0.1 * jax.random.normal(next(ks), (c,), jnp.float32)
        mean = 0.1 * jax.random.normal(next(ks), (c,), jnp.float32)
        var = 1.0 + 0.5 * jax.random.uniform(next(ks), (c,), jnp.float32)
        return (gamma, beta, mean, var)

    x = jax.random.normal(next(ks), (N, inplanes, H, W), jnp.float32)
    params = {
        "w1a": 0.3 * jax.random.normal(next(ks), (inplanes, p), jnp.float32),
        "bn1a": make_bn(p),
        "w1b": 0.3 * jax.random.normal(next(ks), (inplanes, p), jnp.float32),
        "bn1b": make_bn(p),
        "wk1": 0.3 * jax.random.normal(next(ks), (3, 3, p, p), jnp.float32),
        "bnk1": make_bn(p),
        "wk2": 0.3 * jax.random.normal(next(ks), (3, 3, p, p), jnp.float32),
        "bnk2": make_bn(p),
        "wk3": 0.3 * jax.random.normal(next(ks), (3, 3, p, p), jnp.float32),
        "bnk3": make_bn(p),
        "wk4": 0.3 * jax.random.normal(next(ks), (3, 3, p, p), jnp.float32),
        "bnk4": make_bn(p),
        "w3": 0.3 * jax.random.normal(next(ks), (2 * p, c3), jnp.float32),
        "bn3": make_bn(c3),
    }

    out = scbottleneck_forward(x, params, stride=stride, pooling_r=pooling_r)
    out = jax.block_until_ready(out)

    ref = scbottleneck_ref(x, params, stride=stride, pooling_r=pooling_r)
    assert out.shape == ref.shape == (N, c3, H // stride, W // stride), out.shape
    # Tolerance accounts for bf16 MXU operands + bf16 inter-call intermediates
    # (inference-grade precision); structural bugs would be O(1) errors.
    max_err = float(jnp.max(jnp.abs(out - ref)))
    assert max_err < 5e-2, f"max abs diff too large: {max_err}"

    print("KERNEL_OK")
</pallas_src>

<mosaic_0001>
module attributes {stable_mosaic.version = 11 : i64} {
  func.func @_stem_kernel(%arg0: i32, %arg1: memref<1x16x16x32xf32, #tpu.memory_space<vmem>>, %arg2: memref<32x8xbf16, #tpu.memory_space<vmem>>, %arg3: memref<2x4xf32, #tpu.memory_space<vmem>>, %arg4: memref<2x4xf32, #tpu.memory_space<vmem>>, %arg5: memref<36x4xbf16, #tpu.memory_space<vmem>>, %arg6: memref<2x4xf32, #tpu.memory_space<vmem>>, %arg7: memref<36x4xbf16, #tpu.memory_space<vmem>>, %arg8: memref<2x4xf32, #tpu.memory_space<vmem>>, %arg9: memref<1x16x16x4xbf16, #tpu.memory_space<vmem>>, %arg10: memref<1x16x16x4xbf16, #tpu.memory_space<vmem>>, %arg11: memref<1x4x4x4xbf16, #tpu.memory_space<vmem>>) attributes {dimension_semantics = [#tpu.dimension_semantics<parallel>], iteration_bounds = array<i64: 2>, scalar_prefetch = 0 : i64, scratch_operands = 0 : i64, tpu.core_type = #tpu.core_type<tc>, window_params = [{transform_indices = @transform_0, window_bounds = array<i64: 1, 16, 16, 32>}, {pipeline_mode = #tpu.pipeline_mode<synchronous>, transform_indices = @transform_1, window_bounds = array<i64: 32, 8>}, {pipeline_mode = #tpu.pipeline_mode<synchronous>, transform_indices = @transform_2, window_bounds = array<i64: 2, 4>}, {pipeline_mode = #tpu.pipeline_mode<synchronous>, transform_indices = @transform_3, window_bounds = array<i64: 2, 4>}, {pipeline_mode = #tpu.pipeline_mode<synchronous>, transform_indices = @transform_4, window_bounds = array<i64: 36, 4>}, {pipeline_mode = #tpu.pipeline_mode<synchronous>, transform_indices = @transform_5, window_bounds = array<i64: 2, 4>}, {pipeline_mode = #tpu.pipeline_mode<synchronous>, transform_indices = @transform_6, window_bounds = array<i64: 36, 4>}, {pipeline_mode = #tpu.pipeline_mode<synchronous>, transform_indices = @transform_7, window_bounds = array<i64: 2, 4>}, {transform_indices = @transform_8, window_bounds = array<i64: 1, 16, 16, 4>}, {transform_indices = @transform_9, window_bounds = array<i64: 1, 16, 16, 4>}, {transform_indices = @transform_10, window_bounds = array<i64: 1, 4, 4, 4>}]} {
    %c0 = arith.constant 0 : index
    %c0_0 = arith.constant 0 : index
    %c0_1 = arith.constant 0 : index
    %c0_2 = arith.constant 0 : index
    %0 = vector.load %arg1[%c0, %c0_0, %c0_1, %c0_2] : memref<1x16x16x32xf32, #tpu.memory_space<vmem>>, vector<1x16x16x32xf32>
    %1 = vector.shape_cast %0 : vector<1x16x16x32xf32> to vector<256x32xf32>
    %2 = arith.truncf %1 : vector<256x32xf32> to vector<256x32xbf16>
    %c0_3 = arith.constant 0 : index
    %c0_4 = arith.constant 0 : index
    %3 = vector.load %arg2[%c0_3, %c0_4] : memref<32x8xbf16, #tpu.memory_space<vmem>>, vector<32x8xbf16>
    %cst = arith.constant dense<0.000000e+00> : vector<256x8xf32>
    %4 = tpu.matmul %2, %3, %cst {dimension_numbers = #tpu.dot_dimension_numbers<[1], [0], [0], [1], [0, 0, 1, 1], [], []>} : vector<256x32xbf16>, vector<32x8xbf16>, vector<256x8xf32> -> vector<256x8xf32>
    %c0_5 = arith.constant 0 : index
    %c0_6 = arith.constant 0 : index
    %5 = vector.load %arg3[%c0_5, %c0_6] : memref<2x4xf32, #tpu.memory_space<vmem>>, vector<2x4xf32>
    %c0_7 = arith.constant 0 : index
    %c0_8 = arith.constant 0 : index
    %6 = vector.load %arg4[%c0_7, %c0_8] : memref<2x4xf32, #tpu.memory_space<vmem>>, vector<2x4xf32>
    %7 = vector.extract_strided_slice %4 {offsets = [0, 0], sizes = [256, 4], strides = [1, 1]} : vector<256x8xf32> to vector<256x4xf32>
    %8 = vector.extract_strided_slice %5 {offsets = [0, 0], sizes = [1, 4], strides = [1, 1]} : vector<2x4xf32> to vector<1x4xf32>
    %9 = vector.broadcast %8 : vector<1x4xf32> to vector<256x4xf32>
    %10 = arith.mulf %7, %9 : vector<256x4xf32>
    %11 = vector.extract_strided_slice %5 {offsets = [1, 0], sizes = [1, 4], strides = [1, 1]} : vector<2x4xf32> to vector<1x4xf32>
    %12 = vector.broadcast %11 : vector<1x4xf32> to vector<256x4xf32>
    %13 = arith.addf %10, %12 : vector<256x4xf32>
    %cst_9 = arith.constant 0.000000e+00 : f32
    %14 = vector.broadcast %cst_9 : f32 to vector<256x4xf32>
    %15 = arith.maximumf %13, %14 : vector<256x4xf32>
    %16 = vector.extract_strided_slice %4 {offsets = [0, 4], sizes = [256, 4], strides = [1, 1]} : vector<256x8xf32> to vector<256x4xf32>
    %17 = vector.extract_strided_slice %6 {offsets = [0, 0], sizes = [1, 4], strides = [1, 1]} : vector<2x4xf32> to vector<1x4xf32>
    %18 = vector.broadcast %17 : vector<1x4xf32> to vector<256x4xf32>
    %19 = arith.mulf %16, %18 : vector<256x4xf32>
    %20 = vector.extract_strided_slice %6 {offsets = [1, 0], sizes = [1, 4], strides = [1, 1]} : vector<2x4xf32> to vector<1x4xf32>
    %21 = vector.broadcast %20 : vector<1x4xf32> to vector<256x4xf32>
    %22 = arith.addf %19, %21 : vector<256x4xf32>
    %cst_10 = arith.constant 0.000000e+00 : f32
    %23 = vector.broadcast %cst_10 : f32 to vector<256x4xf32>
    %24 = arith.maximumf %22, %23 : vector<256x4xf32>
    %25 = vector.shape_cast %15 : vector<256x4xf32> to vector<16x16x4xf32>
    %c0_11 = arith.constant 0 : index
    %c0_12 = arith.constant 0 : index
    %26 = vector.load %arg5[%c0_11, %c0_12] : memref<36x4xbf16, #tpu.memory_space<vmem>>, vector<36x4xbf16>
    %c0_13 = arith.constant 0 : index
    %c0_14 = arith.constant 0 : index
    %27 = vector.load %arg6[%c0_13, %c0_14] : memref<2x4xf32, #tpu.memory_space<vmem>>, vector<2x4xf32>
    %28 = arith.truncf %25 : vector<16x16x4xf32> to vector<16x16x4xbf16>
    %cst_15 = arith.constant 0.000000e+00 : bf16
    %29 = vector.broadcast %cst_15 : bf16 to vector<1x16x4xbf16>
    %30 = tpu.concatenate %29, %28, %29 in 0 : vector<1x16x4xbf16>, vector<16x16x4xbf16>, vector<1x16x4xbf16> -> vector<18x16x4xbf16>
    %cst_16 = arith.constant 0.000000e+00 : bf16
    %31 = vector.broadcast %cst_16 : bf16 to vector<18x1x4xbf16>
    %32 = tpu.concatenate %31, %30, %31 in 1 : vector<18x1x4xbf16>, vector<18x16x4xbf16>, vector<18x1x4xbf16> -> vector<18x18x4xbf16>
    %33 = vector.extract_strided_slice %32 {offsets = [0, 0, 0], sizes = [16, 16, 4], strides = [1, 1, 1]} : vector<18x18x4xbf16> to vector<16x16x4xbf16>
    %34 = vector.extract_strided_slice %32 {offsets = [0, 1, 0], sizes = [16, 16, 4], strides = [1, 1, 1]} : vector<18x18x4xbf16> to vector<16x16x4xbf16>
    %35 = vector.extract_strided_slice %32 {offsets = [0, 2, 0], sizes = [16, 16, 4], strides = [1, 1, 1]} : vector<18x18x4xbf16> to vector<16x16x4xbf16>
    %36 = vector.extract_strided_slice %32 {offsets = [1, 0, 0], sizes = [16, 16, 4], strides = [1, 1, 1]} : vector<18x18x4xbf16> to vector<16x16x4xbf16>
    %37 = vector.extract_strided_slice %32 {offsets = [1, 1, 0], sizes = [16, 16, 4], strides = [1, 1, 1]} : vector<18x18x4xbf16> to vector<16x16x4xbf16>
    %38 = vector.extract_strided_slice %32 {offsets = [1, 2, 0], sizes = [16, 16, 4], strides = [1, 1, 1]} : vector<18x18x4xbf16> to vector<16x16x4xbf16>
    %39 = vector.extract_strided_slice %32 {offsets = [2, 0, 0], sizes = [16, 16, 4], strides = [1, 1, 1]} : vector<18x18x4xbf16> to vector<16x16x4xbf16>
    %40 = vector.extract_strided_slice %32 {offsets = [2, 1, 0], sizes = [16, 16, 4], strides = [1, 1, 1]} : vector<18x18x4xbf16> to vector<16x16x4xbf16>
    %41 = vector.extract_strided_slice %32 {offsets = [2, 2, 0], sizes = [16, 16, 4], strides = [1, 1, 1]} : vector<18x18x4xbf16> to vector<16x16x4xbf16>
    %42 = tpu.concatenate %33, %34, %35, %36, %37, %38, %39, %40, %41 in 2 : vector<16x16x4xbf16>, vector<16x16x4xbf16>, vector<16x16x4xbf16>, vector<16x16x4xbf16>, vector<16x16x4xbf16>, vector<16x16x4xbf16>, vector<16x16x4xbf16>, vector<16x16x4xbf16>, vector<16x16x4xbf16> -> vector<16x16x36xbf16>
    %43 = vector.shape_cast %42 : vector<16x16x36xbf16> to vector<256x36xbf16>
    %cst_17 = arith.constant dense<0.000000e+00> : vector<256x4xf32>
    %44 = tpu.matmul %43, %26, %cst_17 {dimension_numbers = #tpu.dot_dimension_numbers<[1], [0], [0], [1], [0, 0, 1, 1], [], []>} : vector<256x36xbf16>, vector<36x4xbf16>, vector<256x4xf32> -> vector<256x4xf32>
    %45 = vector.extract_strided_slice %27 {offsets = [0, 0], sizes = [1, 4], strides = [1, 1]} : vector<2x4xf32> to vector<1x4xf32>
    %46 = vector.broadcast %45 : vector<1x4xf32> to vector<256x4xf32>
    %47 = arith.mulf %44, %46 : vector<256x4xf32>
    %48 = vector.extract_strided_slice %27 {offsets = [1, 0], sizes = [1, 4], strides = [1, 1]} : vector<2x4xf32> to vector<1x4xf32>
    %49 = vector.broadcast %48 : vector<1x4xf32> to vector<256x4xf32>
    %50 = arith.addf %47, %49 : vector<256x4xf32>
    %cst_18 = arith.constant 0.000000e+00 : f32
    %51 = vector.broadcast %cst_18 : f32 to vector<256x4xf32>
    %52 = arith.maximumf %50, %51 : vector<256x4xf32>
    %53 = vector.shape_cast %52 : vector<256x4xf32> to vector<16x16x4xf32>
    %54 = vector.shape_cast %53 : vector<16x16x4xf32> to vector<1x16x16x4xf32>
    %55 = arith.truncf %54 : vector<1x16x16x4xf32> to vector<1x16x16x4xbf16>
    %c0_19 = arith.constant 0 : index
    %c0_20 = arith.constant 0 : index
    %c0_21 = arith.constant 0 : index
    %c0_22 = arith.constant 0 : index
    %56 = vector.load %arg9[%c0_19, %c0_20, %c0_21, %c0_22] : memref<1x16x16x4xbf16, #tpu.memory_space<vmem>>, vector<1x16x16x4xbf16>
    tpu.vector_store %arg9[%c0_19, %c0_20, %c0_21, %c0_22], %55 {strides = array<i32>} : memref<1x16x16x4xbf16, #tpu.memory_space<vmem>>, vector<1x16x16x4xbf16>,
    %57 = vector.shape_cast %24 : vector<256x4xf32> to vector<1x16x16x4xf32>
    %58 = arith.truncf %57 : vector<1x16x16x4xf32> to vector<1x16x16x4xbf16>
    %c0_23 = arith.constant 0 : index
    %c0_24 = arith.constant 0 : index
    %c0_25 = arith.constant 0 : index
    %c0_26 = arith.constant 0 : index
    %59 = vector.load %arg10[%c0_23, %c0_24, %c0_25, %c0_26] : memref<1x16x16x4xbf16, #tpu.memory_space<vmem>>, vector<1x16x16x4xbf16>
    tpu.vector_store %arg10[%c0_23, %c0_24, %c0_25, %c0_26], %58 {strides = array<i32>} : memref<1x16x16x4xbf16, #tpu.memory_space<vmem>>, vector<1x16x16x4xbf16>,
    %60 = vector.shape_cast %24 : vector<256x4xf32> to vector<16x16x4xf32>
    %61 = vector.shape_cast %60 : vector<16x16x4xf32> to vector<4x4x16x4xf32>
    %62 = vector.extract_strided_slice %61 {offsets = [0, 0, 0, 0], sizes = [4, 1, 16, 4], strides = [1, 1, 1, 1]} : vector<4x4x16x4xf32> to vector<4x1x16x4xf32>
    %63 = vector.shape_cast %62 : vector<4x1x16x4xf32> to vector<4x16x4xf32>
    %64 = vector.extract_strided_slice %61 {offsets = [0, 1, 0, 0], sizes = [4, 1, 16, 4], strides = [1, 1, 1, 1]} : vector<4x4x16x4xf32> to vector<4x1x16x4xf32>
    %65 = vector.shape_cast %64 : vector<4x1x16x4xf32> to vector<4x16x4xf32>
    %66 = arith.addf %63, %65 : vector<4x16x4xf32>
    %67 = vector.extract_strided_slice %61 {offsets = [0, 2, 0, 0], sizes = [4, 1, 16, 4], strides = [1, 1, 1, 1]} : vector<4x4x16x4xf32> to vector<4x1x16x4xf32>
    %68 = vector.shape_cast %67 : vector<4x1x16x4xf32> to vector<4x16x4xf32>
    %69 = arith.addf %66, %68 : vector<4x16x4xf32>
    %70 = vector.extract_strided_slice %61 {offsets = [0, 3, 0, 0], sizes = [4, 1, 16, 4], strides = [1, 1, 1, 1]} : vector<4x4x16x4xf32> to vector<4x1x16x4xf32>
    %71 = vector.shape_cast %70 : vector<4x1x16x4xf32> to vector<4x16x4xf32>
    %72 = arith.addf %69, %71 : vector<4x16x4xf32>
    %73 = vector.shape_cast %72 : vector<4x16x4xf32> to vector<4x4x4x4xf32>
    %74 = vector.extract_strided_slice %73 {offsets = [0, 0, 0, 0], sizes = [4, 4, 1, 4], strides = [1, 1, 1, 1]} : vector<4x4x4x4xf32> to vector<4x4x1x4xf32>
    %75 = vector.shape_cast %74 : vector<4x4x1x4xf32> to vector<4x4x4xf32>
    %76 = vector.extract_strided_slice %73 {offsets = [0, 0, 1, 0], sizes = [4, 4, 1, 4], strides = [1, 1, 1, 1]} : vector<4x4x4x4xf32> to vector<4x4x1x4xf32>
    %77 = vector.shape_cast %76 : vector<4x4x1x4xf32> to vector<4x4x4xf32>
    %78 = arith.addf %75, %77 : vector<4x4x4xf32>
    %79 = vector.extract_strided_slice %73 {offsets = [0, 0, 2, 0], sizes = [4, 4, 1, 4], strides = [1, 1, 1, 1]} : vector<4x4x4x4xf32> to vector<4x4x1x4xf32>
    %80 = vector.shape_cast %79 : vector<4x4x1x4xf32> to vector<4x4x4xf32>
    %81 = arith.addf %78, %80 : vector<4x4x4xf32>
    %82 = vector.extract_strided_slice %73 {offsets = [0, 0, 3, 0], sizes = [4, 4, 1, 4], strides = [1, 1, 1, 1]} : vector<4x4x4x4xf32> to vector<4x4x1x4xf32>
    %83 = vector.shape_cast %82 : vector<4x4x1x4xf32> to vector<4x4x4xf32>
    %84 = arith.addf %81, %83 : vector<4x4x4xf32>
    %cst_27 = arith.constant 6.250000e-02 : f32
    %85 = vector.broadcast %cst_27 : f32 to vector<4x4x4xf32>
    %86 = arith.mulf %84, %85 : vector<4x4x4xf32>
    %c0_28 = arith.constant 0 : index
    %c0_29 = arith.constant 0 : index
    %87 = vector.load %arg7[%c0_28, %c0_29] : memref<36x4xbf16, #tpu.memory_space<vmem>>, vector<36x4xbf16>
    %c0_30 = arith.constant 0 : index
    %c0_31 = arith.constant 0 : index
    %88 = vector.load %arg8[%c0_30, %c0_31] : memref<2x4xf32, #tpu.memory_space<vmem>>, vector<2x4xf32>
    %89 = arith.truncf %86 : vector<4x4x4xf32> to vector<4x4x4xbf16>
    %cst_32 = arith.constant 0.000000e+00 : bf16
    %90 = vector.broadcast %cst_32 : bf16 to vector<1x4x4xbf16>
    %91 = tpu.concatenate %90, %89, %90 in 0 : vector<1x4x4xbf16>, vector<4x4x4xbf16>, vector<1x4x4xbf16> -> vector<6x4x4xbf16>
    %cst_33 = arith.constant 0.000000e+00 : bf16
    %92 = vector.broadcast %cst_33 : bf16 to vector<6x1x4xbf16>
    %93 = tpu.concatenate %92, %91, %92 in 1 : vector<6x1x4xbf16>, vector<6x4x4xbf16>, vector<6x1x4xbf16> -> vector<6x6x4xbf16>
    %94 = vector.extract_strided_slice %93 {offsets = [0, 0, 0], sizes = [4, 4, 4], strides = [1, 1, 1]} : vector<6x6x4xbf16> to vector<4x4x4xbf16>
    %95 = vector.extract_strided_slice %93 {offsets = [0, 1, 0], sizes = [4, 4, 4], strides = [1, 1, 1]} : vector<6x6x4xbf16> to vector<4x4x4xbf16>
    %96 = vector.extract_strided_slice %93 {offsets = [0, 2, 0], sizes = [4, 4, 4], strides = [1, 1, 1]} : vector<6x6x4xbf16> to vector<4x4x4xbf16>
    %97 = vector.extract_strided_slice %93 {offsets = [1, 0, 0], sizes = [4, 4, 4], strides = [1, 1, 1]} : vector<6x6x4xbf16> to vector<4x4x4xbf16>
    %98 = vector.extract_strided_slice %93 {offsets = [1, 1, 0], sizes = [4, 4, 4], strides = [1, 1, 1]} : vector<6x6x4xbf16> to vector<4x4x4xbf16>
    %99 = vector.extract_strided_slice %93 {offsets = [1, 2, 0], sizes = [4, 4, 4], strides = [1, 1, 1]} : vector<6x6x4xbf16> to vector<4x4x4xbf16>
    %100 = vector.extract_strided_slice %93 {offsets = [2, 0, 0], sizes = [4, 4, 4], strides = [1, 1, 1]} : vector<6x6x4xbf16> to vector<4x4x4xbf16>
    %101 = vector.extract_strided_slice %93 {offsets = [2, 1, 0], sizes = [4, 4, 4], strides = [1, 1, 1]} : vector<6x6x4xbf16> to vector<4x4x4xbf16>
    %102 = vector.extract_strided_slice %93 {offsets = [2, 2, 0], sizes = [4, 4, 4], strides = [1, 1, 1]} : vector<6x6x4xbf16> to vector<4x4x4xbf16>
    %103 = tpu.concatenate %94, %95, %96, %97, %98, %99, %100, %101, %102 in 2 : vector<4x4x4xbf16>, vector<4x4x4xbf16>, vector<4x4x4xbf16>, vector<4x4x4xbf16>, vector<4x4x4xbf16>, vector<4x4x4xbf16>, vector<4x4x4xbf16>, vector<4x4x4xbf16>, vector<4x4x4xbf16> -> vector<4x4x36xbf16>
    %104 = vector.shape_cast %103 : vector<4x4x36xbf16> to vector<16x36xbf16>
    %cst_34 = arith.constant dense<0.000000e+00> : vector<16x4xf32>
    %105 = tpu.matmul %104, %87, %cst_34 {dimension_numbers = #tpu.dot_dimension_numbers<[1], [0], [0], [1], [0, 0, 1, 1], [], []>} : vector<16x36xbf16>, vector<36x4xbf16>, vector<16x4xf32> -> vector<16x4xf32>
    %106 = vector.extract_strided_slice %88 {offsets = [0, 0], sizes = [1, 4], strides = [1, 1]} : vector<2x4xf32> to vector<1x4xf32>
    %107 = vector.broadcast %106 : vector<1x4xf32> to vector<16x4xf32>
    %108 = arith.mulf %105, %107 : vector<16x4xf32>
    %109 = vector.extract_strided_slice %88 {offsets = [1, 0], sizes = [1, 4], strides = [1, 1]} : vector<2x4xf32> to vector<1x4xf32>
    %110 = vector.broadcast %109 : vector<1x4xf32> to vector<16x4xf32>
    %111 = arith.addf %108, %110 : vector<16x4xf32>
    %112 = vector.shape_cast %111 : vector<16x4xf32> to vector<4x4x4xf32>
    %113 = vector.shape_cast %112 : vector<4x4x4xf32> to vector<1x4x4x4xf32>
    %114 = arith.truncf %113 : vector<1x4x4x4xf32> to vector<1x4x4x4xbf16>
    %c0_35 = arith.constant 0 : index
    %c0_36 = arith.constant 0 : index
    %c0_37 = arith.constant 0 : index
    %c0_38 = arith.constant 0 : index
    %115 = vector.load %arg11[%c0_35, %c0_36, %c0_37, %c0_38] : memref<1x4x4x4xbf16, #tpu.memory_space<vmem>>, vector<1x4x4x4xbf16>
    tpu.vector_store %arg11[%c0_35, %c0_36, %c0_37, %c0_38], %114 {strides = array<i32>} : memref<1x4x4x4xbf16, #tpu.memory_space<vmem>>, vector<1x4x4x4xbf16>,
    return
  }
  func.func @transform_0(%arg0: i32) -> (i32, i32, i32, i32) {
    %c0_i32 = arith.constant 0 : i32
    %c0_i32_0 = arith.constant 0 : i32
    %c0_i32_1 = arith.constant 0 : i32
    %c0_i32_2 = arith.constant 0 : i32
    return %arg0, %c0_i32, %c0_i32_0, %c0_i32_1 : i32, i32, i32, i32
  }
  func.func @transform_1(%arg0: i32) -> (i32, i32) {
    %c0_i32 = arith.constant 0 : i32
    %c0_i32_0 = arith.constant 0 : i32
    %c0_i32_1 = arith.constant 0 : i32
    return %c0_i32, %c0_i32_0 : i32, i32
  }
  func.func @transform_2(%arg0: i32) -> (i32, i32) {
    %c0_i32 = arith.constant 0 : i32
    %c0_i32_0 = arith.constant 0 : i32
    %c0_i32_1 = arith.constant 0 : i32
    return %c0_i32, %c0_i32_0 : i32, i32
  }
  func.func @transform_3(%arg0: i32) -> (i32, i32) {
    %c0_i32 = arith.constant 0 : i32
    %c0_i32_0 = arith.constant 0 : i32
    %c0_i32_1 = arith.constant 0 : i32
    return %c0_i32, %c0_i32_0 : i32, i32
  }
  func.func @transform_4(%arg0: i32) -> (i32, i32) {
    %c0_i32 = arith.constant 0 : i32
    %c0_i32_0 = arith.constant 0 : i32
    %c0_i32_1 = arith.constant 0 : i32
    return %c0_i32, %c0_i32_0 : i32, i32
  }
  func.func @transform_5(%arg0: i32) -> (i32, i32) {
    %c0_i32 = arith.constant 0 : i32
    %c0_i32_0 = arith.constant 0 : i32
    %c0_i32_1 = arith.constant 0 : i32
    return %c0_i32, %c0_i32_0 : i32, i32
  }
  func.func @transform_6(%arg0: i32) -> (i32, i32) {
    %c0_i32 = arith.constant 0 : i32
    %c0_i32_0 = arith.constant 0 : i32
    %c0_i32_1 = arith.constant 0 : i32
    return %c0_i32, %c0_i32_0 : i32, i32
  }
  func.func @transform_7(%arg0: i32) -> (i32, i32) {
    %c0_i32 = arith.constant 0 : i32
    %c0_i32_0 = arith.constant 0 : i32
    %c0_i32_1 = arith.constant 0 : i32
    return %c0_i32, %c0_i32_0 : i32, i32
  }
  func.func @transform_8(%arg0: i32) -> (i32, i32, i32, i32) {
    %c0_i32 = arith.constant 0 : i32
    %c0_i32_0 = arith.constant 0 : i32
    %c0_i32_1 = arith.constant 0 : i32
    %c0_i32_2 = arith.constant 0 : i32
    return %arg0, %c0_i32, %c0_i32_0, %c0_i32_1 : i32, i32, i32, i32
  }
  func.func @transform_9(%arg0: i32) -> (i32, i32, i32, i32) {
    %c0_i32 = arith.constant 0 : i32
    %c0_i32_0 = arith.constant 0 : i32
    %c0_i32_1 = arith.constant 0 : i32
    %c0_i32_2 = arith.constant 0 : i32
    return %arg0, %c0_i32, %c0_i32_0, %c0_i32_1 : i32, i32, i32, i32
  }
  func.func @transform_10(%arg0: i32) -> (i32, i32, i32, i32) {
    %c0_i32 = arith.constant 0 : i32
    %c0_i32_0 = arith.constant 0 : i32
    %c0_i32_1 = arith.constant 0 : i32
    %c0_i32_2 = arith.constant 0 : i32
    return %arg0, %c0_i32, %c0_i32_0, %c0_i32_1 : i32, i32, i32, i32
  }
}

</mosaic_0001>

<llo_original>
// kernel: tpu_custom_call.1
$region0: #{tpu_custom_call.1}
  #allocation0 [shape = 'u32[]', space=smem, size = 0x4, offset = 0x4, fixed_abs, tag = 'smem constant byte address 0x4 - core index']
  #allocation1 [shape = 'u32[144,128]{1,0:T(1,128)}', space=vmem, size = 0x12000, scoped, tag = 'internal scratch']
  %s0 = inlined_call_operand.hbm [shape: f32[2,16,16,32], index: 0, kind: input, shape index: {}]
  %s1 = inlined_call_operand.vmem [shape: bf16[32,8], index: 1, kind: input, shape index: {}]
  %s2 = inlined_call_operand.vmem [shape: f32[2,4], index: 2, kind: input, shape index: {}]
  %s3 = inlined_call_operand.vmem [shape: f32[2,4], index: 3, kind: input, shape index: {}]
  %s4 = inlined_call_operand.vmem [shape: bf16[36,4], index: 4, kind: input, shape index: {}]
  %s5 = inlined_call_operand.vmem [shape: f32[2,4], index: 5, kind: input, shape index: {}]
  %s6 = inlined_call_operand.vmem [shape: bf16[36,4], index: 6, kind: input, shape index: {}]
  %s7 = inlined_call_operand.vmem [shape: f32[2,4], index: 7, kind: input, shape index: {}]
  %s8 = inlined_call_operand.vmem [shape: bf16[2,16,16,4], index: 8, kind: output, shape index: {0}]
  %s9 = inlined_call_operand.vmem [shape: bf16[2,16,16,4], index: 9, kind: output, shape index: {1}]
  %s10 = inlined_call_operand.hbm [shape: bf16[2,4,4,4], index: 10, kind: output, shape index: {2}]
  %11 = xla_tuple %s8, %s9, %s10
  %s12 = sld [smem:[#allocation0]]
  $region85: #{tpu_custom_call.1} parent=0
    _
  %s14 = ssub.s32 1, %s12
  %s15 = scalar_select 0, %s14, %s12
  $region1: #{tpu_custom_call.1} parent=0
    #allocation2 [shape = 'u8[262144]{0}', space=vmem, size = 0x40000, scoped, tag = 'input window, operand 0']
    #allocation3 [shape = 's32[2]{0}', space=sflag, size = 0x8, scoped, tag = 'scoped memory for tpu_custom_call.1']
    #allocation4 [shape = 's32[2]{0}', space=sflag, size = 0x8, scoped, tag = 'scoped memory for tpu_custom_call.1']
    #allocation5 [shape = 'u8[8192]{0}', space=vmem, size = 0x2000, scoped, tag = 'output window, operand 2']
    %16 = vsyncpa [#allocation3], 0
    %s17 = scalar_lea.sflag [#allocation3], 1
    %18 = vsyncpa %s17, 0
    %19 = vsyncpa [#allocation4], 0
    %s20 = scalar_lea.sflag [#allocation4], 1
    %21 = vsyncpa %s20, 0
    loop: start=0, step=1, limit=4
    $region2: #{tpu_custom_call.1} parent=1 // loop_pre_header
      _
    $region3: #{tpu_custom_call.1} parent=1 // loop_header
      %s23 = sphi 0, %s27
      %p24 = scmp.ge.s32.totalorder %s23, 4
      %s33 = sphi 0, %s35
      %s36 = sphi 0, %s33
      %s37 = sphi 0, %s36
      %s53 = sphi 0, %s37
      %s57 = sphi 0, %s57
      %s59 = sphi 0, %s57
      %s60 = sphi 0, %s59
      %s74 = sphi 0, %s60
      %s78 = sphi 0, %s78
      %s80 = sphi 0, %s78
      %s81 = sphi 0, %s80
      %s95 = sphi 0, %s81
      %s99 = sphi 0, %s99
      %s101 = sphi 0, %s99
      %s102 = sphi 0, %s101
      %s116 = sphi 0, %s102
      %s120 = sphi 0, %s120
      %s122 = sphi 0, %s120
      %s123 = sphi 0, %s122
      %s137 = sphi 0, %s123
      %s141 = sphi 0, %s141
      %s143 = sphi 0, %s141
      %s144 = sphi 0, %s143
      %s158 = sphi 0, %s144
      %s162 = sphi 0, %s162
      %s164 = sphi 0, %s162
      %s165 = sphi 0, %s164
      %s179 = sphi 0, %s165
      %s183 = sphi 0, %s183
      %s185 = sphi 0, %s183
      %s186 = sphi 0, %s185
      %s200 = sphi 0, %s186
      %s206 = sphi 0, %s208
      %s209 = sphi 0, %s206
      %s210 = sphi 0, %s209
      %s226 = sphi 0, %s210
      %s232 = sphi 0, %s234
      %s235 = sphi 0, %s232
      %s236 = sphi 0, %s235
      %s252 = sphi 0, %s236
      %s258 = sphi 0, %s260
      %s261 = sphi 0, %s258
      %s262 = sphi 0, %s261
      %s278 = sphi 0, %s262
    $region4: #{tpu_custom_call.1} parent=1 // loop_header_branch
      %26 = sbr.rel (%p24) target = $region8
    $region5: #{tpu_custom_call.1} parent=1 // loop_body
      %s28 = ssub.s32 %s23, 1
      %s29 = ssub.s32 %s23, 2
      %s30 = sadd.s32 %s23, 1
      %s31 = ssub.s32 %s23, %s30
      %p32 = scmp.eq.s32.totalorder %s31, 0
      %s34 = sadd.s32 %s33, 1
      %s35 = scalar_select %p32, %s33, %s34
      %p38 = pneg %p32
      %p39 = scmp.eq.s32.totalorder %s23, 1
      %p40 = por %p38, %p39
      %p41 = scmp.ne.s32.totalorder %s33, %s36
      %p42 = scmp.eq.s32.totalorder %s23, 0
      %p43 = por %p41, %p42
      %p44 = scmp.ne.s32.totalorder %s33, %s36
      %p45 = scmp.eq.s32.totalorder %s28, 1
      %p46 = por %p44, %p45
      %p47 = scmp.ne.s32.totalorder %s36, %s37
      %p48 = scmp.eq.s32.totalorder %s28, 0
      %p49 = por %p47, %p48
      %p50 = scmp.ne.s32.totalorder %s36, %s37
      %p51 = scmp.eq.s32.totalorder %s29, 1
      %p52 = por %p50, %p51
      %p54 = scmp.ne.s32.totalorder %s37, %s53
      %p55 = scmp.eq.s32.totalorder %s29, 0
      %p56 = por %p54, %p55
      %s58 = sadd.s32 %s57, 1
      %p61 = scmp.eq.s32.totalorder %s23, 1
      %p62 = scmp.ne.s32.totalorder %s57, %s59
      %p63 = scmp.eq.s32.totalorder %s23, 0
      %p64 = por %p62, %p63
      %p65 = scmp.ne.s32.totalorder %s57, %s59
      %p66 = scmp.eq.s32.totalorder %s28, 1
      %p67 = por %p65, %p66
      %p68 = scmp.ne.s32.totalorder %s59, %s60
      %p69 = scmp.eq.s32.totalorder %s28, 0
      %p70 = por %p68, %p69
      %p71 = scmp.ne.s32.totalorder %s59, %s60
      %p72 = scmp.eq.s32.totalorder %s29, 1
      %p73 = por %p71, %p72
      %p75 = scmp.ne.s32.totalorder %s60, %s74
      %p76 = scmp.eq.s32.totalorder %s29, 0
      %p77 = por %p75, %p76
      %s79 = sadd.s32 %s78, 1
      %p82 = scmp.eq.s32.totalorder %s23, 1
      %p83 = scmp.ne.s32.totalorder %s78, %s80
      %p84 = scmp.eq.s32.totalorder %s23, 0
      %p85 = por %p83, %p84
      %p86 = scmp.ne.s32.totalorder %s78, %s80
      %p87 = scmp.eq.s32.totalorder %s28, 1
      %p88 = por %p86, %p87
      %p89 = scmp.ne.s32.totalorder %s80, %s81
      %p90 = scmp.eq.s32.totalorder %s28, 0
      %p91 = por %p89, %p90
      %p92 = scmp.ne.s32.totalorder %s80, %s81
      %p93 = scmp.eq.s32.totalorder %s29, 1
      %p94 = por %p92, %p93
      %p96 = scmp.ne.s32.totalorder %s81, %s95
      %p97 = scmp.eq.s32.totalorder %s29, 0
      %p98 = por %p96, %p97
      %s100 = sadd.s32 %s99, 1
      %p103 = scmp.eq.s32.totalorder %s23, 1
      %p104 = scmp.ne.s32.totalorder %s99, %s101
      %p105 = scmp.eq.s32.totalorder %s23, 0
      %p106 = por %p104, %p105
      %p107 = scmp.ne.s32.totalorder %s99, %s101
      %p108 = scmp.eq.s32.totalorder %s28, 1
      %p109 = por %p107, %p108
      %p110 = scmp.ne.s32.totalorder %s101, %s102
      %p111 = scmp.eq.s32.totalorder %s28, 0
      %p112 = por %p110, %p111
      %p113 = scmp.ne.s32.totalorder %s101, %s102
      %p114 = scmp.eq.s32.totalorder %s29, 1
      %p115 = por %p113, %p114
      %p117 = scmp.ne.s32.totalorder %s102, %s116
      %p118 = scmp.eq.s32.totalorder %s29, 0
      %p119 = por %p117, %p118
      %s121 = sadd.s32 %s120, 1
      %p124 = scmp.eq.s32.totalorder %s23, 1
      %p125 = scmp.ne.s32.totalorder %s120, %s122
      %p126 = scmp.eq.s32.totalorder %s23, 0
      %p127 = por %p125, %p126
      %p128 = scmp.ne.s32.totalorder %s120, %s122
      %p129 = scmp.eq.s32.totalorder %s28, 1
      %p130 = por %p128, %p129
      %p131 = scmp.ne.s32.totalorder %s122, %s123
      %p132 = scmp.eq.s32.totalorder %s28, 0
      %p133 = por %p131, %p132
      %p134 = scmp.ne.s32.totalorder %s122, %s123
      %p135 = scmp.eq.s32.totalorder %s29, 1
      %p136 = por %p134, %p135
      %p138 = scmp.ne.s32.totalorder %s123, %s137
      %p139 = scmp.eq.s32.totalorder %s29, 0
      %p140 = por %p138, %p139
      %s142 = sadd.s32 %s141, 1
      %p145 = scmp.eq.s32.totalorder %s23, 1
      %p146 = scmp.ne.s32.totalorder %s141, %s143
      %p147 = scmp.eq.s32.totalorder %s23, 0
      %p148 = por %p146, %p147
      %p149 = scmp.ne.s32.totalorder %s141, %s143
      %p150 = scmp.eq.s32.totalorder %s28, 1
      %p151 = por %p149, %p150
      %p152 = scmp.ne.s32.totalorder %s143, %s144
      %p153 = scmp.eq.s32.totalorder %s28, 0
      %p154 = por %p152, %p153
      %p155 = scmp.ne.s32.totalorder %s143, %s144
      %p156 = scmp.eq.s32.totalorder %s29, 1
      %p157 = por %p155, %p156
      %p159 = scmp.ne.s32.totalorder %s144, %s158
      %p160 = scmp.eq.s32.totalorder %s29, 0
      %p161 = por %p159, %p160
      %s163 = sadd.s32 %s162, 1
      %p166 = scmp.eq.s32.totalorder %s23, 1
      %p167 = scmp.ne.s32.totalorder %s162, %s164
      %p168 = scmp.eq.s32.totalorder %s23, 0
      %p169 = por %p167, %p168
      %p170 = scmp.ne.s32.totalorder %s162, %s164
      %p171 = scmp.eq.s32.totalorder %s28, 1
      %p172 = por %p170, %p171
      %p173 = scmp.ne.s32.totalorder %s164, %s165
      %p174 = scmp.eq.s32.totalorder %s28, 0
      %p175 = por %p173, %p174
      %p176 = scmp.ne.s32.totalorder %s164, %s165
      %p177 = scmp.eq.s32.totalorder %s29, 1
      %p178 = por %p176, %p177
      %p180 = scmp.ne.s32.totalorder %s165, %s179
      %p181 = scmp.eq.s32.totalorder %s29, 0
      %p182 = por %p180, %p181
      %s184 = sadd.s32 %s183, 1
      %p187 = scmp.eq.s32.totalorder %s23, 1
      %p188 = scmp.ne.s32.totalorder %s183, %s185
      %p189 = scmp.eq.s32.totalorder %s23, 0
      %p190 = por %p188, %p189
      %p191 = scmp.ne.s32.totalorder %s183, %s185
      %p192 = scmp.eq.s32.totalorder %s28, 1
      %p193 = por %p191, %p192
      %p194 = scmp.ne.s32.totalorder %s185, %s186
      %p195 = scmp.eq.s32.totalorder %s28, 0
      %p196 = por %p194, %p195
      %p197 = scmp.ne.s32.totalorder %s185, %s186
      %p198 = scmp.eq.s32.totalorder %s29, 1
      %p199 = por %p197, %p198
      %p201 = scmp.ne.s32.totalorder %s186, %s200
      %p202 = scmp.eq.s32.totalorder %s29, 0
      %p203 = por %p201, %p202
      %s204 = ssub.s32 %s23, %s30
      %p205 = scmp.eq.s32.totalorder %s204, 0
      %s207 = sadd.s32 %s206, 1
      %s208 = scalar_select %p205, %s206, %s207
      %p211 = pneg %p205
      %p212 = scmp.eq.s32.totalorder %s23, 1
      %p213 = por %p211, %p212
      %p214 = scmp.ne.s32.totalorder %s206, %s209
      %p215 = scmp.eq.s32.totalorder %s23, 0
      %p216 = por %p214, %p215
      %p217 = scmp.ne.s32.totalorder %s206, %s209
      %p218 = scmp.eq.s32.totalorder %s28, 1
      %p219 = por %p217, %p218
      %p220 = scmp.ne.s32.totalorder %s209, %s210
      %p221 = scmp.eq.s32.totalorder %s28, 0
      %p222 = por %p220, %p221
      %p223 = scmp.ne.s32.totalorder %s209, %s210
      %p224 = scmp.eq.s32.totalorder %s29, 1
      %p225 = por %p223, %p224
      %p227 = scmp.ne.s32.totalorder %s210, %s226
      %p228 = scmp.eq.s32.totalorder %s29, 0
      %p229 = por %p227, %p228
      %s230 = ssub.s32 %s23, %s30
      %p231 = scmp.eq.s32.totalorder %s230, 0
      %s233 = sadd.s32 %s232, 1
      %s234 = scalar_select %p231, %s232, %s233
      %p237 = pneg %p231
      %p238 = scmp.eq.s32.totalorder %s23, 1
      %p239 = por %p237, %p238
      %p240 = scmp.ne.s32.totalorder %s232, %s235
      %p241 = scmp.eq.s32.totalorder %s23, 0
      %p242 = por %p240, %p241
      %p243 = scmp.ne.s32.totalorder %s232, %s235
      %p244 = scmp.eq.s32.totalorder %s28, 1
      %p245 = por %p243, %p244
      %p246 = scmp.ne.s32.totalorder %s235, %s236
      %p247 = scmp.eq.s32.totalorder %s28, 0
      %p248 = por %p246, %p247
      %p249 = scmp.ne.s32.totalorder %s235, %s236
      %p250 = scmp.eq.s32.totalorder %s29, 1
      %p251 = por %p249, %p250
      %p253 = scmp.ne.s32.totalorder %s236, %s252
      %p254 = scmp.eq.s32.totalorder %s29, 0
      %p255 = por %p253, %p254
      %s256 = ssub.s32 %s23, %s30
      %p257 = scmp.eq.s32.totalorder %s256, 0
      %s259 = sadd.s32 %s258, 1
      %s260 = scalar_select %p257, %s258, %s259
      %p263 = pneg %p257
      %p264 = scmp.eq.s32.totalorder %s23, 1
      %p265 = por %p263, %p264
      %p266 = scmp.ne.s32.totalorder %s258, %s261
      %p267 = scmp.eq.s32.totalorder %s23, 0
      %p268 = por %p266, %p267
      %p269 = scmp.ne.s32.totalorder %s258, %s261
      %p270 = scmp.eq.s32.totalorder %s28, 1
      %p271 = por %p269, %p270
      %p272 = scmp.ne.s32.totalorder %s261, %s262
      %p273 = scmp.eq.s32.totalorder %s28, 0
      %p274 = por %p272, %p273
      %p275 = scmp.ne.s32.totalorder %s261, %s262
      %p276 = scmp.eq.s32.totalorder %s29, 1
      %p277 = por %p275, %p276
      %p279 = scmp.ne.s32.totalorder %s262, %s278
      %p280 = scmp.eq.s32.totalorder %s29, 0
      %p281 = por %p279, %p280
      %p282 = scmp.le.s32.totalorder 1, %s23
      %p283 = scmp.lt.s32.totalorder %s23, 3
      %p284 = pnand %p282, %p283
      %p285 = pneg %p284
      // Predicated region
      $region9: #{tpu_custom_call.1} parent=5 // pred_check
        _
      $region10: #{tpu_custom_call.1} parent=5 // pred_check_branch
        %287 = sbr.rel (%p284) target = $region12
      $region11: #{tpu_custom_call.1} parent=5 // pred_region
        %s288 = ssub.s32 %s23, 1
        // Predicated region
        $region13: #{tpu_custom_call.1} parent=11 // pred_check
          %p289 = pneg %p70
        $region14: #{tpu_custom_call.1} parent=11 // pred_check_branch
          %291 = sbr.rel (%p289) target = $region16
        $region15: #{tpu_custom_call.1} parent=11 // pred_region
          _
        $region16: #{tpu_custom_call.1} parent=11 // pred_fallthru
          _
        // Predicated region
        $region17: #{tpu_custom_call.1} parent=11 // pred_check
          %p292 = pneg %p91
        $region18: #{tpu_custom_call.1} parent=11 // pred_check_branch
          %294 = sbr.rel (%p292) target = $region20
        $region19: #{tpu_custom_call.1} parent=11 // pred_region
          _
        $region20: #{tpu_custom_call.1} parent=11 // pred_fallthru
          _
        // Predicated region
        $region21: #{tpu_custom_call.1} parent=11 // pred_check
          %p295 = pneg %p112
        $region22: #{tpu_custom_call.1} parent=11 // pred_check_branch
          %297 = sbr.rel (%p295) target = $region24
        $region23: #{tpu_custom_call.1} parent=11 // pred_region
          _
        $region24: #{tpu_custom_call.1} parent=11 // pred_fallthru
          _
        // Predicated region
        $region25: #{tpu_custom_call.1} parent=11 // pred_check
          %p298 = pneg %p133
        $region26: #{tpu_custom_call.1} parent=11 // pred_check_branch
          %300 = sbr.rel (%p298) target = $region28
        $region27: #{tpu_custom_call.1} parent=11 // pred_region
          _
        $region28: #{tpu_custom_call.1} parent=11 // pred_fallthru
          _
        // Predicated region
        $region29: #{tpu_custom_call.1} parent=11 // pred_check
          %p301 = pneg %p154
        $region30: #{tpu_custom_call.1} parent=11 // pred_check_branch
          %303 = sbr.rel (%p301) target = $region32
        $region31: #{tpu_custom_call.1} parent=11 // pred_region
          _
        $region32: #{tpu_custom_call.1} parent=11 // pred_fallthru
          _
        // Predicated region
        $region33: #{tpu_custom_call.1} parent=11 // pred_check
          %p304 = pneg %p175
        $region34: #{tpu_custom_call.1} parent=11 // pred_check_branch
          %306 = sbr.rel (%p304) target = $region36
        $region35: #{tpu_custom_call.1} parent=11 // pred_region
          _
        $region36: #{tpu_custom_call.1} parent=11 // pred_fallthru
          _
        // Predicated region
        $region37: #{tpu_custom_call.1} parent=11 // pred_check
          %p307 = pneg %p196
        $region38: #{tpu_custom_call.1} parent=11 // pred_check_branch
          %309 = sbr.rel (%p307) target = $region40
        $region39: #{tpu_custom_call.1} parent=11 // pred_region
          _
        $region40: #{tpu_custom_call.1} parent=11 // pred_fallthru
          _
      $region12: #{tpu_custom_call.1} parent=5 // pred_fallthru
        _
      %p310 = scmp.lt.s32.totalorder %s23, 2
      // Predicated region
      $region41: #{tpu_custom_call.1} parent=5 // pred_check
        %p311 = pneg %p310
      $region42: #{tpu_custom_call.1} parent=5 // pred_check_branch
        %313 = sbr.rel (%p311) target = $region44
      $region43: #{tpu_custom_call.1} parent=5 // pred_region
        // Predicated region
        $region45: #{tpu_custom_call.1} parent=43 // pred_check
          %p314 = pneg %p43
        $region46: #{tpu_custom_call.1} parent=43 // pred_check_branch
          %316 = sbr.rel (%p314) target = $region48
        $region47: #{tpu_custom_call.1} parent=43 // pred_region
          %s317 = sand.u32 %s33, 1
          %s318 = scalar_lea.sflag [#allocation3], %s317
          %s319 = sand.u32 %s33, 1
          %s320 = smul.addr %s319, 256
          %s321 = scalar_lea.vmem [#allocation2], %s320
          %s323 = ssub.s32 4096, 4096
          %324 = vsyncadd %s318, %s323
          %s325 = smul.addr %s23, 32
          %s326 = smul.addr %s325, 128
          %s327 = scalar_lea.hbm %s0, %s326
          %s328 = sshll.u32 %s321, 4
          %s329 = int_to_ptr.vmem [resolvable:$true] %s328
          %334 = dma.hbm_to_vmem [thread:$0]  %s327, 4096, %s329, %s318, 128, 128, 8
        $region48: #{tpu_custom_call.1} parent=43 // pred_fallthru
          _
      $region44: #{tpu_custom_call.1} parent=5 // pred_fallthru
        _
      %p335 = scmp.le.s32.totalorder 1, %s23
      %p336 = scmp.lt.s32.totalorder %s23, 3
      %p337 = pnand %p335, %p336
      %p338 = pneg %p337
      // Predicated region
      $region49: #{tpu_custom_call.1} parent=5 // pred_check
        _
      $region50: #{tpu_custom_call.1} parent=5 // pred_check_branch
        %340 = sbr.rel (%p337) target = $region52
      $region51: #{tpu_custom_call.1} parent=5 // pred_region
        %s341 = ssub.s32 %s23, 1
        %s342 = sand.u32 %s36, 1
        %s343 = scalar_lea.sflag [#allocation3], %s342
        %s344 = sand.u32 %s36, 1
        %s345 = smul.addr %s344, 256
        %s346 = scalar_lea.vmem [#allocation2], %s345
        // Predicated region
        $region53: #{tpu_custom_call.1} parent=51 // pred_check
          %p347 = pneg %p49
        $region54: #{tpu_custom_call.1} parent=51 // pred_check_branch
          %349 = sbr.rel (%p347) target = $region56
        $region55: #{tpu_custom_call.1} parent=51 // pred_region
          %350 = dma.done %s343, 4096
        $region56: #{tpu_custom_call.1} parent=51 // pred_fallthru
          _
        %s351 = sand.u32 %s36, 1
        %s352 = scalar_lea.sflag [#allocation3], %s351
        %s353 = sand.u32 %s36, 1
        %s354 = smul.addr %s353, 256
        %s355 = scalar_lea.vmem [#allocation2], %s354
        %p356 = pneg %p49
        %p357 = pneg %p46
        %p358 = pneg %p70
        %p359 = pneg %p67
        %p360 = pneg %p91
        %p361 = pneg %p88
        %p362 = pneg %p112
        %p363 = pneg %p109
        %p364 = pneg %p133
        %p365 = pneg %p130
        %p366 = pneg %p154
        %p367 = pneg %p151
        %p368 = pneg %p175
        %p369 = pneg %p172
        %p370 = pneg %p196
        %p371 = pneg %p193
        %p372 = pneg %p222
        %p373 = pneg %p219
        %p374 = scmp.lt.s32.totalorder %s28, 1
        %s375 = scalar_select %p374, %s28, 1
        %s376 = smul.addr %s375, 32
        %s377 = smul.addr %s376, 4
        %s378 = scalar_lea.vmem %s8, %s377
        %p379 = pneg %p248
        %p380 = pneg %p245
        %p381 = scmp.lt.s32.totalorder %s28, 1
        %s382 = scalar_select %p381, %s28, 1
        %s383 = smul.addr %s382, 32
        %s384 = smul.addr %s383, 4
        %s385 = scalar_lea.vmem %s9, %s384
        %p386 = pneg %p274
        %p387 = pneg %p271
        %s388 = sand.u32 %s261, 1
        %s389 = scalar_lea.sflag [#allocation4], %s388
        %s390 = sand.u32 %s261, 1
        %s391 = smul.addr %s390, 8
        %s392 = scalar_lea.vmem [#allocation5], %s391
        %p393 = scmp.lt.s32.totalorder %s28, 1
        %s394 = scalar_select %p393, %s28, 1
        %s395 = smul.addr %s394, 32
        %s396 = smul.addr %s395, 4
        %s397 = scalar_lea.vmem %s8, %s396
        %p398 = scmp.lt.s32.totalorder %s28, 1
        %s399 = scalar_select %p398, %s28, 1
        %s400 = smul.addr %s399, 32
        %s401 = smul.addr %s400, 4
        %s402 = scalar_lea.vmem %s9, %s401
        %v404 = vld [vmem:[%s346] sm:$0xff]
        %v405 = vld [vmem:[%s346 + $0x8] sm:$0xff]
        %v406 = vld [vmem:[%s346 + $0x10] sm:$0xff]
        %v407 = vld [vmem:[%s346 + $0x18] sm:$0xff]
        %v408 = vld [vmem:[%s346 + $0x20] sm:$0xff]
        %v409 = vld [vmem:[%s346 + $0x28] sm:$0xff]
        %v410 = vld [vmem:[%s346 + $0x30] sm:$0xff]
        %v411 = vld [vmem:[%s346 + $0x38] sm:$0xff]
        %v412 = vld [vmem:[%s346 + $0x40] sm:$0xff]
        %v413 = vld [vmem:[%s346 + $0x48] sm:$0xff]
        %v414 = vld [vmem:[%s346 + $0x50] sm:$0xff]
        %v415 = vld [vmem:[%s346 + $0x58] sm:$0xff]
        %v416 = vld [vmem:[%s346 + $0x60] sm:$0xff]
        %v417 = vld [vmem:[%s346 + $0x68] sm:$0xff]
        %v418 = vld [vmem:[%s346 + $0x70] sm:$0xff]
        %v419 = vld [vmem:[%s346 + $0x78] sm:$0xff]
        %v420 = vld [vmem:[%s346 + $0x80] sm:$0xff]
        %v421 = vld [vmem:[%s346 + $0x88] sm:$0xff]
        %v422 = vld [vmem:[%s346 + $0x90] sm:$0xff]
        %v423 = vld [vmem:[%s346 + $0x98] sm:$0xff]
        %v424 = vld [vmem:[%s346 + $0xa0] sm:$0xff]
        %v425 = vld [vmem:[%s346 + $0xa8] sm:$0xff]
        %v426 = vld [vmem:[%s346 + $0xb0] sm:$0xff]
        %v427 = vld [vmem:[%s346 + $0xb8] sm:$0xff]
        %v428 = vld [vmem:[%s346 + $0xc0] sm:$0xff]
        %v429 = vld [vmem:[%s346 + $0xc8] sm:$0xff]
        %v430 = vld [vmem:[%s346 + $0xd0] sm:$0xff]
        %v431 = vld [vmem:[%s346 + $0xd8] sm:$0xff]
        %v432 = vld [vmem:[%s346 + $0xe0] sm:$0xff]
        %v433 = vld [vmem:[%s346 + $0xe8] sm:$0xff]
        %v434 = vld [vmem:[%s346 + $0xf0] sm:$0xff]
        %v435 = vld [vmem:[%s346 + $0xf8] sm:$0xff]
        %v436 = vpack.c.bf16 %v405, %v404
        %v437 = vpack.c.bf16 %v407, %v406
        %v438 = vpack.c.bf16 %v409, %v408
        %v439 = vpack.c.bf16 %v411, %v410
        %v440 = vpack.c.bf16 %v413, %v412
        %v441 = vpack.c.bf16 %v415, %v414
        %v442 = vpack.c.bf16 %v417, %v416
        %v443 = vpack.c.bf16 %v419, %v418
        %v444 = vpack.c.bf16 %v421, %v420
        %v445 = vpack.c.bf16 %v423, %v422
        %v446 = vpack.c.bf16 %v425, %v424
        %v447 = vpack.c.bf16 %v427, %v426
        %v448 = vpack.c.bf16 %v429, %v428
        %v449 = vpack.c.bf16 %v431, %v430
        %v450 = vpack.c.bf16 %v433, %v432
        %v451 = vpack.c.bf16 %v435, %v434
        %v452 = vld [vmem:[%s1] sm:$0xf]
        %v453 = vld [vmem:[%s1 + $0x4] sm:$0xf]
        %v454 = vld [vmem:[%s1 + $0x8] sm:$0xf]
        %v455 = vld [vmem:[%s1 + $0xc] sm:$0xf]
        %v460 = vunpack.c.l.b16 %v452
        %v461 = vunpack.c.l.b16 %v453
        %v462 = vunpack.c.l.b16 %v454
        %v463 = vunpack.c.l.b16 %v455
        %v464 = vpack.c.b16 %v461, %v460
        %v465 = vpack.c.b16 %v463, %v462
        %vm468 = vcmask 261120
        %v470 = vsel %vm468, %v436, 0
        %v473 = vsel %vm468, %v437, 0
        %v476 = vsel %vm468, %v438, 0
        %v479 = vsel %vm468, %v439, 0
        %v482 = vsel %vm468, %v440, 0
        %v485 = vsel %vm468, %v441, 0
        %v488 = vsel %vm468, %v442, 0
        %v491 = vsel %vm468, %v443, 0
        %v494 = vsel %vm468, %v444, 0
        %v497 = vsel %vm468, %v445, 0
        %v500 = vsel %vm468, %v446, 0
        %v503 = vsel %vm468, %v447, 0
        %v506 = vsel %vm468, %v448, 0
        %v509 = vsel %vm468, %v449, 0
        %v512 = vsel %vm468, %v450, 0
        %v515 = vsel %vm468, %v451, 0
        %517 = vmatprep.subr.bf16.mxu0 0
        %518 = vmatpush1.bf16.msra.mxu0 %v464
        %519 = vmatprep.subr.bf16.mxu0 0
        %520 = vmatpush1.bf16.msra.mxu0 %v465
        %521 = vmatprep.subr.bf16.mxu0 0
        %522 = vmatpush1.bf16.msra.mxu0 0
        %523 = vmatprep.subr.bf16.mxu0 0
        %524 = vmatpush1.bf16.msra.mxu0 0
        %525 = vmatprep.subr.bf16.mxu0 0
        %526 = vmatpush1.bf16.msra.mxu0 0
        %527 = vmatprep.subr.bf16.mxu0 0
        %528 = vmatpush1.bf16.msra.mxu0 0
        %529 = vmatprep.subr.bf16.mxu0 0
        %530 = vmatpush1.bf16.msra.mxu0 0
        %531 = vmatprep.subr.bf16.mxu0 0
        %532 = vmatpush1.bf16.msra.mxu0 0
        %533 = vmatprep.subr.bf16.mxu0 0
        %534 = vmatpush1.bf16.msra.mxu0 0
        %535 = vmatprep.subr.bf16.mxu0 0
        %536 = vmatpush1.bf16.msra.mxu0 0
        %537 = vmatprep.subr.bf16.mxu0 0
        %538 = vmatpush1.bf16.msra.mxu0 0
        %539 = vmatprep.subr.bf16.mxu0 0
        %540 = vmatpush1.bf16.msra.mxu0 0
        %541 = vmatprep.subr.bf16.mxu0 0
        %542 = vmatpush1.bf16.msra.mxu0 0
        %543 = vmatprep.subr.bf16.mxu0 0
        %544 = vmatpush1.bf16.msra.mxu0 0
        %545 = vmatprep.subr.bf16.mxu0 0
        %546 = vmatpush1.bf16.msra.mxu0 0
        %547 = vmatprep.subr.bf16.mxu0 0
        %548 = vmatpush1.bf16.msra.mxu0 0
        %549 = vmatprep.mubr.bf16.mxu0 0
        %550 = vmatmul.mubr.bf16.gmra.mrb[0].mxu0 %v470
        %v551 = vpop.f32.mrb[0].mxu0
        %v552 = vadd.f32 0.0, %v551
        %v553 = vpop.f32.mrb[0].mxu0
        %v554 = vpop.f32.mrb[0].mxu0
        %v555 = vadd.f32 0.0, %v554
        %v556 = vpop.f32.mrb[0].mxu0
        %557 = vmatprep.mubr.bf16.mxu0 0
        %558 = vmatmul.mubr.bf16.gmra.mrb[0].mxu0 %v473
        %v559 = vpop.f32.mrb[0].mxu0
        %v560 = vadd.f32 0.0, %v559
        %v561 = vpop.f32.mrb[0].mxu0
        %v562 = vpop.f32.mrb[0].mxu0
        %v563 = vadd.f32 0.0, %v562
        %v564 = vpop.f32.mrb[0].mxu0
        %565 = vmatprep.mubr.bf16.mxu0 0
        %566 = vmatmul.mubr.bf16.gmra.mrb[0].mxu0 %v476
        %v567 = vpop.f32.mrb[0].mxu0
        %v568 = vadd.f32 0.0, %v567
        %v569 = vpop.f32.mrb[0].mxu0
        %v570 = vpop.f32.mrb[0].mxu0
        %v571 = vadd.f32 0.0, %v570
        %v572 = vpop.f32.mrb[0].mxu0
        %573 = vmatprep.mubr.bf16.mxu0 0
        %574 = vmatmul.mubr.bf16.gmra.mrb[0].mxu0 %v479
        %v575 = vpop.f32.mrb[0].mxu0
        %v576 = vadd.f32 0.0, %v575
        %v577 = vpop.f32.mrb[0].mxu0
        %v578 = vpop.f32.mrb[0].mxu0
        %v579 = vadd.f32 0.0, %v578
        %v580 = vpop.f32.mrb[0].mxu0
        %581 = vmatprep.mubr.bf16.mxu0 0
        %582 = vmatmul.mubr.bf16.gmra.mrb[0].mxu0 %v482
        %v583 = vpop.f32.mrb[0].mxu0
        %v584 = vadd.f32 0.0, %v583
        %v585 = vpop.f32.mrb[0].mxu0
        %v586 = vpop.f32.mrb[0].mxu0
        %v587 = vadd.f32 0.0, %v586
        %v588 = vpop.f32.mrb[0].mxu0
        %589 = vmatprep.mubr.bf16.mxu0 0
        %590 = vmatmul.mubr.bf16.gmra.mrb[0].mxu0 %v485
        %v591 = vpop.f32.mrb[0].mxu0
        %v592 = vadd.f32 0.0, %v591
        %v593 = vpop.f32.mrb[0].mxu0
        %v594 = vpop.f32.mrb[0].mxu0
        %v595 = vadd.f32 0.0, %v594
        %v596 = vpop.f32.mrb[0].mxu0
        %597 = vmatprep.mubr.bf16.mxu0 0
        %598 = vmatmul.mubr.bf16.gmra.mrb[0].mxu0 %v488
        %v599 = vpop.f32.mrb[0].mxu0
        %v600 = vadd.f32 0.0, %v599
        %v601 = vpop.f32.mrb[0].mxu0
        %v602 = vpop.f32.mrb[0].mxu0
        %v603 = vadd.f32 0.0, %v602
        %v604 = vpop.f32.mrb[0].mxu0
        %605 = vmatprep.mubr.bf16.mxu0 0
        %606 = vmatmul.mubr.bf16.gmra.mrb[0].mxu0 %v491
        %v607 = vpop.f32.mrb[0].mxu0
        %v608 = vadd.f32 0.0, %v607
        %v609 = vpop.f32.mrb[0].mxu0
        %v610 = vpop.f32.mrb[0].mxu0
        %v611 = vadd.f32 0.0, %v610
        %v612 = vpop.f32.mrb[0].mxu0
        %613 = vmatprep.mubr.bf16.mxu0 0
        %614 = vmatmul.mubr.bf16.gmra.mrb[0].mxu0 %v494
        %v615 = vpop.f32.mrb[0].mxu0
        %v616 = vadd.f32 0.0, %v615
        %v617 = vpop.f32.mrb[0].mxu0
        %v618 = vpop.f32.mrb[0].mxu0
        %v619 = vadd.f32 0.0, %v618
        %v620 = vpop.f32.mrb[0].mxu0
        %621 = vmatprep.mubr.bf16.mxu0 0
        %622 = vmatmul.mubr.bf16.gmra.mrb[0].mxu0 %v497
        %v623 = vpop.f32.mrb[0].mxu0
        %v624 = vadd.f32 0.0, %v623
        %v625 = vpop.f32.mrb[0].mxu0
        %v626 = vpop.f32.mrb[0].mxu0
        %v627 = vadd.f32 0.0, %v626
        %v628 = vpop.f32.mrb[0].mxu0
        %629 = vmatprep.mubr.bf16.mxu0 0
        %630 = vmatmul.mubr.bf16.gmra.mrb[0].mxu0 %v500
        %v631 = vpop.f32.mrb[0].mxu0
        %v632 = vadd.f32 0.0, %v631
        %v633 = vpop.f32.mrb[0].mxu0
        %v634 = vpop.f32.mrb[0].mxu0
        %v635 = vadd.f32 0.0, %v634
        %v636 = vpop.f32.mrb[0].mxu0
        %637 = vmatprep.mubr.bf16.mxu0 0
        %638 = vmatmul.mubr.bf16.gmra.mrb[0].mxu0 %v503
        %v639 = vpop.f32.mrb[0].mxu0
        %v640 = vadd.f32 0.0, %v639
        %v641 = vpop.f32.mrb[0].mxu0
        %v642 = vpop.f32.mrb[0].mxu0
        %v643 = vadd.f32 0.0, %v642
        %v644 = vpop.f32.mrb[0].mxu0
        %645 = vmatprep.mubr.bf16.mxu0 0
        %646 = vmatmul.mubr.bf16.gmra.mrb[0].mxu0 %v506
        %v647 = vpop.f32.mrb[0].mxu0
        %v648 = vadd.f32 0.0, %v647
        %v649 = vpop.f32.mrb[0].mxu0
        %v650 = vpop.f32.mrb[0].mxu0
        %v651 = vadd.f32 0.0, %v650
        %v652 = vpop.f32.mrb[0].mxu0
        %653 = vmatprep.mubr.bf16.mxu0 0
        %654 = vmatmul.mubr.bf16.gmra.mrb[0].mxu0 %v509
        %v655 = vpop.f32.mrb[0].mxu0
        %v656 = vadd.f32 0.0, %v655
        %v657 = vpop.f32.mrb[0].mxu0
        %v658 = vpop.f32.mrb[0].mxu0
        %v659 = vadd.f32 0.0, %v658
        %v660 = vpop.f32.mrb[0].mxu0
        %661 = vmatprep.mubr.bf16.mxu0 0
        %662 = vmatmul.mubr.bf16.gmra.mrb[0].mxu0 %v512
        %v663 = vpop.f32.mrb[0].mxu0
        %v664 = vadd.f32 0.0, %v663
        %v665 = vpop.f32.mrb[0].mxu0
        %v666 = vpop.f32.mrb[0].mxu0
        %v667 = vadd.f32 0.0, %v666
        %v668 = vpop.f32.mrb[0].mxu0
        %669 = vmatprep.mubr.bf16.mxu0 0
        %670 = vmatmul.mubr.bf16.gmra.mrb[0].mxu0 %v515
        %v671 = vpop.f32.mrb[0].mxu0
        %v672 = vadd.f32 0.0, %v671
        %v673 = vpop.f32.mrb[0].mxu0
        %v674 = vpop.f32.mrb[0].mxu0
        %v675 = vadd.f32 0.0, %v674
        %v676 = vpop.f32.mrb[0].mxu0
        %677 = vdwg.mxu0
        %v678 = vld [vmem:[%s2] sm:$0x3]
        %v679 = vld [vmem:[%s3] sm:$0x3]
        %v680 = vlaneseq
        %v681 = vshrl.u32 %v680, 7
        %v682 = vsub.s32 0, %v681
        %v683 = vrot.slane %v678, %v682
        %v684 = vmul.f32 %v552, %v683
        %v685 = vmul.f32 %v555, %v683
        %v686 = vmul.f32 %v560, %v683
        %v687 = vmul.f32 %v563, %v683
        %v688 = vmul.f32 %v568, %v683
        %v689 = vmul.f32 %v571, %v683
        %v690 = vmul.f32 %v576, %v683
        %v691 = vmul.f32 %v579, %v683
        %v692 = vmul.f32 %v584, %v683
        %v693 = vmul.f32 %v587, %v683
        %v694 = vmul.f32 %v592, %v683
        %v695 = vmul.f32 %v595, %v683
        %v696 = vmul.f32 %v600, %v683
        %v697 = vmul.f32 %v603, %v683
        %v698 = vmul.f32 %v608, %v683
        %v699 = vmul.f32 %v611, %v683
        %v700 = vmul.f32 %v616, %v683
        %v701 = vmul.f32 %v619, %v683
        %v702 = vmul.f32 %v624, %v683
        %v703 = vmul.f32 %v627, %v683
        %v704 = vmul.f32 %v632, %v683
        %v705 = vmul.f32 %v635, %v683
        %v706 = vmul.f32 %v640, %v683
        %v707 = vmul.f32 %v643, %v683
        %v708 = vmul.f32 %v648, %v683
        %v709 = vmul.f32 %v651, %v683
        %v710 = vmul.f32 %v656, %v683
        %v711 = vmul.f32 %v659, %v683
        %v712 = vmul.f32 %v664, %v683
        %v713 = vmul.f32 %v667, %v683
        %v714 = vmul.f32 %v672, %v683
        %v715 = vmul.f32 %v675, %v683
        %v716 = vlaneseq
        %v717 = vshrl.u32 %v716, 7
        %v718 = vsub.s32 1, %v717
        %v719 = vrot.slane %v678, %v718
        %v720 = vadd.f32 %v684, %v719
        %v721 = vadd.f32 %v685, %v719
        %v722 = vadd.f32 %v686, %v719
        %v723 = vadd.f32 %v687, %v719
        %v724 = vadd.f32 %v688, %v719
        %v725 = vadd.f32 %v689, %v719
        %v726 = vadd.f32 %v690, %v719
        %v727 = vadd.f32 %v691, %v719
        %v728 = vadd.f32 %v692, %v719
        %v729 = vadd.f32 %v693, %v719
        %v730 = vadd.f32 %v694, %v719
        %v731 = vadd.f32 %v695, %v719
        %v732 = vadd.f32 %v696, %v719
        %v733 = vadd.f32 %v697, %v719
        %v734 = vadd.f32 %v698, %v719
        %v735 = vadd.f32 %v699, %v719
        %v736 = vadd.f32 %v700, %v719
        %v737 = vadd.f32 %v701, %v719
        %v738 = vadd.f32 %v702, %v719
        %v739 = vadd.f32 %v703, %v719
        %v740 = vadd.f32 %v704, %v719
        %v741 = vadd.f32 %v705, %v719
        %v742 = vadd.f32 %v706, %v719
        %v743 = vadd.f32 %v707, %v719
        %v744 = vadd.f32 %v708, %v719
        %v745 = vadd.f32 %v709, %v719
        %v746 = vadd.f32 %v710, %v719
        %v747 = vadd.f32 %v711, %v719
        %v748 = vadd.f32 %v712, %v719
        %v749 = vadd.f32 %v713, %v719
        %v750 = vadd.f32 %v714, %v719
        %v751 = vadd.f32 %v715, %v719
        %v752 = vmax.f32 %v720, 0.0
        %v753 = vmax.f32 %v721, 0.0
        %v754 = vmax.f32 %v722, 0.0
        %v755 = vmax.f32 %v723, 0.0
        %v756 = vmax.f32 %v724, 0.0
        %v757 = vmax.f32 %v725, 0.0
        %v758 = vmax.f32 %v726, 0.0
        %v759 = vmax.f32 %v727, 0.0
        %v760 = vmax.f32 %v728, 0.0
        %v761 = vmax.f32 %v729, 0.0
        %v762 = vmax.f32 %v730, 0.0
        %v763 = vmax.f32 %v731, 0.0
        %v764 = vmax.f32 %v732, 0.0
        %v765 = vmax.f32 %v733, 0.0
        %v766 = vmax.f32 %v734, 0.0
        %v767 = vmax.f32 %v735, 0.0
        %v768 = vmax.f32 %v736, 0.0
        %v769 = vmax.f32 %v737, 0.0
        %v770 = vmax.f32 %v738, 0.0
        %v771 = vmax.f32 %v739, 0.0
        %v772 = vmax.f32 %v740, 0.0
        %v773 = vmax.f32 %v741, 0.0
        %v774 = vmax.f32 %v742, 0.0
        %v775 = vmax.f32 %v743, 0.0
        %v776 = vmax.f32 %v744, 0.0
        %v777 = vmax.f32 %v745, 0.0
        %v778 = vmax.f32 %v746, 0.0
        %v779 = vmax.f32 %v747, 0.0
        %v780 = vmax.f32 %v748, 0.0
        %v781 = vmax.f32 %v749, 0.0
        %v782 = vmax.f32 %v750, 0.0
        %v783 = vmax.f32 %v751, 0.0
        %v784 = vlaneseq
        %v785 = vshrl.u32 %v784, 7
        %v786 = vsub.s32 0, %v785
        %v787 = vrot.slane %v679, %v786
        %789 = vrot.lane.b32.xlu0 %v787, 4
        %v790 = vpop.permute.xlu0 %789
        %v792 = vmul.f32 %v552, %v790
        %v793 = vmul.f32 %v555, %v790
        %v794 = vmul.f32 %v560, %v790
        %v795 = vmul.f32 %v563, %v790
        %v796 = vmul.f32 %v568, %v790
        %v797 = vmul.f32 %v571, %v790
        %v798 = vmul.f32 %v576, %v790
        %v799 = vmul.f32 %v579, %v790
        %v800 = vmul.f32 %v584, %v790
        %v801 = vmul.f32 %v587, %v790
        %v802 = vmul.f32 %v592, %v790
        %v803 = vmul.f32 %v595, %v790
        %v804 = vmul.f32 %v600, %v790
        %v805 = vmul.f32 %v603, %v790
        %v806 = vmul.f32 %v608, %v790
        %v807 = vmul.f32 %v611, %v790
        %v808 = vmul.f32 %v616, %v790
        %v809 = vmul.f32 %v619, %v790
        %v810 = vmul.f32 %v624, %v790
        %v811 = vmul.f32 %v627, %v790
        %v812 = vmul.f32 %v632, %v790
        %v813 = vmul.f32 %v635, %v790
        %v814 = vmul.f32 %v640, %v790
        %v815 = vmul.f32 %v643, %v790
        %v816 = vmul.f32 %v648, %v790
        %v817 = vmul.f32 %v651, %v790
        %v818 = vmul.f32 %v656, %v790
        %v819 = vmul.f32 %v659, %v790
        %v820 = vmul.f32 %v664, %v790
        %v821 = vmul.f32 %v667, %v790
        %v822 = vmul.f32 %v672, %v790
        %v823 = vmul.f32 %v675, %v790
        %v824 = vlaneseq
        %v825 = vshrl.u32 %v824, 7
        %v826 = vsub.s32 1, %v825
        %v827 = vrot.slane %v679, %v826
        %829 = vrot.lane.b32.xlu0 %v827, 4
        %v830 = vpop.permute.xlu0 %829
        %v832 = vadd.f32 %v792, %v830
        %v833 = vadd.f32 %v793, %v830
        %v834 = vadd.f32 %v794, %v830
        %v835 = vadd.f32 %v795, %v830
        %v836 = vadd.f32 %v796, %v830
        %v837 = vadd.f32 %v797, %v830
        %v838 = vadd.f32 %v798, %v830
        %v839 = vadd.f32 %v799, %v830
        %v840 = vadd.f32 %v800, %v830
        %v841 = vadd.f32 %v801, %v830
        %v842 = vadd.f32 %v802, %v830
        %v843 = vadd.f32 %v803, %v830
        %v844 = vadd.f32 %v804, %v830
        %v845 = vadd.f32 %v805, %v830
        %v846 = vadd.f32 %v806, %v830
        %v847 = vadd.f32 %v807, %v830
        %v848 = vadd.f32 %v808, %v830
        %v849 = vadd.f32 %v809, %v830
        %v850 = vadd.f32 %v810, %v830
        %v851 = vadd.f32 %v811, %v830
        %v852 = vadd.f32 %v812, %v830
        %v853 = vadd.f32 %v813, %v830
        %v854 = vadd.f32 %v814, %v830
        %v855 = vadd.f32 %v815, %v830
        %v856 = vadd.f32 %v816, %v830
        %v857 = vadd.f32 %v817, %v830
        %v858 = vadd.f32 %v818, %v830
        %v859 = vadd.f32 %v819, %v830
        %v860 = vadd.f32 %v820, %v830
        %v861 = vadd.f32 %v821, %v830
        %v862 = vadd.f32 %v822, %v830
        %v863 = vadd.f32 %v823, %v830
        %v864 = vmax.f32 %v832, 0.0
        %v865 = vmax.f32 %v833, 0.0
        %v866 = vmax.f32 %v834, 0.0
        %v867 = vmax.f32 %v835, 0.0
        %v868 = vmax.f32 %v836, 0.0
        %v869 = vmax.f32 %v837, 0.0
        %v870 = vmax.f32 %v838, 0.0
        %v871 = vmax.f32 %v839, 0.0
        %v872 = vmax.f32 %v840, 0.0
        %v873 = vmax.f32 %v841, 0.0
        %v874 = vmax.f32 %v842, 0.0
        %v875 = vmax.f32 %v843, 0.0
        %v876 = vmax.f32 %v844, 0.0
        %v877 = vmax.f32 %v845, 0.0
        %v878 = vmax.f32 %v846, 0.0
        %v879 = vmax.f32 %v847, 0.0
        %v880 = vmax.f32 %v848, 0.0
        %v881 = vmax.f32 %v849, 0.0
        %v882 = vmax.f32 %v850, 0.0
        %v883 = vmax.f32 %v851, 0.0
        %v884 = vmax.f32 %v852, 0.0
        %v885 = vmax.f32 %v853, 0.0
        %v886 = vmax.f32 %v854, 0.0
        %v887 = vmax.f32 %v855, 0.0
        %v888 = vmax.f32 %v856, 0.0
        %v889 = vmax.f32 %v857, 0.0
        %v890 = vmax.f32 %v858, 0.0
        %v891 = vmax.f32 %v859, 0.0
        %v892 = vmax.f32 %v860, 0.0
        %v893 = vmax.f32 %v861, 0.0
        %v894 = vmax.f32 %v862, 0.0
        %v895 = vmax.f32 %v863, 0.0
        %v896 = vld [vmem:[%s4] sm:$0xf]
        %v897 = vld [vmem:[%s4 + $0x4] sm:$0xf]
        %v898 = vld [vmem:[%s4 + $0x8] sm:$0xf]
        %v899 = vld [vmem:[%s4 + $0xc] sm:$0xf]
        %v900 = vld [vmem:[%s4 + $0x10] sm:$0x3]
        %v901 = vld [vmem:[%s5] sm:$0x3]
        %v902 = vpack.c.bf16 %v753, %v752
        %v903 = vpack.c.bf16 %v755, %v754
        %v904 = vpack.c.bf16 %v757, %v756
        %v905 = vpack.c.bf16 %v759, %v758
        %v906 = vpack.c.bf16 %v761, %v760
        %v907 = vpack.c.bf16 %v763, %v762
        %v908 = vpack.c.bf16 %v765, %v764
        %v909 = vpack.c.bf16 %v767, %v766
        %v910 = vpack.c.bf16 %v769, %v768
        %v911 = vpack.c.bf16 %v771, %v770
        %v912 = vpack.c.bf16 %v773, %v772
        %v913 = vpack.c.bf16 %v775, %v774
        %v914 = vpack.c.bf16 %v777, %v776
        %v915 = vpack.c.bf16 %v779, %v778
        %v916 = vpack.c.bf16 %v781, %v780
        %v917 = vpack.c.bf16 %v783, %v782
        %v919 = vshrl.u32 0, 16
        %v921 = vrot.slane %v919, 7
        %v922 = vshll.u32 0, 16
        %v924 = vor.u32 %v921, %v922
        %v926 = vshrl.u32 %v902, 16
        %v928 = vrot.slane %v926, 7
        %v929 = vshll.u32 %v902, 16
        %v931 = vor.u32 %v928, %v929
        %v933 = vshrl.u32 %v903, 16
        %v935 = vrot.slane %v933, 7
        %v936 = vshll.u32 %v903, 16
        %v938 = vor.u32 %v935, %v936
        %v940 = vshrl.u32 %v904, 16
        %v942 = vrot.slane %v940, 7
        %v943 = vshll.u32 %v904, 16
        %v945 = vor.u32 %v942, %v943
        %v947 = vshrl.u32 %v905, 16
        %v949 = vrot.slane %v947, 7
        %v950 = vshll.u32 %v905, 16
        %v952 = vor.u32 %v949, %v950
        %v954 = vshrl.u32 %v906, 16
        %v956 = vrot.slane %v954, 7
        %v957 = vshll.u32 %v906, 16
        %v959 = vor.u32 %v956, %v957
        %v961 = vshrl.u32 %v907, 16
        %v963 = vrot.slane %v961, 7
        %v964 = vshll.u32 %v907, 16
        %v966 = vor.u32 %v963, %v964
        %v968 = vshrl.u32 %v908, 16
        %v970 = vrot.slane %v968, 7
        %v971 = vshll.u32 %v908, 16
        %v973 = vor.u32 %v970, %v971
        %v975 = vshrl.u32 %v909, 16
        %v977 = vrot.slane %v975, 7
        %v978 = vshll.u32 %v909, 16
        %v980 = vor.u32 %v977, %v978
        %v982 = vshrl.u32 %v910, 16
        %v984 = vrot.slane %v982, 7
        %v985 = vshll.u32 %v910, 16
        %v987 = vor.u32 %v984, %v985
        %v989 = vshrl.u32 %v911, 16
        %v991 = vrot.slane %v989, 7
        %v992 = vshll.u32 %v911, 16
        %v994 = vor.u32 %v991, %v992
        %v996 = vshrl.u32 %v912, 16
        %v998 = vrot.slane %v996, 7
        %v999 = vshll.u32 %v912, 16
        %v1001 = vor.u32 %v998, %v999
        %v1003 = vshrl.u32 %v913, 16
        %v1005 = vrot.slane %v1003, 7
        %v1006 = vshll.u32 %v913, 16
        %v1008 = vor.u32 %v1005, %v1006
        %v1010 = vshrl.u32 %v914, 16
        %v1012 = vrot.slane %v1010, 7
        %v1013 = vshll.u32 %v914, 16
        %v1015 = vor.u32 %v1012, %v1013
        %v1017 = vshrl.u32 %v915, 16
        %v1019 = vrot.slane %v1017, 7
        %v1020 = vshll.u32 %v915, 16
        %v1022 = vor.u32 %v1019, %v1020
        %v1024 = vshrl.u32 %v916, 16
        %v1026 = vrot.slane %v1024, 7
        %v1027 = vshll.u32 %v916, 16
        %v1029 = vor.u32 %v1026, %v1027
        %v1031 = vshrl.u32 %v917, 16
        %v1033 = vrot.slane %v1031, 7
        %v1034 = vshll.u32 %v917, 16
        %v1036 = vor.u32 %v1033, %v1034
        %vm1071 = vcmask 1040384
        %vm1072 = vsmask.f32 256
        %vm1073 = vmand %vm1071, %vm1072
        %v1074 = vsel %vm1073, 0, %v924
        %v1075 = vsel %vm1073, 0, %v931
        %v1076 = vsel %vm1073, 0, %v938
        %v1077 = vsel %vm1073, 0, %v945
        %v1078 = vsel %vm1073, 0, %v952
        %v1079 = vsel %vm1073, 0, %v959
        %v1080 = vsel %vm1073, 0, %v966
        %v1081 = vsel %vm1073, 0, %v973
        %v1082 = vsel %vm1073, 0, %v980
        %v1083 = vsel %vm1073, 0, %v987
        %v1084 = vsel %vm1073, 0, %v994
        %v1085 = vsel %vm1073, 0, %v1001
        %v1086 = vsel %vm1073, 0, %v1008
        %v1087 = vsel %vm1073, 0, %v1015
        %v1088 = vsel %vm1073, 0, %v1022
        %v1089 = vsel %vm1073, 0, %v1029
        %v1090 = vsel %vm1073, 0, %v1036
        %v1091 = vsel %vm1073, %v921, 0
        %v1092 = vsel %vm1073, %v928, 0
        %v1093 = vsel %vm1073, %v935, 0
        %v1094 = vsel %vm1073, %v942, 0
        %v1095 = vsel %vm1073, %v949, 0
        %v1096 = vsel %vm1073, %v956, 0
        %v1097 = vsel %vm1073, %v963, 0
        %v1098 = vsel %vm1073, %v970, 0
        %v1099 = vsel %vm1073, %v977, 0
        %v1100 = vsel %vm1073, %v984, 0
        %v1101 = vsel %vm1073, %v991, 0
        %v1102 = vsel %vm1073, %v998, 0
        %v1103 = vsel %vm1073, %v1005, 0
        %v1104 = vsel %vm1073, %v1012, 0
        %v1105 = vsel %vm1073, %v1019, 0
        %v1106 = vsel %vm1073, %v1026, 0
        %v1107 = vsel %vm1073, %v1033, 0
        %vm1108 = vsmask.f32 7424
        %v1110 = vshrl.u32 %v1074, 16
        %v1112 = vshll.u32 %v1074, 16
        %v1114 = vrot.slane %v1112, 1
        %v1115 = vor.u32 %v1110, %v1114
        %v1117 = vshll.u32 %v1091, 16
        %v1119 = vrot.slane %v1117, 1
        %v1120 = vsel %vm1108, %v1115, %v1119
        %v1122 = vshrl.u32 %v1075, 16
        %v1124 = vshll.u32 %v1075, 16
        %v1126 = vrot.slane %v1124, 1
        %v1127 = vor.u32 %v1122, %v1126
        %v1129 = vshll.u32 %v1092, 16
        %v1131 = vrot.slane %v1129, 1
        %v1132 = vsel %vm1108, %v1127, %v1131
        %v1134 = vshrl.u32 %v1076, 16
        %v1136 = vshll.u32 %v1076, 16
        %v1138 = vrot.slane %v1136, 1
        %v1139 = vor.u32 %v1134, %v1138
        %v1141 = vshll.u32 %v1093, 16
        %v1143 = vrot.slane %v1141, 1
        %v1144 = vsel %vm1108, %v1139, %v1143
        %v1146 = vshrl.u32 %v1077, 16
        %v1148 = vshll.u32 %v1077, 16
        %v1150 = vrot.slane %v1148, 1
        %v1151 = vor.u32 %v1146, %v1150
        %v1153 = vshll.u32 %v1094, 16
        %v1155 = vrot.slane %v1153, 1
        %v1156 = vsel %vm1108, %v1151, %v1155
        %v1158 = vshrl.u32 %v1078, 16
        %v1160 = vshll.u32 %v1078, 16
        %v1162 = vrot.slane %v1160, 1
        %v1163 = vor.u32 %v1158, %v1162
        %v1165 = vshll.u32 %v1095, 16
        %v1167 = vrot.slane %v1165, 1
        %v1168 = vsel %vm1108, %v1163, %v1167
        %v1170 = vshrl.u32 %v1079, 16
        %v1172 = vshll.u32 %v1079, 16
        %v1174 = vrot.slane %v1172, 1
        %v1175 = vor.u32 %v1170, %v1174
        %v1177 = vshll.u32 %v1096, 16
        %v1179 = vrot.slane %v1177, 1
        %v1180 = vsel %vm1108, %v1175, %v1179
        %v1182 = vshrl.u32 %v1080, 16
        %v1184 = vshll.u32 %v1080, 16
        %v1186 = vrot.slane %v1184, 1
        %v1187 = vor.u32 %v1182, %v1186
        %v1189 = vshll.u32 %v1097, 16
        %v1191 = vrot.slane %v1189, 1
        %v1192 = vsel %vm1108, %v1187, %v1191
        %v1194 = vshrl.u32 %v1081, 16
        %v1196 = vshll.u32 %v1081, 16
        %v1198 = vrot.slane %v1196, 1
        %v1199 = vor.u32 %v1194, %v1198
        %v1201 = vshll.u32 %v1098, 16
        %v1203 = vrot.slane %v1201, 1
        %v1204 = vsel %vm1108, %v1199, %v1203
        %v1206 = vshrl.u32 %v1082, 16
        %v1208 = vshll.u32 %v1082, 16
        %v1210 = vrot.slane %v1208, 1
        %v1211 = vor.u32 %v1206, %v1210
        %v1213 = vshll.u32 %v1099, 16
        %v1215 = vrot.slane %v1213, 1
        %v1216 = vsel %vm1108, %v1211, %v1215
        %v1218 = vshrl.u32 %v1083, 16
        %v1220 = vshll.u32 %v1083, 16
        %v1222 = vrot.slane %v1220, 1
        %v1223 = vor.u32 %v1218, %v1222
        %v1225 = vshll.u32 %v1100, 16
        %v1227 = vrot.slane %v1225, 1
        %v1228 = vsel %vm1108, %v1223, %v1227
        %v1230 = vshrl.u32 %v1084, 16
        %v1232 = vshll.u32 %v1084, 16
        %v1234 = vrot.slane %v1232, 1
        %v1235 = vor.u32 %v1230, %v1234
        %v1237 = vshll.u32 %v1101, 16
        %v1239 = vrot.slane %v1237, 1
        %v1240 = vsel %vm1108, %v1235, %v1239
        %v1242 = vshrl.u32 %v1085, 16
        %v1244 = vshll.u32 %v1085, 16
        %v1246 = vrot.slane %v1244, 1
        %v1247 = vor.u32 %v1242, %v1246
        %v1249 = vshll.u32 %v1102, 16
        %v1251 = vrot.slane %v1249, 1
        %v1252 = vsel %vm1108, %v1247, %v1251
        %v1254 = vshrl.u32 %v1086, 16
        %v1256 = vshll.u32 %v1086, 16
        %v1258 = vrot.slane %v1256, 1
        %v1259 = vor.u32 %v1254, %v1258
        %v1261 = vshll.u32 %v1103, 16
        %v1263 = vrot.slane %v1261, 1
        %v1264 = vsel %vm1108, %v1259, %v1263
        %v1266 = vshrl.u32 %v1087, 16
        %v1268 = vshll.u32 %v1087, 16
        %v1270 = vrot.slane %v1268, 1
        %v1271 = vor.u32 %v1266, %v1270
        %v1273 = vshll.u32 %v1104, 16
        %v1275 = vrot.slane %v1273, 1
        %v1276 = vsel %vm1108, %v1271, %v1275
        %v1278 = vshrl.u32 %v1088, 16
        %v1280 = vshll.u32 %v1088, 16
        %v1282 = vrot.slane %v1280, 1
        %v1283 = vor.u32 %v1278, %v1282
        %v1285 = vshll.u32 %v1105, 16
        %v1287 = vrot.slane %v1285, 1
        %v1288 = vsel %vm1108, %v1283, %v1287
        %v1290 = vshrl.u32 %v1089, 16
        %v1292 = vshll.u32 %v1089, 16
        %v1294 = vrot.slane %v1292, 1
        %v1295 = vor.u32 %v1290, %v1294
        %v1297 = vshll.u32 %v1106, 16
        %v1299 = vrot.slane %v1297, 1
        %v1300 = vsel %vm1108, %v1295, %v1299
        %1301 = vrot.lane.b32.xlu0 %v1120, 4
        %v1302 = vpop.permute.xlu0 %1301
        %1303 = vrot.lane.b32.xlu0 %v1132, 4
        %v1304 = vpop.permute.xlu0 %1303
        %1305 = vrot.lane.b32.xlu0 %v1144, 4
        %v1306 = vpop.permute.xlu0 %1305
        %1307 = vrot.lane.b32.xlu0 %v1156, 4
        %v1308 = vpop.permute.xlu0 %1307
        %1309 = vrot.lane.b32.xlu0 %v1168, 4
        %v1310 = vpop.permute.xlu0 %1309
        %1311 = vrot.lane.b32.xlu0 %v1180, 4
        %v1312 = vpop.permute.xlu0 %1311
        %1313 = vrot.lane.b32.xlu0 %v1192, 4
        %v1314 = vpop.permute.xlu0 %1313
        %1315 = vrot.lane.b32.xlu0 %v1204, 4
        %v1316 = vpop.permute.xlu0 %1315
        %1317 = vrot.lane.b32.xlu0 %v1216, 4
        %v1318 = vpop.permute.xlu0 %1317
        %1319 = vrot.lane.b32.xlu0 %v1228, 4
        %v1320 = vpop.permute.xlu0 %1319
        %1321 = vrot.lane.b32.xlu0 %v1240, 4
        %v1322 = vpop.permute.xlu0 %1321
        %1323 = vrot.lane.b32.xlu0 %v1252, 4
        %v1324 = vpop.permute.xlu0 %1323
        %1325 = vrot.lane.b32.xlu0 %v1264, 4
        %v1326 = vpop.permute.xlu0 %1325
        %1327 = vrot.lane.b32.xlu0 %v1276, 4
        %v1328 = vpop.permute.xlu0 %1327
        %1329 = vrot.lane.b32.xlu0 %v1288, 4
        %v1330 = vpop.permute.xlu0 %1329
        %1331 = vrot.lane.b32.xlu0 %v1300, 4
        %v1332 = vpop.permute.xlu0 %1331
        %vm1365 = vcmask 1046528
        %v1366 = vrot.slane %v1074, 1
        %v1367 = vrot.slane %v1091, 1
        %v1368 = vsel %vm1365, %v1366, %v1367
        %v1369 = vrot.slane %v1075, 1
        %v1370 = vrot.slane %v1092, 1
        %v1371 = vsel %vm1365, %v1369, %v1370
        %v1372 = vrot.slane %v1076, 1
        %v1373 = vrot.slane %v1093, 1
        %v1374 = vsel %vm1365, %v1372, %v1373
        %v1375 = vrot.slane %v1077, 1
        %v1376 = vrot.slane %v1094, 1
        %v1377 = vsel %vm1365, %v1375, %v1376
        %v1378 = vrot.slane %v1078, 1
        %v1379 = vrot.slane %v1095, 1
        %v1380 = vsel %vm1365, %v1378, %v1379
        %v1381 = vrot.slane %v1079, 1
        %v1382 = vrot.slane %v1096, 1
        %v1383 = vsel %vm1365, %v1381, %v1382
        %v1384 = vrot.slane %v1080, 1
        %v1385 = vrot.slane %v1097, 1
        %v1386 = vsel %vm1365, %v1384, %v1385
        %v1387 = vrot.slane %v1081, 1
        %v1388 = vrot.slane %v1098, 1
        %v1389 = vsel %vm1365, %v1387, %v1388
        %v1390 = vrot.slane %v1082, 1
        %v1391 = vrot.slane %v1099, 1
        %v1392 = vsel %vm1365, %v1390, %v1391
        %v1393 = vrot.slane %v1083, 1
        %v1394 = vrot.slane %v1100, 1
        %v1395 = vsel %vm1365, %v1393, %v1394
        %v1396 = vrot.slane %v1084, 1
        %v1397 = vrot.slane %v1101, 1
        %v1398 = vsel %vm1365, %v1396, %v1397
        %v1399 = vrot.slane %v1085, 1
        %v1400 = vrot.slane %v1102, 1
        %v1401 = vsel %vm1365, %v1399, %v1400
        %v1402 = vrot.slane %v1086, 1
        %v1403 = vrot.slane %v1103, 1
        %v1404 = vsel %vm1365, %v1402, %v1403
        %v1405 = vrot.slane %v1087, 1
        %v1406 = vrot.slane %v1104, 1
        %v1407 = vsel %vm1365, %v1405, %v1406
        %v1408 = vrot.slane %v1088, 1
        %v1409 = vrot.slane %v1105, 1
        %v1410 = vsel %vm1365, %v1408, %v1409
        %v1411 = vrot.slane %v1089, 1
        %v1412 = vrot.slane %v1106, 1
        %v1413 = vsel %vm1365, %v1411, %v1412
        %1414 = vrot.lane.b32.xlu0 %v1368, 8
        %v1415 = vpop.permute.xlu0 %1414
        %1416 = vrot.lane.b32.xlu0 %v1371, 8
        %v1417 = vpop.permute.xlu0 %1416
        %1418 = vrot.lane.b32.xlu0 %v1374, 8
        %v1419 = vpop.permute.xlu0 %1418
        %1420 = vrot.lane.b32.xlu0 %v1377, 8
        %v1421 = vpop.permute.xlu0 %1420
        %1422 = vrot.lane.b32.xlu0 %v1380, 8
        %v1423 = vpop.permute.xlu0 %1422
        %1424 = vrot.lane.b32.xlu0 %v1383, 8
        %v1425 = vpop.permute.xlu0 %1424
        %1426 = vrot.lane.b32.xlu0 %v1386, 8
        %v1427 = vpop.permute.xlu0 %1426
        %1428 = vrot.lane.b32.xlu0 %v1389, 8
        %v1429 = vpop.permute.xlu0 %1428
        %1430 = vrot.lane.b32.xlu0 %v1392, 8
        %v1431 = vpop.permute.xlu0 %1430
        %1432 = vrot.lane.b32.xlu0 %v1395, 8
        %v1433 = vpop.permute.xlu0 %1432
        %1434 = vrot.lane.b32.xlu0 %v1398, 8
        %v1435 = vpop.permute.xlu0 %1434
        %1436 = vrot.lane.b32.xlu0 %v1401, 8
        %v1437 = vpop.permute.xlu0 %1436
        %1438 = vrot.lane.b32.xlu0 %v1404, 8
        %v1439 = vpop.permute.xlu0 %1438
        %1440 = vrot.lane.b32.xlu0 %v1407, 8
        %v1441 = vpop.permute.xlu0 %1440
        %1442 = vrot.lane.b32.xlu0 %v1410, 8
        %v1443 = vpop.permute.xlu0 %1442
        %1444 = vrot.lane.b32.xlu0 %v1413, 8
        %v1445 = vpop.permute.xlu0 %1444
        %1447 = vrot.lane.b32.xlu0 %v1075, 12
        %v1448 = vpop.permute.xlu0 %1447
        %1449 = vrot.lane.b32.xlu0 %v1076, 12
        %v1450 = vpop.permute.xlu0 %1449
        %1451 = vrot.lane.b32.xlu0 %v1077, 12
        %v1452 = vpop.permute.xlu0 %1451
        %1453 = vrot.lane.b32.xlu0 %v1078, 12
        %v1454 = vpop.permute.xlu0 %1453
        %1455 = vrot.lane.b32.xlu0 %v1079, 12
        %v1456 = vpop.permute.xlu0 %1455
        %1457 = vrot.lane.b32.xlu0 %v1080, 12
        %v1458 = vpop.permute.xlu0 %1457
        %1459 = vrot.lane.b32.xlu0 %v1081, 12
        %v1460 = vpop.permute.xlu0 %1459
        %1461 = vrot.lane.b32.xlu0 %v1082, 12
        %v1462 = vpop.permute.xlu0 %1461
        %1463 = vrot.lane.b32.xlu0 %v1083, 12
        %v1464 = vpop.permute.xlu0 %1463
        %1465 = vrot.lane.b32.xlu0 %v1084, 12
        %v1466 = vpop.permute.xlu0 %1465
        %1467 = vrot.lane.b32.xlu0 %v1085, 12
        %v1468 = vpop.permute.xlu0 %1467
        %1469 = vrot.lane.b32.xlu0 %v1086, 12
        %v1470 = vpop.permute.xlu0 %1469
        %1471 = vrot.lane.b32.xlu0 %v1087, 12
        %v1472 = vpop.permute.xlu0 %1471
        %1473 = vrot.lane.b32.xlu0 %v1088, 12
        %v1474 = vpop.permute.xlu0 %1473
        %1475 = vrot.lane.b32.xlu0 %v1089, 12
        %v1476 = vpop.permute.xlu0 %1475
        %1477 = vrot.lane.b32.xlu0 %v1090, 12
        %v1478 = vpop.permute.xlu0 %1477
        %v1480 = vshrl.u32 %v1090, 16
        %v1482 = vshll.u32 %v1090, 16
        %v1484 = vrot.slane %v1482, 1
        %v1485 = vor.u32 %v1480, %v1484
        %v1487 = vshll.u32 %v1107, 16
        %v1489 = vrot.slane %v1487, 1
        %v1490 = vsel %vm1108, %v1485, %v1489
        %1491 = vrot.lane.b32.xlu0 %v1132, 16
        %v1492 = vpop.permute.xlu0 %1491
        %1493 = vrot.lane.b32.xlu0 %v1144, 16
        %v1494 = vpop.permute.xlu0 %1493
        %1495 = vrot.lane.b32.xlu0 %v1156, 16
        %v1496 = vpop.permute.xlu0 %1495
        %1497 = vrot.lane.b32.xlu0 %v1168, 16
        %v1498 = vpop.permute.xlu0 %1497
        %1499 = vrot.lane.b32.xlu0 %v1180, 16
        %v1500 = vpop.permute.xlu0 %1499
        %1501 = vrot.lane.b32.xlu0 %v1192, 16
        %v1502 = vpop.permute.xlu0 %1501
        %1503 = vrot.lane.b32.xlu0 %v1204, 16
        %v1504 = vpop.permute.xlu0 %1503
        %1505 = vrot.lane.b32.xlu0 %v1216, 16
        %v1506 = vpop.permute.xlu0 %1505
        %1507 = vrot.lane.b32.xlu0 %v1228, 16
        %v1508 = vpop.permute.xlu0 %1507
        %1509 = vrot.lane.b32.xlu0 %v1240, 16
        %v1510 = vpop.permute.xlu0 %1509
        %1511 = vrot.lane.b32.xlu0 %v1252, 16
        %v1512 = vpop.permute.xlu0 %1511
        %1513 = vrot.lane.b32.xlu0 %v1264, 16
        %v1514 = vpop.permute.xlu0 %1513
        %1515 = vrot.lane.b32.xlu0 %v1276, 16
        %v1516 = vpop.permute.xlu0 %1515
        %1517 = vrot.lane.b32.xlu0 %v1288, 16
        %v1518 = vpop.permute.xlu0 %1517
        %1519 = vrot.lane.b32.xlu0 %v1300, 16
        %v1520 = vpop.permute.xlu0 %1519
        %1521 = vrot.lane.b32.xlu0 %v1490, 16
        %v1522 = vpop.permute.xlu0 %1521
        %v1524 = vrot.slane %v1090, 1
        %v1525 = vrot.slane %v1107, 1
        %v1526 = vsel %vm1365, %v1524, %v1525
        %1527 = vrot.lane.b32.xlu0 %v1371, 20
        %v1528 = vpop.permute.xlu0 %1527
        %1529 = vrot.lane.b32.xlu0 %v1374, 20
        %v1530 = vpop.permute.xlu0 %1529
        %1531 = vrot.lane.b32.xlu0 %v1377, 20
        %v1532 = vpop.permute.xlu0 %1531
        %1533 = vrot.lane.b32.xlu0 %v1380, 20
        %v1534 = vpop.permute.xlu0 %1533
        %1535 = vrot.lane.b32.xlu0 %v1383, 20
        %v1536 = vpop.permute.xlu0 %1535
        %1537 = vrot.lane.b32.xlu0 %v1386, 20
        %v1538 = vpop.permute.xlu0 %1537
        %1539 = vrot.lane.b32.xlu0 %v1389, 20
        %v1540 = vpop.permute.xlu0 %1539
        %1541 = vrot.lane.b32.xlu0 %v1392, 20
        %v1542 = vpop.permute.xlu0 %1541
        %1543 = vrot.lane.b32.xlu0 %v1395, 20
        %v1544 = vpop.permute.xlu0 %1543
        %1545 = vrot.lane.b32.xlu0 %v1398, 20
        %v1546 = vpop.permute.xlu0 %1545
        %1547 = vrot.lane.b32.xlu0 %v1401, 20
        %v1548 = vpop.permute.xlu0 %1547
        %1549 = vrot.lane.b32.xlu0 %v1404, 20
        %v1550 = vpop.permute.xlu0 %1549
        %1551 = vrot.lane.b32.xlu0 %v1407, 20
        %v1552 = vpop.permute.xlu0 %1551
        %1553 = vrot.lane.b32.xlu0 %v1410, 20
        %v1554 = vpop.permute.xlu0 %1553
        %1555 = vrot.lane.b32.xlu0 %v1413, 20
        %v1556 = vpop.permute.xlu0 %1555
        %1557 = vrot.lane.b32.xlu0 %v1526, 20
        %v1558 = vpop.permute.xlu0 %1557
        %1559 = vrot.lane.b32.xlu0 %v1076, 24
        %v1560 = vpop.permute.xlu0 %1559
        %1561 = vrot.lane.b32.xlu0 %v1077, 24
        %v1562 = vpop.permute.xlu0 %1561
        %1563 = vrot.lane.b32.xlu0 %v1078, 24
        %v1564 = vpop.permute.xlu0 %1563
        %1565 = vrot.lane.b32.xlu0 %v1079, 24
        %v1566 = vpop.permute.xlu0 %1565
        %1567 = vrot.lane.b32.xlu0 %v1080, 24
        %v1568 = vpop.permute.xlu0 %1567
        %1569 = vrot.lane.b32.xlu0 %v1081, 24
        %v1570 = vpop.permute.xlu0 %1569
        %1571 = vrot.lane.b32.xlu0 %v1082, 24
        %v1572 = vpop.permute.xlu0 %1571
        %1573 = vrot.lane.b32.xlu0 %v1083, 24
        %v1574 = vpop.permute.xlu0 %1573
        %1575 = vrot.lane.b32.xlu0 %v1084, 24
        %v1576 = vpop.permute.xlu0 %1575
        %1577 = vrot.lane.b32.xlu0 %v1085, 24
        %v1578 = vpop.permute.xlu0 %1577
        %1579 = vrot.lane.b32.xlu0 %v1086, 24
        %v1580 = vpop.permute.xlu0 %1579
        %1581 = vrot.lane.b32.xlu0 %v1087, 24
        %v1582 = vpop.permute.xlu0 %1581
        %1583 = vrot.lane.b32.xlu0 %v1088, 24
        %v1584 = vpop.permute.xlu0 %1583
        %1585 = vrot.lane.b32.xlu0 %v1089, 24
        %v1586 = vpop.permute.xlu0 %1585
        %1587 = vrot.lane.b32.xlu0 %v1090, 24
        %v1588 = vpop.permute.xlu0 %1587
        %1589 = vrot.lane.b32.xlu0 %v1074, 24
        %v1590 = vpop.permute.xlu0 %1589
        %1591 = vrot.lane.b32.xlu0 %v1144, 28
        %v1592 = vpop.permute.xlu0 %1591
        %1593 = vrot.lane.b32.xlu0 %v1156, 28
        %v1594 = vpop.permute.xlu0 %1593
        %1595 = vrot.lane.b32.xlu0 %v1168, 28
        %v1596 = vpop.permute.xlu0 %1595
        %1597 = vrot.lane.b32.xlu0 %v1180, 28
        %v1598 = vpop.permute.xlu0 %1597
        %1599 = vrot.lane.b32.xlu0 %v1192, 28
        %v1600 = vpop.permute.xlu0 %1599
        %1601 = vrot.lane.b32.xlu0 %v1204, 28
        %v1602 = vpop.permute.xlu0 %1601
        %1603 = vrot.lane.b32.xlu0 %v1216, 28
        %v1604 = vpop.permute.xlu0 %1603
        %1605 = vrot.lane.b32.xlu0 %v1228, 28
        %v1606 = vpop.permute.xlu0 %1605
        %1607 = vrot.lane.b32.xlu0 %v1240, 28
        %v1608 = vpop.permute.xlu0 %1607
        %1609 = vrot.lane.b32.xlu0 %v1252, 28
        %v1610 = vpop.permute.xlu0 %1609
        %1611 = vrot.lane.b32.xlu0 %v1264, 28
        %v1612 = vpop.permute.xlu0 %1611
        %1613 = vrot.lane.b32.xlu0 %v1276, 28
        %v1614 = vpop.permute.xlu0 %1613
        %1615 = vrot.lane.b32.xlu0 %v1288, 28
        %v1616 = vpop.permute.xlu0 %1615
        %1617 = vrot.lane.b32.xlu0 %v1300, 28
        %v1618 = vpop.permute.xlu0 %1617
        %1619 = vrot.lane.b32.xlu0 %v1490, 28
        %v1620 = vpop.permute.xlu0 %1619
        %1621 = vrot.lane.b32.xlu0 %v1120, 28
        %v1622 = vpop.permute.xlu0 %1621
        %1623 = vrot.lane.b32.xlu0 %v1374, 32
        %v1624 = vpop.permute.xlu0 %1623
        %1625 = vrot.lane.b32.xlu0 %v1377, 32
        %v1626 = vpop.permute.xlu0 %1625
        %1627 = vrot.lane.b32.xlu0 %v1380, 32
        %v1628 = vpop.permute.xlu0 %1627
        %1629 = vrot.lane.b32.xlu0 %v1383, 32
        %v1630 = vpop.permute.xlu0 %1629
        %1631 = vrot.lane.b32.xlu0 %v1386, 32
        %v1632 = vpop.permute.xlu0 %1631
        %1633 = vrot.lane.b32.xlu0 %v1389, 32
        %v1634 = vpop.permute.xlu0 %1633
        %1635 = vrot.lane.b32.xlu0 %v1392, 32
        %v1636 = vpop.permute.xlu0 %1635
        %1637 = vrot.lane.b32.xlu0 %v1395, 32
        %v1638 = vpop.permute.xlu0 %1637
        %1639 = vrot.lane.b32.xlu0 %v1398, 32
        %v1640 = vpop.permute.xlu0 %1639
        %1641 = vrot.lane.b32.xlu0 %v1401, 32
        %v1642 = vpop.permute.xlu0 %1641
        %1643 = vrot.lane.b32.xlu0 %v1404, 32
        %v1644 = vpop.permute.xlu0 %1643
        %1645 = vrot.lane.b32.xlu0 %v1407, 32
        %v1646 = vpop.permute.xlu0 %1645
        %1647 = vrot.lane.b32.xlu0 %v1410, 32
        %v1648 = vpop.permute.xlu0 %1647
        %1649 = vrot.lane.b32.xlu0 %v1413, 32
        %v1650 = vpop.permute.xlu0 %1649
        %1651 = vrot.lane.b32.xlu0 %v1526, 32
        %v1652 = vpop.permute.xlu0 %1651
        %1653 = vrot.lane.b32.xlu0 %v1368, 32
        %v1654 = vpop.permute.xlu0 %1653
        %vm1655 = vcmask 31744
        %v1657 = vsel %vm1655, %v1074, %v1302
        %v1659 = vsel %vm1655, %v1075, %v1304
        %v1661 = vsel %vm1655, %v1076, %v1306
        %v1663 = vsel %vm1655, %v1077, %v1308
        %v1665 = vsel %vm1655, %v1078, %v1310
        %v1667 = vsel %vm1655, %v1079, %v1312
        %v1669 = vsel %vm1655, %v1080, %v1314
        %v1671 = vsel %vm1655, %v1081, %v1316
        %v1673 = vsel %vm1655, %v1082, %v1318
        %v1675 = vsel %vm1655, %v1083, %v1320
        %v1677 = vsel %vm1655, %v1084, %v1322
        %v1679 = vsel %vm1655, %v1085, %v1324
        %v1681 = vsel %vm1655, %v1086, %v1326
        %v1683 = vsel %vm1655, %v1087, %v1328
        %v1685 = vsel %vm1655, %v1088, %v1330
        %v1687 = vsel %vm1655, %v1089, %v1332
        %vm1688 = vcmask 64512
        %v1690 = vsel %vm1688, %v1657, %v1415
        %v1692 = vsel %vm1688, %v1659, %v1417
        %v1694 = vsel %vm1688, %v1661, %v1419
        %v1696 = vsel %vm1688, %v1663, %v1421
        %v1698 = vsel %vm1688, %v1665, %v1423
        %v1700 = vsel %vm1688, %v1667, %v1425
        %v1702 = vsel %vm1688, %v1669, %v1427
        %v1704 = vsel %vm1688, %v1671, %v1429
        %v1706 = vsel %vm1688, %v1673, %v1431
        %v1708 = vsel %vm1688, %v1675, %v1433
        %v1710 = vsel %vm1688, %v1677, %v1435
        %v1712 = vsel %vm1688, %v1679, %v1437
        %v1714 = vsel %vm1688, %v1681, %v1439
        %v1716 = vsel %vm1688, %v1683, %v1441
        %v1718 = vsel %vm1688, %v1685, %v1443
        %v1720 = vsel %vm1688, %v1687, %v1445
        %vm1721 = vcmask 97280
        %v1723 = vsel %vm1721, %v1690, %v1448
        %v1725 = vsel %vm1721, %v1692, %v1450
        %v1727 = vsel %vm1721, %v1694, %v1452
        %v1729 = vsel %vm1721, %v1696, %v1454
        %v1731 = vsel %vm1721, %v1698, %v1456
        %v1733 = vsel %vm1721, %v1700, %v1458
        %v1735 = vsel %vm1721, %v1702, %v1460
        %v1737 = vsel %vm1721, %v1704, %v1462
        %v1739 = vsel %vm1721, %v1706, %v1464
        %v1741 = vsel %vm1721, %v1708, %v1466
        %v1743 = vsel %vm1721, %v1710, %v1468
        %v1745 = vsel %vm1721, %v1712, %v1470
        %v1747 = vsel %vm1721, %v1714, %v1472
        %v1749 = vsel %vm1721, %v1716, %v1474
        %v1751 = vsel %vm1721, %v1718, %v1476
        %v1753 = vsel %vm1721, %v1720, %v1478
        %vm1754 = vcmask 130048
        %v1756 = vsel %vm1754, %v1723, %v1492
        %v1758 = vsel %vm1754, %v1725, %v1494
        %v1760 = vsel %vm1754, %v1727, %v1496
        %v1762 = vsel %vm1754, %v1729, %v1498
        %v1764 = vsel %vm1754, %v1731, %v1500
        %v1766 = vsel %vm1754, %v1733, %v1502
        %v1768 = vsel %vm1754, %v1735, %v1504
        %v1770 = vsel %vm1754, %v1737, %v1506
        %v1772 = vsel %vm1754, %v1739, %v1508
        %v1774 = vsel %vm1754, %v1741, %v1510
        %v1776 = vsel %vm1754, %v1743, %v1512
        %v1778 = vsel %vm1754, %v1745, %v1514
        %v1780 = vsel %vm1754, %v1747, %v1516
        %v1782 = vsel %vm1754, %v1749, %v1518
        %v1784 = vsel %vm1754, %v1751, %v1520
        %v1786 = vsel %vm1754, %v1753, %v1522
        %vm1787 = vcmask 162816
        %v1789 = vsel %vm1787, %v1756, %v1528
        %v1791 = vsel %vm1787, %v1758, %v1530
        %v1793 = vsel %vm1787, %v1760, %v1532
        %v1795 = vsel %vm1787, %v1762, %v1534
        %v1797 = vsel %vm1787, %v1764, %v1536
        %v1799 = vsel %vm1787, %v1766, %v1538
        %v1801 = vsel %vm1787, %v1768, %v1540
        %v1803 = vsel %vm1787, %v1770, %v1542
        %v1805 = vsel %vm1787, %v1772, %v1544
        %v1807 = vsel %vm1787, %v1774, %v1546
        %v1809 = vsel %vm1787, %v1776, %v1548
        %v1811 = vsel %vm1787, %v1778, %v1550
        %v1813 = vsel %vm1787, %v1780, %v1552
        %v1815 = vsel %vm1787, %v1782, %v1554
        %v1817 = vsel %vm1787, %v1784, %v1556
        %v1819 = vsel %vm1787, %v1786, %v1558
        %vm1820 = vcmask 195584
        %v1822 = vsel %vm1820, %v1789, %v1560
        %v1824 = vsel %vm1820, %v1791, %v1562
        %v1826 = vsel %vm1820, %v1793, %v1564
        %v1828 = vsel %vm1820, %v1795, %v1566
        %v1830 = vsel %vm1820, %v1797, %v1568
        %v1832 = vsel %vm1820, %v1799, %v1570
        %v1834 = vsel %vm1820, %v1801, %v1572
        %v1836 = vsel %vm1820, %v1803, %v1574
        %v1838 = vsel %vm1820, %v1805, %v1576
        %v1840 = vsel %vm1820, %v1807, %v1578
        %v1842 = vsel %vm1820, %v1809, %v1580
        %v1844 = vsel %vm1820, %v1811, %v1582
        %v1846 = vsel %vm1820, %v1813, %v1584
        %v1848 = vsel %vm1820, %v1815, %v1586
        %v1850 = vsel %vm1820, %v1817, %v1588
        %v1852 = vsel %vm1820, %v1819, %v1590
        %vm1853 = vcmask 228352
        %v1855 = vsel %vm1853, %v1822, %v1592
        %v1857 = vsel %vm1853, %v1824, %v1594
        %v1859 = vsel %vm1853, %v1826, %v1596
        %v1861 = vsel %vm1853, %v1828, %v1598
        %v1863 = vsel %vm1853, %v1830, %v1600
        %v1865 = vsel %vm1853, %v1832, %v1602
        %v1867 = vsel %vm1853, %v1834, %v1604
        %v1869 = vsel %vm1853, %v1836, %v1606
        %v1871 = vsel %vm1853, %v1838, %v1608
        %v1873 = vsel %vm1853, %v1840, %v1610
        %v1875 = vsel %vm1853, %v1842, %v1612
        %v1877 = vsel %vm1853, %v1844, %v1614
        %v1879 = vsel %vm1853, %v1846, %v1616
        %v1881 = vsel %vm1853, %v1848, %v1618
        %v1883 = vsel %vm1853, %v1850, %v1620
        %v1885 = vsel %vm1853, %v1852, %v1622
        %v1887 = vsel %vm468, %v1855, %v1624
        %v1889 = vsel %vm468, %v1857, %v1626
        %v1891 = vsel %vm468, %v1859, %v1628
        %v1893 = vsel %vm468, %v1861, %v1630
        %v1895 = vsel %vm468, %v1863, %v1632
        %v1897 = vsel %vm468, %v1865, %v1634
        %v1899 = vsel %vm468, %v1867, %v1636
        %v1901 = vsel %vm468, %v1869, %v1638
        %v1903 = vsel %vm468, %v1871, %v1640
        %v1905 = vsel %vm468, %v1873, %v1642
        %v1907 = vsel %vm468, %v1875, %v1644
        %v1909 = vsel %vm468, %v1877, %v1646
        %v1911 = vsel %vm468, %v1879, %v1648
        %v1913 = vsel %vm468, %v1881, %v1650
        %v1915 = vsel %vm468, %v1883, %v1652
        %v1917 = vsel %vm468, %v1885, %v1654
        %v1923 = vunpack.c.l.b16 %v896
        %v1924 = vunpack.c.l.b16 %v897
        %v1925 = vunpack.c.l.b16 %v898
        %v1926 = vunpack.c.l.b16 %v899
        %v1927 = vunpack.c.l.b16 %v900
        %v1928 = vpack.c.b16 %v1924, %v1923
        %v1929 = vpack.c.b16 %v1926, %v1925
        %v1930 = vpack.c.b16 %v1927, %v1927
        %vm1933 = vcmask 293888
        %v1934 = vsel %vm1933, %v1887, 0
        %v1936 = vsel %vm1933, %v1889, 0
        %v1938 = vsel %vm1933, %v1891, 0
        %v1940 = vsel %vm1933, %v1893, 0
        %v1942 = vsel %vm1933, %v1895, 0
        %v1944 = vsel %vm1933, %v1897, 0
        %v1946 = vsel %vm1933, %v1899, 0
        %v1948 = vsel %vm1933, %v1901, 0
        %v1950 = vsel %vm1933, %v1903, 0
        %v1952 = vsel %vm1933, %v1905, 0
        %v1954 = vsel %vm1933, %v1907, 0
        %v1956 = vsel %vm1933, %v1909, 0
        %v1958 = vsel %vm1933, %v1911, 0
        %v1960 = vsel %vm1933, %v1913, 0
        %v1962 = vsel %vm1933, %v1915, 0
        %v1964 = vsel %vm1933, %v1917, 0
        %vm1966 = vcmask 1041408
        %v1968 = vsel %vm1966, %v1930, 0
        %1970 = vmatprep.subr.bf16.mxu0 0
        %1971 = vmatpush1.bf16.msra.mxu0 %v1928
        %1972 = vmatprep.subr.bf16.mxu0 0
        %1973 = vmatpush1.bf16.msra.mxu0 %v1929
        %1974 = vmatprep.subr.bf16.mxu0 0
        %1975 = vmatpush1.bf16.msra.mxu0 %v1968
        %1976 = vmatprep.subr.bf16.mxu0 0
        %1977 = vmatpush1.bf16.msra.mxu0 0
        %1978 = vmatprep.subr.bf16.mxu0 0
        %1979 = vmatpush1.bf16.msra.mxu0 0
        %1980 = vmatprep.subr.bf16.mxu0 0
        %1981 = vmatpush1.bf16.msra.mxu0 0
        %1982 = vmatprep.subr.bf16.mxu0 0
        %1983 = vmatpush1.bf16.msra.mxu0 0
        %1984 = vmatprep.subr.bf16.mxu0 0
        %1985 = vmatpush1.bf16.msra.mxu0 0
        %1986 = vmatprep.subr.bf16.mxu0 0
        %1987 = vmatpush1.bf16.msra.mxu0 0
        %1988 = vmatprep.subr.bf16.mxu0 0
        %1989 = vmatpush1.bf16.msra.mxu0 0
        %1990 = vmatprep.subr.bf16.mxu0 0
        %1991 = vmatpush1.bf16.msra.mxu0 0
        %1992 = vmatprep.subr.bf16.mxu0 0
        %1993 = vmatpush1.bf16.msra.mxu0 0
        %1994 = vmatprep.subr.bf16.mxu0 0
        %1995 = vmatpush1.bf16.msra.mxu0 0
        %1996 = vmatprep.subr.bf16.mxu0 0
        %1997 = vmatpush1.bf16.msra.mxu0 0
        %1998 = vmatprep.subr.bf16.mxu0 0
        %1999 = vmatpush1.bf16.msra.mxu0 0
        %2000 = vmatprep.subr.bf16.mxu0 0
        %2001 = vmatpush1.bf16.msra.mxu0 0
        %2002 = vmatprep.mubr.bf16.mxu0 0
        %2003 = vmatmul.mubr.bf16.gmra.mrb[0].mxu0 %v1934
        %v2004 = vpop.f32.mrb[0].mxu0
        %v2005 = vadd.f32 0.0, %v2004
        %v2006 = vpop.f32.mrb[0].mxu0
        %v2007 = vpop.f32.mrb[0].mxu0
        %v2008 = vadd.f32 0.0, %v2007
        %v2009 = vpop.f32.mrb[0].mxu0
        %2010 = vmatprep.mubr.bf16.mxu0 0
        %2011 = vmatmul.mubr.bf16.gmra.mrb[0].mxu0 %v1936
        %v2012 = vpop.f32.mrb[0].mxu0
        %v2013 = vadd.f32 0.0, %v2012
        %v2014 = vpop.f32.mrb[0].mxu0
        %v2015 = vpop.f32.mrb[0].mxu0
        %v2016 = vadd.f32 0.0, %v2015
        %v2017 = vpop.f32.mrb[0].mxu0
        %2018 = vmatprep.mubr.bf16.mxu0 0
        %2019 = vmatmul.mubr.bf16.gmra.mrb[0].mxu0 %v1938
        %v2020 = vpop.f32.mrb[0].mxu0
        %v2021 = vadd.f32 0.0, %v2020
        %v2022 = vpop.f32.mrb[0].mxu0
        %v2023 = vpop.f32.mrb[0].mxu0
        %v2024 = vadd.f32 0.0, %v2023
        %v2025 = vpop.f32.mrb[0].mxu0
        %2026 = vmatprep.mubr.bf16.mxu0 0
        %2027 = vmatmul.mubr.bf16.gmra.mrb[0].mxu0 %v1940
        %v2028 = vpop.f32.mrb[0].mxu0
        %v2029 = vadd.f32 0.0, %v2028
        %v2030 = vpop.f32.mrb[0].mxu0
        %v2031 = vpop.f32.mrb[0].mxu0
        %v2032 = vadd.f32 0.0, %v2031
        %v2033 = vpop.f32.mrb[0].mxu0
        %2034 = vmatprep.mubr.bf16.mxu0 0
        %2035 = vmatmul.mubr.bf16.gmra.mrb[0].mxu0 %v1942
        %v2036 = vpop.f32.mrb[0].mxu0
        %v2037 = vadd.f32 0.0, %v2036
        %v2038 = vpop.f32.mrb[0].mxu0
        %v2039 = vpop.f32.mrb[0].mxu0
        %v2040 = vadd.f32 0.0, %v2039
        %v2041 = vpop.f32.mrb[0].mxu0
        %2042 = vmatprep.mubr.bf16.mxu0 0
        %2043 = vmatmul.mubr.bf16.gmra.mrb[0].mxu0 %v1944
        %v2044 = vpop.f32.mrb[0].mxu0
        %v2045 = vadd.f32 0.0, %v2044
        %v2046 = vpop.f32.mrb[0].mxu0
        %v2047 = vpop.f32.mrb[0].mxu0
        %v2048 = vadd.f32 0.0, %v2047
        %v2049 = vpop.f32.mrb[0].mxu0
        %2050 = vmatprep.mubr.bf16.mxu0 0
        %2051 = vmatmul.mubr.bf16.gmra.mrb[0].mxu0 %v1946
        %v2052 = vpop.f32.mrb[0].mxu0
        %v2053 = vadd.f32 0.0, %v2052
        %v2054 = vpop.f32.mrb[0].mxu0
        %v2055 = vpop.f32.mrb[0].mxu0
        %v2056 = vadd.f32 0.0, %v2055
        %v2057 = vpop.f32.mrb[0].mxu0
        %2058 = vmatprep.mubr.bf16.mxu0 0
        %2059 = vmatmul.mubr.bf16.gmra.mrb[0].mxu0 %v1948
        %v2060 = vpop.f32.mrb[0].mxu0
        %v2061 = vadd.f32 0.0, %v2060
        %v2062 = vpop.f32.mrb[0].mxu0
        %v2063 = vpop.f32.mrb[0].mxu0
        %v2064 = vadd.f32 0.0, %v2063
        %v2065 = vpop.f32.mrb[0].mxu0
        %2066 = vmatprep.mubr.bf16.mxu0 0
        %2067 = vmatmul.mubr.bf16.gmra.mrb[0].mxu0 %v1950
        %v2068 = vpop.f32.mrb[0].mxu0
        %v2069 = vadd.f32 0.0, %v2068
        %v2070 = vpop.f32.mrb[0].mxu0
        %v2071 = vpop.f32.mrb[0].mxu0
        %v2072 = vadd.f32 0.0, %v2071
        %v2073 = vpop.f32.mrb[0].mxu0
        %2074 = vmatprep.mubr.bf16.mxu0 0
        %2075 = vmatmul.mubr.bf16.gmra.mrb[0].mxu0 %v1952
        %v2076 = vpop.f32.mrb[0].mxu0
        %v2077 = vadd.f32 0.0, %v2076
        %v2078 = vpop.f32.mrb[0].mxu0
        %v2079 = vpop.f32.mrb[0].mxu0
        %v2080 = vadd.f32 0.0, %v2079
        %v2081 = vpop.f32.mrb[0].mxu0
        %2082 = vmatprep.mubr.bf16.mxu0 0
        %2083 = vmatmul.mubr.bf16.gmra.mrb[0].mxu0 %v1954
        %v2084 = vpop.f32.mrb[0].mxu0
        %v2085 = vadd.f32 0.0, %v2084
        %v2086 = vpop.f32.mrb[0].mxu0
        %v2087 = vpop.f32.mrb[0].mxu0
        %v2088 = vadd.f32 0.0, %v2087
        %v2089 = vpop.f32.mrb[0].mxu0
        %2090 = vmatprep.mubr.bf16.mxu0 0
        %2091 = vmatmul.mubr.bf16.gmra.mrb[0].mxu0 %v1956
        %v2092 = vpop.f32.mrb[0].mxu0
        %v2093 = vadd.f32 0.0, %v2092
        %v2094 = vpop.f32.mrb[0].mxu0
        %v2095 = vpop.f32.mrb[0].mxu0
        %v2096 = vadd.f32 0.0, %v2095
        %v2097 = vpop.f32.mrb[0].mxu0
        %2098 = vmatprep.mubr.bf16.mxu0 0
        %2099 = vmatmul.mubr.bf16.gmra.mrb[0].mxu0 %v1958
        %v2100 = vpop.f32.mrb[0].mxu0
        %v2101 = vadd.f32 0.0, %v2100
        %v2102 = vpop.f32.mrb[0].mxu0
        %v2103 = vpop.f32.mrb[0].mxu0
        %v2104 = vadd.f32 0.0, %v2103
        %v2105 = vpop.f32.mrb[0].mxu0
        %2106 = vmatprep.mubr.bf16.mxu0 0
        %2107 = vmatmul.mubr.bf16.gmra.mrb[0].mxu0 %v1960
        %v2108 = vpop.f32.mrb[0].mxu0
        %v2109 = vadd.f32 0.0, %v2108
        %v2110 = vpop.f32.mrb[0].mxu0
        %v2111 = vpop.f32.mrb[0].mxu0
        %v2112 = vadd.f32 0.0, %v2111
        %v2113 = vpop.f32.mrb[0].mxu0
        %2114 = vmatprep.mubr.bf16.mxu0 0
        %2115 = vmatmul.mubr.bf16.gmra.mrb[0].mxu0 %v1962
        %v2116 = vpop.f32.mrb[0].mxu0
        %v2117 = vadd.f32 0.0, %v2116
        %v2118 = vpop.f32.mrb[0].mxu0
        %v2119 = vpop.f32.mrb[0].mxu0
        %v2120 = vadd.f32 0.0, %v2119
        %v2121 = vpop.f32.mrb[0].mxu0
        %2122 = vmatprep.mubr.bf16.mxu0 0
        %2123 = vmatmul.mubr.bf16.gmra.mrb[0].mxu0 %v1964
        %v2124 = vpop.f32.mrb[0].mxu0
        %v2125 = vadd.f32 0.0, %v2124
        %v2126 = vpop.f32.mrb[0].mxu0
        %v2127 = vpop.f32.mrb[0].mxu0
        %v2128 = vadd.f32 0.0, %v2127
        %v2129 = vpop.f32.mrb[0].mxu0
        %2130 = vdwg.mxu0
        %v2131 = vlaneseq
        %v2132 = vshrl.u32 %v2131, 7
        %v2133 = vsub.s32 0, %v2132
        %v2134 = vrot.slane %v901, %v2133
        %v2135 = vmul.f32 %v2005, %v2134
        %v2136 = vmul.f32 %v2008, %v2134
        %v2137 = vmul.f32 %v2013, %v2134
        %v2138 = vmul.f32 %v2016, %v2134
        %v2139 = vmul.f32 %v2021, %v2134
        %v2140 = vmul.f32 %v2024, %v2134
        %v2141 = vmul.f32 %v2029, %v2134
        %v2142 = vmul.f32 %v2032, %v2134
        %v2143 = vmul.f32 %v2037, %v2134
        %v2144 = vmul.f32 %v2040, %v2134
        %v2145 = vmul.f32 %v2045, %v2134
        %v2146 = vmul.f32 %v2048, %v2134
        %v2147 = vmul.f32 %v2053, %v2134
        %v2148 = vmul.f32 %v2056, %v2134
        %v2149 = vmul.f32 %v2061, %v2134
        %v2150 = vmul.f32 %v2064, %v2134
        %v2151 = vmul.f32 %v2069, %v2134
        %v2152 = vmul.f32 %v2072, %v2134
        %v2153 = vmul.f32 %v2077, %v2134
        %v2154 = vmul.f32 %v2080, %v2134
        %v2155 = vmul.f32 %v2085, %v2134
        %v2156 = vmul.f32 %v2088, %v2134
        %v2157 = vmul.f32 %v2093, %v2134
        %v2158 = vmul.f32 %v2096, %v2134
        %v2159 = vmul.f32 %v2101, %v2134
        %v2160 = vmul.f32 %v2104, %v2134
        %v2161 = vmul.f32 %v2109, %v2134
        %v2162 = vmul.f32 %v2112, %v2134
        %v2163 = vmul.f32 %v2117, %v2134
        %v2164 = vmul.f32 %v2120, %v2134
        %v2165 = vmul.f32 %v2125, %v2134
        %v2166 = vmul.f32 %v2128, %v2134
        %v2167 = vlaneseq
        %v2168 = vshrl.u32 %v2167, 7
        %v2169 = vsub.s32 1, %v2168
        %v2170 = vrot.slane %v901, %v2169
        %v2171 = vadd.f32 %v2135, %v2170
        %v2172 = vadd.f32 %v2136, %v2170
        %v2173 = vadd.f32 %v2137, %v2170
        %v2174 = vadd.f32 %v2138, %v2170
        %v2175 = vadd.f32 %v2139, %v2170
        %v2176 = vadd.f32 %v2140, %v2170
        %v2177 = vadd.f32 %v2141, %v2170
        %v2178 = vadd.f32 %v2142, %v2170
        %v2179 = vadd.f32 %v2143, %v2170
        %v2180 = vadd.f32 %v2144, %v2170
        %v2181 = vadd.f32 %v2145, %v2170
        %v2182 = vadd.f32 %v2146, %v2170
        %v2183 = vadd.f32 %v2147, %v2170
        %v2184 = vadd.f32 %v2148, %v2170
        %v2185 = vadd.f32 %v2149, %v2170
        %v2186 = vadd.f32 %v2150, %v2170
        %v2187 = vadd.f32 %v2151, %v2170
        %v2188 = vadd.f32 %v2152, %v2170
        %v2189 = vadd.f32 %v2153, %v2170
        %v2190 = vadd.f32 %v2154, %v2170
        %v2191 = vadd.f32 %v2155, %v2170
        %v2192 = vadd.f32 %v2156, %v2170
        %v2193 = vadd.f32 %v2157, %v2170
        %v2194 = vadd.f32 %v2158, %v2170
        %v2195 = vadd.f32 %v2159, %v2170
        %v2196 = vadd.f32 %v2160, %v2170
        %v2197 = vadd.f32 %v2161, %v2170
        %v2198 = vadd.f32 %v2162, %v2170
        %v2199 = vadd.f32 %v2163, %v2170
        %v2200 = vadd.f32 %v2164, %v2170
        %v2201 = vadd.f32 %v2165, %v2170
        %v2202 = vadd.f32 %v2166, %v2170
        %v2203 = vmax.f32 %v2171, 0.0
        %v2204 = vmax.f32 %v2172, 0.0
        %v2205 = vmax.f32 %v2173, 0.0
        %v2206 = vmax.f32 %v2174, 0.0
        %v2207 = vmax.f32 %v2175, 0.0
        %v2208 = vmax.f32 %v2176, 0.0
        %v2209 = vmax.f32 %v2177, 0.0
        %v2210 = vmax.f32 %v2178, 0.0
        %v2211 = vmax.f32 %v2179, 0.0
        %v2212 = vmax.f32 %v2180, 0.0
        %v2213 = vmax.f32 %v2181, 0.0
        %v2214 = vmax.f32 %v2182, 0.0
        %v2215 = vmax.f32 %v2183, 0.0
        %v2216 = vmax.f32 %v2184, 0.0
        %v2217 = vmax.f32 %v2185, 0.0
        %v2218 = vmax.f32 %v2186, 0.0
        %v2219 = vmax.f32 %v2187, 0.0
        %v2220 = vmax.f32 %v2188, 0.0
        %v2221 = vmax.f32 %v2189, 0.0
        %v2222 = vmax.f32 %v2190, 0.0
        %v2223 = vmax.f32 %v2191, 0.0
        %v2224 = vmax.f32 %v2192, 0.0
        %v2225 = vmax.f32 %v2193, 0.0
        %v2226 = vmax.f32 %v2194, 0.0
        %v2227 = vmax.f32 %v2195, 0.0
        %v2228 = vmax.f32 %v2196, 0.0
        %v2229 = vmax.f32 %v2197, 0.0
        %v2230 = vmax.f32 %v2198, 0.0
        %v2231 = vmax.f32 %v2199, 0.0
        %v2232 = vmax.f32 %v2200, 0.0
        %v2233 = vmax.f32 %v2201, 0.0
        %v2234 = vmax.f32 %v2202, 0.0
        %v2235 = vpack.c.bf16 %v2204, %v2203
        %v2236 = vpack.c.bf16 %v2206, %v2205
        %v2237 = vpack.c.bf16 %v2208, %v2207
        %v2238 = vpack.c.bf16 %v2210, %v2209
        %v2239 = vpack.c.bf16 %v2212, %v2211
        %v2240 = vpack.c.bf16 %v2214, %v2213
        %v2241 = vpack.c.bf16 %v2216, %v2215
        %v2242 = vpack.c.bf16 %v2218, %v2217
        %v2243 = vpack.c.bf16 %v2220, %v2219
        %v2244 = vpack.c.bf16 %v2222, %v2221
        %v2245 = vpack.c.bf16 %v2224, %v2223
        %v2246 = vpack.c.bf16 %v2226, %v2225
        %v2247 = vpack.c.bf16 %v2228, %v2227
        %v2248 = vpack.c.bf16 %v2230, %v2229
        %v2249 = vpack.c.bf16 %v2232, %v2231
        %v2250 = vpack.c.bf16 %v2234, %v2233
        %v2267 = vunpack.c.l.b16 %v2235
        %v2268 = vunpack.c.h.b16 %v2235
        %v2269 = vunpack.c.l.b16 %v2236
        %v2270 = vunpack.c.h.b16 %v2236
        %v2271 = vunpack.c.l.b16 %v2237
        %v2272 = vunpack.c.h.b16 %v2237
        %v2273 = vunpack.c.l.b16 %v2238
        %v2274 = vunpack.c.h.b16 %v2238
        %v2275 = vunpack.c.l.b16 %v2239
        %v2276 = vunpack.c.h.b16 %v2239
        %v2277 = vunpack.c.l.b16 %v2240
        %v2278 = vunpack.c.h.b16 %v2240
        %v2279 = vunpack.c.l.b16 %v2241
        %v2280 = vunpack.c.h.b16 %v2241
        %v2281 = vunpack.c.l.b16 %v2242
        %v2282 = vunpack.c.h.b16 %v2242
        %v2283 = vunpack.c.l.b16 %v2243
        %v2284 = vunpack.c.h.b16 %v2243
        %v2285 = vunpack.c.l.b16 %v2244
        %v2286 = vunpack.c.h.b16 %v2244
        %v2287 = vunpack.c.l.b16 %v2245
        %v2288 = vunpack.c.h.b16 %v2245
        %v2289 = vunpack.c.l.b16 %v2246
        %v2290 = vunpack.c.h.b16 %v2246
        %v2291 = vunpack.c.l.b16 %v2247
        %v2292 = vunpack.c.h.b16 %v2247
        %v2293 = vunpack.c.l.b16 %v2248
        %v2294 = vunpack.c.h.b16 %v2248
        %v2295 = vunpack.c.l.b16 %v2249
        %v2296 = vunpack.c.h.b16 %v2249
        %v2297 = vunpack.c.l.b16 %v2250
        %v2298 = vunpack.c.h.b16 %v2250
        %v2299 = vpack.c.b16 %v2267, %v2267
        %v2300 = vpack.c.b16 %v2268, %v2268
        %v2301 = vpack.c.b16 %v2269, %v2269
        %v2302 = vpack.c.b16 %v2270, %v2270
        %v2303 = vpack.c.b16 %v2271, %v2271
        %v2304 = vpack.c.b16 %v2272, %v2272
        %v2305 = vpack.c.b16 %v2273, %v2273
        %v2306 = vpack.c.b16 %v2274, %v2274
        %v2307 = vpack.c.b16 %v2275, %v2275
        %v2308 = vpack.c.b16 %v2276, %v2276
        %v2309 = vpack.c.b16 %v2277, %v2277
        %v2310 = vpack.c.b16 %v2278, %v2278
        %v2311 = vpack.c.b16 %v2279, %v2279
        %v2312 = vpack.c.b16 %v2280, %v2280
        %v2313 = vpack.c.b16 %v2281, %v2281
        %v2314 = vpack.c.b16 %v2282, %v2282
        %v2315 = vpack.c.b16 %v2283, %v2283
        %v2316 = vpack.c.b16 %v2284, %v2284
        %v2317 = vpack.c.b16 %v2285, %v2285
        %v2318 = vpack.c.b16 %v2286, %v2286
        %v2319 = vpack.c.b16 %v2287, %v2287
        %v2320 = vpack.c.b16 %v2288, %v2288
        %v2321 = vpack.c.b16 %v2289, %v2289
        %v2322 = vpack.c.b16 %v2290, %v2290
        %v2323 = vpack.c.b16 %v2291, %v2291
        %v2324 = vpack.c.b16 %v2292, %v2292
        %v2325 = vpack.c.b16 %v2293, %v2293
        %v2326 = vpack.c.b16 %v2294, %v2294
        %v2327 = vpack.c.b16 %v2295, %v2295
        %v2328 = vpack.c.b16 %v2296, %v2296
        %v2329 = vpack.c.b16 %v2297, %v2297
        %v2330 = vpack.c.b16 %v2298, %v2298
        %vm2363 = vcmask 27648
        %2364 = vst.msk [vmem:[%s397] sm:$0xf] %vm2363, %v2299
        %2365 = vst.msk [vmem:[%s397 + $0x4] sm:$0xf] %vm2363, %v2300
        %2366 = vst.msk [vmem:[%s397 + $0x8] sm:$0xf] %vm2363, %v2301
        %2367 = vst.msk [vmem:[%s397 + $0xc] sm:$0xf] %vm2363, %v2302
        %2368 = vst.msk [vmem:[%s397 + $0x10] sm:$0xf] %vm2363, %v2303
        %2369 = vst.msk [vmem:[%s397 + $0x14] sm:$0xf] %vm2363, %v2304
        %2370 = vst.msk [vmem:[%s397 + $0x18] sm:$0xf] %vm2363, %v2305
        %2371 = vst.msk [vmem:[%s397 + $0x1c] sm:$0xf] %vm2363, %v2306
        %2372 = vst.msk [vmem:[%s397 + $0x20] sm:$0xf] %vm2363, %v2307
        %2373 = vst.msk [vmem:[%s397 + $0x24] sm:$0xf] %vm2363, %v2308
        %2374 = vst.msk [vmem:[%s397 + $0x28] sm:$0xf] %vm2363, %v2309
        %2375 = vst.msk [vmem:[%s397 + $0x2c] sm:$0xf] %vm2363, %v2310
        %2376 = vst.msk [vmem:[%s397 + $0x30] sm:$0xf] %vm2363, %v2311
        %2377 = vst.msk [vmem:[%s397 + $0x34] sm:$0xf] %vm2363, %v2312
        %2378 = vst.msk [vmem:[%s397 + $0x38] sm:$0xf] %vm2363, %v2313
        %2379 = vst.msk [vmem:[%s397 + $0x3c] sm:$0xf] %vm2363, %v2314
        %2380 = vst.msk [vmem:[%s397 + $0x40] sm:$0xf] %vm2363, %v2315
        %2381 = vst.msk [vmem:[%s397 + $0x44] sm:$0xf] %vm2363, %v2316
        %2382 = vst.msk [vmem:[%s397 + $0x48] sm:$0xf] %vm2363, %v2317
        %2383 = vst.msk [vmem:[%s397 + $0x4c] sm:$0xf] %vm2363, %v2318
        %2384 = vst.msk [vmem:[%s397 + $0x50] sm:$0xf] %vm2363, %v2319
        %2385 = vst.msk [vmem:[%s397 + $0x54] sm:$0xf] %vm2363, %v2320
        %2386 = vst.msk [vmem:[%s397 + $0x58] sm:$0xf] %vm2363, %v2321
        %2387 = vst.msk [vmem:[%s397 + $0x5c] sm:$0xf] %vm2363, %v2322
        %2388 = vst.msk [vmem:[%s397 + $0x60] sm:$0xf] %vm2363, %v2323
        %2389 = vst.msk [vmem:[%s397 + $0x64] sm:$0xf] %vm2363, %v2324
        %2390 = vst.msk [vmem:[%s397 + $0x68] sm:$0xf] %vm2363, %v2325
        %2391 = vst.msk [vmem:[%s397 + $0x6c] sm:$0xf] %vm2363, %v2326
        %2392 = vst.msk [vmem:[%s397 + $0x70] sm:$0xf] %vm2363, %v2327
        %2393 = vst.msk [vmem:[%s397 + $0x74] sm:$0xf] %vm2363, %v2328
        %2394 = vst.msk [vmem:[%s397 + $0x78] sm:$0xf] %vm2363, %v2329
        %2395 = vst.msk [vmem:[%s397 + $0x7c] sm:$0xf] %vm2363, %v2330
        %v2396 = vpack.c.bf16 %v865, %v864
        %v2397 = vpack.c.bf16 %v867, %v866
        %v2398 = vpack.c.bf16 %v869, %v868
        %v2399 = vpack.c.bf16 %v871, %v870
        %v2400 = vpack.c.bf16 %v873, %v872
        %v2401 = vpack.c.bf16 %v875, %v874
        %v2402 = vpack.c.bf16 %v877, %v876
        %v2403 = vpack.c.bf16 %v879, %v878
        %v2404 = vpack.c.bf16 %v881, %v880
        %v2405 = vpack.c.bf16 %v883, %v882
        %v2406 = vpack.c.bf16 %v885, %v884
        %v2407 = vpack.c.bf16 %v887, %v886
        %v2408 = vpack.c.bf16 %v889, %v888
        %v2409 = vpack.c.bf16 %v891, %v890
        %v2410 = vpack.c.bf16 %v893, %v892
        %v2411 = vpack.c.bf16 %v895, %v894
        %v2428 = vunpack.c.l.b16 %v2396
        %v2429 = vunpack.c.h.b16 %v2396
        %v2430 = vunpack.c.l.b16 %v2397
        %v2431 = vunpack.c.h.b16 %v2397
        %v2432 = vunpack.c.l.b16 %v2398
        %v2433 = vunpack.c.h.b16 %v2398
        %v2434 = vunpack.c.l.b16 %v2399
        %v2435 = vunpack.c.h.b16 %v2399
        %v2436 = vunpack.c.l.b16 %v2400
        %v2437 = vunpack.c.h.b16 %v2400
        %v2438 = vunpack.c.l.b16 %v2401
        %v2439 = vunpack.c.h.b16 %v2401
        %v2440 = vunpack.c.l.b16 %v2402
        %v2441 = vunpack.c.h.b16 %v2402
        %v2442 = vunpack.c.l.b16 %v2403
        %v2443 = vunpack.c.h.b16 %v2403
        %v2444 = vunpack.c.l.b16 %v2404
        %v2445 = vunpack.c.h.b16 %v2404
        %v2446 = vunpack.c.l.b16 %v2405
        %v2447 = vunpack.c.h.b16 %v2405
        %v2448 = vunpack.c.l.b16 %v2406
        %v2449 = vunpack.c.h.b16 %v2406
        %v2450 = vunpack.c.l.b16 %v2407
        %v2451 = vunpack.c.h.b16 %v2407
        %v2452 = vunpack.c.l.b16 %v2408
        %v2453 = vunpack.c.h.b16 %v2408
        %v2454 = vunpack.c.l.b16 %v2409
        %v2455 = vunpack.c.h.b16 %v2409
        %v2456 = vunpack.c.l.b16 %v2410
        %v2457 = vunpack.c.h.b16 %v2410
        %v2458 = vunpack.c.l.b16 %v2411
        %v2459 = vunpack.c.h.b16 %v2411
        %v2460 = vpack.c.b16 %v2428, %v2428
        %v2461 = vpack.c.b16 %v2429, %v2429
        %v2462 = vpack.c.b16 %v2430, %v2430
        %v2463 = vpack.c.b16 %v2431, %v2431
        %v2464 = vpack.c.b16 %v2432, %v2432
        %v2465 = vpack.c.b16 %v2433, %v2433
        %v2466 = vpack.c.b16 %v2434, %v2434
        %v2467 = vpack.c.b16 %v2435, %v2435
        %v2468 = vpack.c.b16 %v2436, %v2436
        %v2469 = vpack.c.b16 %v2437, %v2437
        %v2470 = vpack.c.b16 %v2438, %v2438
        %v2471 = vpack.c.b16 %v2439, %v2439
        %v2472 = vpack.c.b16 %v2440, %v2440
        %v2473 = vpack.c.b16 %v2441, %v2441
        %v2474 = vpack.c.b16 %v2442, %v2442
        %v2475 = vpack.c.b16 %v2443, %v2443
        %v2476 = vpack.c.b16 %v2444, %v2444
        %v2477 = vpack.c.b16 %v2445, %v2445
        %v2478 = vpack.c.b16 %v2446, %v2446
        %v2479 = vpack.c.b16 %v2447, %v2447
        %v2480 = vpack.c.b16 %v2448, %v2448
        %v2481 = vpack.c.b16 %v2449, %v2449
        %v2482 = vpack.c.b16 %v2450, %v2450
        %v2483 = vpack.c.b16 %v2451, %v2451
        %v2484 = vpack.c.b16 %v2452, %v2452
        %v2485 = vpack.c.b16 %v2453, %v2453
        %v2486 = vpack.c.b16 %v2454, %v2454
        %v2487 = vpack.c.b16 %v2455, %v2455
        %v2488 = vpack.c.b16 %v2456, %v2456
        %v2489 = vpack.c.b16 %v2457, %v2457
        %v2490 = vpack.c.b16 %v2458, %v2458
        %v2491 = vpack.c.b16 %v2459, %v2459
        %2492 = vrot.lane.b32.xlu0 %v2460, 124
        %v2493 = vpop.permute.xlu0 %2492
        %2494 = vrot.lane.b32.xlu0 %v2461, 124
        %v2495 = vpop.permute.xlu0 %2494
        %2496 = vrot.lane.b32.xlu0 %v2462, 124
        %v2497 = vpop.permute.xlu0 %2496
        %2498 = vrot.lane.b32.xlu0 %v2463, 124
        %v2499 = vpop.permute.xlu0 %2498
        %2500 = vrot.lane.b32.xlu0 %v2464, 124
        %v2501 = vpop.permute.xlu0 %2500
        %2502 = vrot.lane.b32.xlu0 %v2465, 124
        %v2503 = vpop.permute.xlu0 %2502
        %2504 = vrot.lane.b32.xlu0 %v2466, 124
        %v2505 = vpop.permute.xlu0 %2504
        %2506 = vrot.lane.b32.xlu0 %v2467, 124
        %v2507 = vpop.permute.xlu0 %2506
        %2508 = vrot.lane.b32.xlu0 %v2468, 124
        %v2509 = vpop.permute.xlu0 %2508
        %2510 = vrot.lane.b32.xlu0 %v2469, 124
        %v2511 = vpop.permute.xlu0 %2510
        %2512 = vrot.lane.b32.xlu0 %v2470, 124
        %v2513 = vpop.permute.xlu0 %2512
        %2514 = vrot.lane.b32.xlu0 %v2471, 124
        %v2515 = vpop.permute.xlu0 %2514
        %2516 = vrot.lane.b32.xlu0 %v2472, 124
        %v2517 = vpop.permute.xlu0 %2516
        %2518 = vrot.lane.b32.xlu0 %v2473, 124
        %v2519 = vpop.permute.xlu0 %2518
        %2520 = vrot.lane.b32.xlu0 %v2474, 124
        %v2521 = vpop.permute.xlu0 %2520
        %2522 = vrot.lane.b32.xlu0 %v2475, 124
        %v2523 = vpop.permute.xlu0 %2522
        %2524 = vrot.lane.b32.xlu0 %v2476, 124
        %v2525 = vpop.permute.xlu0 %2524
        %2526 = vrot.lane.b32.xlu0 %v2477, 124
        %v2527 = vpop.permute.xlu0 %2526
        %2528 = vrot.lane.b32.xlu0 %v2478, 124
        %v2529 = vpop.permute.xlu0 %2528
        %2530 = vrot.lane.b32.xlu0 %v2479, 124
        %v2531 = vpop.permute.xlu0 %2530
        %2532 = vrot.lane.b32.xlu0 %v2480, 124
        %v2533 = vpop.permute.xlu0 %2532
        %2534 = vrot.lane.b32.xlu0 %v2481, 124
        %v2535 = vpop.permute.xlu0 %2534
        %2536 = vrot.lane.b32.xlu0 %v2482, 124
        %v2537 = vpop.permute.xlu0 %2536
        %2538 = vrot.lane.b32.xlu0 %v2483, 124
        %v2539 = vpop.permute.xlu0 %2538
        %2540 = vrot.lane.b32.xlu0 %v2484, 124
        %v2541 = vpop.permute.xlu0 %2540
        %2542 = vrot.lane.b32.xlu0 %v2485, 124
        %v2543 = vpop.permute.xlu0 %2542
        %2544 = vrot.lane.b32.xlu0 %v2486, 124
        %v2545 = vpop.permute.xlu0 %2544
        %2546 = vrot.lane.b32.xlu0 %v2487, 124
        %v2547 = vpop.permute.xlu0 %2546
        %2548 = vrot.lane.b32.xlu0 %v2488, 124
        %v2549 = vpop.permute.xlu0 %2548
        %2550 = vrot.lane.b32.xlu0 %v2489, 124
        %v2551 = vpop.permute.xlu0 %2550
        %2552 = vrot.lane.b32.xlu0 %v2490, 124
        %v2553 = vpop.permute.xlu0 %2552
        %2554 = vrot.lane.b32.xlu0 %v2491, 124
        %v2555 = vpop.permute.xlu0 %2554
        %2588 = vst.msk [vmem:[%s402] sm:$0xf] %vm2363, %v2493
        %2589 = vst.msk [vmem:[%s402 + $0x4] sm:$0xf] %vm2363, %v2495
        %2590 = vst.msk [vmem:[%s402 + $0x8] sm:$0xf] %vm2363, %v2497
        %2591 = vst.msk [vmem:[%s402 + $0xc] sm:$0xf] %vm2363, %v2499
        %2592 = vst.msk [vmem:[%s402 + $0x10] sm:$0xf] %vm2363, %v2501
        %2593 = vst.msk [vmem:[%s402 + $0x14] sm:$0xf] %vm2363, %v2503
        %2594 = vst.msk [vmem:[%s402 + $0x18] sm:$0xf] %vm2363, %v2505
        %2595 = vst.msk [vmem:[%s402 + $0x1c] sm:$0xf] %vm2363, %v2507
        %2596 = vst.msk [vmem:[%s402 + $0x20] sm:$0xf] %vm2363, %v2509
        %2597 = vst.msk [vmem:[%s402 + $0x24] sm:$0xf] %vm2363, %v2511
        %2598 = vst.msk [vmem:[%s402 + $0x28] sm:$0xf] %vm2363, %v2513
        %2599 = vst.msk [vmem:[%s402 + $0x2c] sm:$0xf] %vm2363, %v2515
        %2600 = vst.msk [vmem:[%s402 + $0x30] sm:$0xf] %vm2363, %v2517
        %2601 = vst.msk [vmem:[%s402 + $0x34] sm:$0xf] %vm2363, %v2519
        %2602 = vst.msk [vmem:[%s402 + $0x38] sm:$0xf] %vm2363, %v2521
        %2603 = vst.msk [vmem:[%s402 + $0x3c] sm:$0xf] %vm2363, %v2523
        %2604 = vst.msk [vmem:[%s402 + $0x40] sm:$0xf] %vm2363, %v2525
        %2605 = vst.msk [vmem:[%s402 + $0x44] sm:$0xf] %vm2363, %v2527
        %2606 = vst.msk [vmem:[%s402 + $0x48] sm:$0xf] %vm2363, %v2529
        %2607 = vst.msk [vmem:[%s402 + $0x4c] sm:$0xf] %vm2363, %v2531
        %2608 = vst.msk [vmem:[%s402 + $0x50] sm:$0xf] %vm2363, %v2533
        %2609 = vst.msk [vmem:[%s402 + $0x54] sm:$0xf] %vm2363, %v2535
        %2610 = vst.msk [vmem:[%s402 + $0x58] sm:$0xf] %vm2363, %v2537
        %2611 = vst.msk [vmem:[%s402 + $0x5c] sm:$0xf] %vm2363, %v2539
        %2612 = vst.msk [vmem:[%s402 + $0x60] sm:$0xf] %vm2363, %v2541
        %2613 = vst.msk [vmem:[%s402 + $0x64] sm:$0xf] %vm2363, %v2543
        %2614 = vst.msk [vmem:[%s402 + $0x68] sm:$0xf] %vm2363, %v2545
        %2615 = vst.msk [vmem:[%s402 + $0x6c] sm:$0xf] %vm2363, %v2547
        %2616 = vst.msk [vmem:[%s402 + $0x70] sm:$0xf] %vm2363, %v2549
        %2617 = vst.msk [vmem:[%s402 + $0x74] sm:$0xf] %vm2363, %v2551
        %2618 = vst.msk [vmem:[%s402 + $0x78] sm:$0xf] %vm2363, %v2553
        %2619 = vst.msk [vmem:[%s402 + $0x7c] sm:$0xf] %vm2363, %v2555
        %v2620 = vadd.f32 %v864, %v866
        %v2621 = vadd.f32 %v865, %v867
        %v2622 = vadd.f32 %v872, %v874
        %v2623 = vadd.f32 %v873, %v875
        %v2624 = vadd.f32 %v880, %v882
        %v2625 = vadd.f32 %v881, %v883
        %v2626 = vadd.f32 %v888, %v890
        %v2627 = vadd.f32 %v889, %v891
        %v2628 = vadd.f32 %v2620, %v868
        %v2629 = vadd.f32 %v2621, %v869
        %v2630 = vadd.f32 %v2622, %v876
        %v2631 = vadd.f32 %v2623, %v877
        %v2632 = vadd.f32 %v2624, %v884
        %v2633 = vadd.f32 %v2625, %v885
        %v2634 = vadd.f32 %v2626, %v892
        %v2635 = vadd.f32 %v2627, %v893
        %v2636 = vadd.f32 %v2628, %v870
        %v2637 = vadd.f32 %v2629, %v871
        %v2638 = vadd.f32 %v2630, %v878
        %v2639 = vadd.f32 %v2631, %v879
        %v2640 = vadd.f32 %v2632, %v886
        %v2641 = vadd.f32 %v2633, %v887
        %v2642 = vadd.f32 %v2634, %v894
        %v2643 = vadd.f32 %v2635, %v895
        %v2652 = vcombine.high %v2636, %v2636
        %v2653 = vcombine.high %v2637, %v2637
        %v2654 = vcombine.high %v2638, %v2638
        %v2655 = vcombine.high %v2639, %v2639
        %v2656 = vcombine.high %v2640, %v2640
        %v2657 = vcombine.high %v2641, %v2641
        %v2658 = vcombine.high %v2642, %v2642
        %v2659 = vcombine.high %v2643, %v2643
        %v2668 = vrot.slane %v2636, 5
        %v2669 = vrot.slane %v2668, 4
        %v2670 = vrot.slane %v2652, 5
        %v2671 = vrot.slane %v2670, 4
        %v2672 = vrot.slane %v2637, 5
        %v2673 = vrot.slane %v2672, 4
        %v2674 = vrot.slane %v2653, 5
        %v2675 = vrot.slane %v2674, 4
        %v2676 = vrot.slane %v2638, 5
        %v2677 = vrot.slane %v2676, 4
        %v2678 = vrot.slane %v2654, 5
        %v2679 = vrot.slane %v2678, 4
        %v2680 = vrot.slane %v2639, 5
        %v2681 = vrot.slane %v2680, 4
        %v2682 = vrot.slane %v2655, 5
        %v2683 = vrot.slane %v2682, 4
        %v2684 = vrot.slane %v2640, 5
        %v2685 = vrot.slane %v2684, 4
        %v2686 = vrot.slane %v2656, 5
        %v2687 = vrot.slane %v2686, 4
        %v2688 = vrot.slane %v2641, 5
        %v2689 = vrot.slane %v2688, 4
        %v2690 = vrot.slane %v2657, 5
        %v2691 = vrot.slane %v2690, 4
        %v2692 = vrot.slane %v2642, 5
        %v2693 = vrot.slane %v2692, 4
        %v2694 = vrot.slane %v2658, 5
        %v2695 = vrot.slane %v2694, 4
        %v2696 = vrot.slane %v2643, 5
        %v2697 = vrot.slane %v2696, 4
        %v2698 = vrot.slane %v2659, 5
        %v2699 = vrot.slane %v2698, 4
        %v2716 = vadd.f32 %v2636, %v2669
        %v2717 = vadd.f32 %v2652, %v2671
        %v2718 = vadd.f32 %v2637, %v2673
        %v2719 = vadd.f32 %v2653, %v2675
        %v2720 = vadd.f32 %v2638, %v2677
        %v2721 = vadd.f32 %v2654, %v2679
        %v2722 = vadd.f32 %v2639, %v2681
        %v2723 = vadd.f32 %v2655, %v2683
        %v2724 = vadd.f32 %v2640, %v2685
        %v2725 = vadd.f32 %v2656, %v2687
        %v2726 = vadd.f32 %v2641, %v2689
        %v2727 = vadd.f32 %v2657, %v2691
        %v2728 = vadd.f32 %v2642, %v2693
        %v2729 = vadd.f32 %v2658, %v2695
        %v2730 = vadd.f32 %v2643, %v2697
        %v2731 = vadd.f32 %v2659, %v2699
        %v2732 = vrot.slane %v2636, 6
        %v2733 = vrot.slane %v2732, 4
        %v2734 = vrot.slane %v2652, 6
        %v2735 = vrot.slane %v2734, 4
        %v2736 = vrot.slane %v2637, 6
        %v2737 = vrot.slane %v2736, 4
        %v2738 = vrot.slane %v2653, 6
        %v2739 = vrot.slane %v2738, 4
        %v2740 = vrot.slane %v2638, 6
        %v2741 = vrot.slane %v2740, 4
        %v2742 = vrot.slane %v2654, 6
        %v2743 = vrot.slane %v2742, 4
        %v2744 = vrot.slane %v2639, 6
        %v2745 = vrot.slane %v2744, 4
        %v2746 = vrot.slane %v2655, 6
        %v2747 = vrot.slane %v2746, 4
        %v2748 = vrot.slane %v2640, 6
        %v2749 = vrot.slane %v2748, 4
        %v2750 = vrot.slane %v2656, 6
        %v2751 = vrot.slane %v2750, 4
        %v2752 = vrot.slane %v2641, 6
        %v2753 = vrot.slane %v2752, 4
        %v2754 = vrot.slane %v2657, 6
        %v2755 = vrot.slane %v2754, 4
        %v2756 = vrot.slane %v2642, 6
        %v2757 = vrot.slane %v2756, 4
        %v2758 = vrot.slane %v2658, 6
        %v2759 = vrot.slane %v2758, 4
        %v2760 = vrot.slane %v2643, 6
        %v2761 = vrot.slane %v2760, 4
        %v2762 = vrot.slane %v2659, 6
        %v2763 = vrot.slane %v2762, 4
        %v2780 = vadd.f32 %v2716, %v2733
        %v2781 = vadd.f32 %v2717, %v2735
        %v2782 = vadd.f32 %v2718, %v2737
        %v2783 = vadd.f32 %v2719, %v2739
        %v2784 = vadd.f32 %v2720, %v2741
        %v2785 = vadd.f32 %v2721, %v2743
        %v2786 = vadd.f32 %v2722, %v2745
        %v2787 = vadd.f32 %v2723, %v2747
        %v2788 = vadd.f32 %v2724, %v2749
        %v2789 = vadd.f32 %v2725, %v2751
        %v2790 = vadd.f32 %v2726, %v2753
        %v2791 = vadd.f32 %v2727, %v2755
        %v2792 = vadd.f32 %v2728, %v2757
        %v2793 = vadd.f32 %v2729, %v2759
        %v2794 = vadd.f32 %v2730, %v2761
        %v2795 = vadd.f32 %v2731, %v2763
        %v2796 = vrot.slane %v2636, 7
        %v2797 = vrot.slane %v2796, 4
        %v2798 = vrot.slane %v2652, 7
        %v2799 = vrot.slane %v2798, 4
        %v2800 = vrot.slane %v2637, 7
        %v2801 = vrot.slane %v2800, 4
        %v2802 = vrot.slane %v2653, 7
        %v2803 = vrot.slane %v2802, 4
        %v2804 = vrot.slane %v2638, 7
        %v2805 = vrot.slane %v2804, 4
        %v2806 = vrot.slane %v2654, 7
        %v2807 = vrot.slane %v2806, 4
        %v2808 = vrot.slane %v2639, 7
        %v2809 = vrot.slane %v2808, 4
        %v2810 = vrot.slane %v2655, 7
        %v2811 = vrot.slane %v2810, 4
        %v2812 = vrot.slane %v2640, 7
        %v2813 = vrot.slane %v2812, 4
        %v2814 = vrot.slane %v2656, 7
        %v2815 = vrot.slane %v2814, 4
        %v2816 = vrot.slane %v2641, 7
        %v2817 = vrot.slane %v2816, 4
        %v2818 = vrot.slane %v2657, 7
        %v2819 = vrot.slane %v2818, 4
        %v2820 = vrot.slane %v2642, 7
        %v2821 = vrot.slane %v2820, 4
        %v2822 = vrot.slane %v2658, 7
        %v2823 = vrot.slane %v2822, 4
        %v2824 = vrot.slane %v2643, 7
        %v2825 = vrot.slane %v2824, 4
        %v2826 = vrot.slane %v2659, 7
        %v2827 = vrot.slane %v2826, 4
        %v2844 = vadd.f32 %v2780, %v2797
        %v2845 = vadd.f32 %v2781, %v2799
        %v2846 = vadd.f32 %v2782, %v2801
        %v2847 = vadd.f32 %v2783, %v2803
        %v2848 = vadd.f32 %v2784, %v2805
        %v2849 = vadd.f32 %v2785, %v2807
        %v2850 = vadd.f32 %v2786, %v2809
        %v2851 = vadd.f32 %v2787, %v2811
        %v2852 = vadd.f32 %v2788, %v2813
        %v2853 = vadd.f32 %v2789, %v2815
        %v2854 = vadd.f32 %v2790, %v2817
        %v2855 = vadd.f32 %v2791, %v2819
        %v2856 = vadd.f32 %v2792, %v2821
        %v2857 = vadd.f32 %v2793, %v2823
        %v2858 = vadd.f32 %v2794, %v2825
        %v2859 = vadd.f32 %v2795, %v2827
        %v2860 = vmul.f32 %v2844, 0.0625
        %v2861 = vmul.f32 %v2845, 0.0625
        %v2862 = vmul.f32 %v2846, 0.0625
        %v2863 = vmul.f32 %v2847, 0.0625
        %v2864 = vmul.f32 %v2848, 0.0625
        %v2865 = vmul.f32 %v2849, 0.0625
        %v2866 = vmul.f32 %v2850, 0.0625
        %v2867 = vmul.f32 %v2851, 0.0625
        %v2868 = vmul.f32 %v2852, 0.0625
        %v2869 = vmul.f32 %v2853, 0.0625
        %v2870 = vmul.f32 %v2854, 0.0625
        %v2871 = vmul.f32 %v2855, 0.0625
        %v2872 = vmul.f32 %v2856, 0.0625
        %v2873 = vmul.f32 %v2857, 0.0625
        %v2874 = vmul.f32 %v2858, 0.0625
        %v2875 = vmul.f32 %v2859, 0.0625
        %v2876 = vld [vmem:[%s6] sm:$0xf]
        %v2877 = vld [vmem:[%s6 + $0x4] sm:$0xf]
        %v2878 = vld [vmem:[%s6 + $0x8] sm:$0xf]
        %v2879 = vld [vmem:[%s6 + $0xc] sm:$0xf]
        %v2880 = vld [vmem:[%s6 + $0x10] sm:$0x3]
        %v2881 = vld [vmem:[%s7] sm:$0x3]
        %v2882 = vpack.c.bf16 %v2860, %v2860
        %v2883 = vpack.c.bf16 %v2861, %v2861
        %v2884 = vpack.c.bf16 %v2862, %v2862
        %v2885 = vpack.c.bf16 %v2863, %v2863
        %v2886 = vpack.c.bf16 %v2864, %v2864
        %v2887 = vpack.c.bf16 %v2865, %v2865
        %v2888 = vpack.c.bf16 %v2866, %v2866
        %v2889 = vpack.c.bf16 %v2867, %v2867
        %v2890 = vpack.c.bf16 %v2868, %v2868
        %v2891 = vpack.c.bf16 %v2869, %v2869
        %v2892 = vpack.c.bf16 %v2870, %v2870
        %v2893 = vpack.c.bf16 %v2871, %v2871
        %v2894 = vpack.c.bf16 %v2872, %v2872
        %v2895 = vpack.c.bf16 %v2873, %v2873
        %v2896 = vpack.c.bf16 %v2874, %v2874
        %v2897 = vpack.c.bf16 %v2875, %v2875
        %v2914 = vunpack.c.l.b16 %v2882
        %v2915 = vunpack.c.l.b16 %v2883
        %v2916 = vunpack.c.l.b16 %v2884
        %v2917 = vunpack.c.l.b16 %v2885
        %v2918 = vunpack.c.l.b16 %v2886
        %v2919 = vunpack.c.l.b16 %v2887
        %v2920 = vunpack.c.l.b16 %v2888
        %v2921 = vunpack.c.l.b16 %v2889
        %v2922 = vunpack.c.l.b16 %v2890
        %v2923 = vunpack.c.l.b16 %v2891
        %v2924 = vunpack.c.l.b16 %v2892
        %v2925 = vunpack.c.l.b16 %v2893
        %v2926 = vunpack.c.l.b16 %v2894
        %v2927 = vunpack.c.l.b16 %v2895
        %v2928 = vunpack.c.l.b16 %v2896
        %v2929 = vunpack.c.l.b16 %v2897
        %v2930 = vrot.slane %v2915, 7
        %vm2931 = vcmask 1041409
        %v2932 = vsel %vm2931, %v2930, %v2914
        %v2933 = vrot.slane %v2916, 6
        %vm2934 = vcmask 1042434
        %v2935 = vsel %vm2934, %v2933, %v2932
        %v2936 = vrot.slane %v2917, 5
        %vm2937 = vcmask 1043459
        %v2938 = vsel %vm2937, %v2936, %v2935
        %v2939 = vrot.slane %v2919, 7
        %v2940 = vsel %vm2931, %v2939, %v2918
        %v2941 = vrot.slane %v2920, 6
        %v2942 = vsel %vm2934, %v2941, %v2940
        %v2943 = vrot.slane %v2921, 5
        %v2944 = vsel %vm2937, %v2943, %v2942
        %v2945 = vrot.slane %v2923, 7
        %v2946 = vsel %vm2931, %v2945, %v2922
        %v2947 = vrot.slane %v2924, 6
        %v2948 = vsel %vm2934, %v2947, %v2946
        %v2949 = vrot.slane %v2925, 5
        %v2950 = vsel %vm2937, %v2949, %v2948
        %v2951 = vrot.slane %v2927, 7
        %v2952 = vsel %vm2931, %v2951, %v2926
        %v2953 = vrot.slane %v2928, 6
        %v2954 = vsel %vm2934, %v2953, %v2952
        %v2955 = vrot.slane %v2929, 5
        %v2956 = vsel %vm2937, %v2955, %v2954
        %v2957 = vpack.c.b16 %v2938, %v2938
        %v2958 = vpack.c.b16 %v2944, %v2944
        %v2959 = vpack.c.b16 %v2950, %v2950
        %v2960 = vpack.c.b16 %v2956, %v2956
        %2961 = vrot.lane.b32.xlu0 %v2957, 124
        %v2962 = vpop.permute.xlu0 %2961
        %2963 = vrot.lane.b32.xlu0 %v2958, 124
        %v2964 = vpop.permute.xlu0 %2963
        %2965 = vrot.lane.b32.xlu0 %v2959, 124
        %v2966 = vpop.permute.xlu0 %2965
        %2967 = vrot.lane.b32.xlu0 %v2960, 124
        %v2968 = vpop.permute.xlu0 %2967
        %v2970 = vshrl.u32 %v2962, 16
        %v2972 = vrot.slane %v2970, 7
        %v2973 = vshll.u32 %v2962, 16
        %v2975 = vor.u32 %v2972, %v2973
        %v2977 = vshrl.u32 %v2964, 16
        %v2979 = vrot.slane %v2977, 7
        %v2980 = vshll.u32 %v2964, 16
        %v2982 = vor.u32 %v2979, %v2980
        %v2984 = vshrl.u32 %v2966, 16
        %v2986 = vrot.slane %v2984, 7
        %v2987 = vshll.u32 %v2966, 16
        %v2989 = vor.u32 %v2986, %v2987
        %v2991 = vshrl.u32 %v2968, 16
        %v2993 = vrot.slane %v2991, 7
        %v2994 = vshll.u32 %v2968, 16
        %v2996 = vor.u32 %v2993, %v2994
        %v3001 = vsel %vm1073, 0, %v2975
        %v3002 = vsel %vm1073, 0, %v2982
        %v3003 = vsel %vm1073, 0, %v2989
        %v3004 = vsel %vm1073, 0, %v2996
        %vm3005 = vcmask 1042432
        %vm3006 = vsmask.f32 2304
        %vm3007 = vmand %vm3005, %vm3006
        %v3008 = vsel %vm3007, %v1074, 0
        %v3009 = vsel %vm3007, %v3001, 0
        %v3010 = vsel %vm3007, %v3002, 0
        %v3011 = vsel %vm3007, %v3003, 0
        %v3012 = vsel %vm3007, %v3004, 0
        %v3014 = vshrl.u32 %v3008, 16
        %v3016 = vshll.u32 %v3008, 16
        %v3018 = vrot.slane %v3016, 1
        %v3019 = vor.u32 %v3014, %v3018
        %v3021 = vshrl.u32 %v3009, 16
        %v3023 = vshll.u32 %v3009, 16
        %v3025 = vrot.slane %v3023, 1
        %v3026 = vor.u32 %v3021, %v3025
        %v3028 = vshrl.u32 %v3010, 16
        %v3030 = vshll.u32 %v3010, 16
        %v3032 = vrot.slane %v3030, 1
        %v3033 = vor.u32 %v3028, %v3032
        %v3035 = vshrl.u32 %v3011, 16
        %v3037 = vshll.u32 %v3011, 16
        %v3039 = vrot.slane %v3037, 1
        %v3040 = vor.u32 %v3035, %v3039
        %3041 = vrot.lane.b32.xlu0 %v3019, 4
        %v3042 = vpop.permute.xlu0 %3041
        %3043 = vrot.lane.b32.xlu0 %v3026, 4
        %v3044 = vpop.permute.xlu0 %3043
        %3045 = vrot.lane.b32.xlu0 %v3033, 4
        %v3046 = vpop.permute.xlu0 %3045
        %3047 = vrot.lane.b32.xlu0 %v3040, 4
        %v3048 = vpop.permute.xlu0 %3047
        %v3053 = vrot.slane %v3008, 1
        %v3054 = vrot.slane %v3009, 1
        %v3055 = vrot.slane %v3010, 1
        %v3056 = vrot.slane %v3011, 1
        %3057 = vrot.lane.b32.xlu0 %v3053, 8
        %v3058 = vpop.permute.xlu0 %3057
        %3059 = vrot.lane.b32.xlu0 %v3054, 8
        %v3060 = vpop.permute.xlu0 %3059
        %3061 = vrot.lane.b32.xlu0 %v3055, 8
        %v3062 = vpop.permute.xlu0 %3061
        %3063 = vrot.lane.b32.xlu0 %v3056, 8
        %v3064 = vpop.permute.xlu0 %3063
        %3066 = vrot.lane.b32.xlu0 %v3009, 12
        %v3067 = vpop.permute.xlu0 %3066
        %3068 = vrot.lane.b32.xlu0 %v3010, 12
        %v3069 = vpop.permute.xlu0 %3068
        %3070 = vrot.lane.b32.xlu0 %v3011, 12
        %v3071 = vpop.permute.xlu0 %3070
        %3072 = vrot.lane.b32.xlu0 %v3012, 12
        %v3073 = vpop.permute.xlu0 %3072
        %v3075 = vshrl.u32 %v3012, 16
        %v3077 = vshll.u32 %v3012, 16
        %v3079 = vrot.slane %v3077, 1
        %v3080 = vor.u32 %v3075, %v3079
        %3081 = vrot.lane.b32.xlu0 %v3026, 16
        %v3082 = vpop.permute.xlu0 %3081
        %3083 = vrot.lane.b32.xlu0 %v3033, 16
        %v3084 = vpop.permute.xlu0 %3083
        %3085 = vrot.lane.b32.xlu0 %v3040, 16
        %v3086 = vpop.permute.xlu0 %3085
        %3087 = vrot.lane.b32.xlu0 %v3080, 16
        %v3088 = vpop.permute.xlu0 %3087
        %v3089 = vrot.slane %v3012, 1
        %3090 = vrot.lane.b32.xlu0 %v3054, 20
        %v3091 = vpop.permute.xlu0 %3090
        %3092 = vrot.lane.b32.xlu0 %v3055, 20
        %v3093 = vpop.permute.xlu0 %3092
        %3094 = vrot.lane.b32.xlu0 %v3056, 20
        %v3095 = vpop.permute.xlu0 %3094
        %3096 = vrot.lane.b32.xlu0 %v3089, 20
        %v3097 = vpop.permute.xlu0 %3096
        %3098 = vrot.lane.b32.xlu0 %v3010, 24
        %v3099 = vpop.permute.xlu0 %3098
        %3100 = vrot.lane.b32.xlu0 %v3011, 24
        %v3101 = vpop.permute.xlu0 %3100
        %3102 = vrot.lane.b32.xlu0 %v3012, 24
        %v3103 = vpop.permute.xlu0 %3102
        %3104 = vrot.lane.b32.xlu0 %v3008, 24
        %v3105 = vpop.permute.xlu0 %3104
        %3106 = vrot.lane.b32.xlu0 %v3033, 28
        %v3107 = vpop.permute.xlu0 %3106
        %3108 = vrot.lane.b32.xlu0 %v3040, 28
        %v3109 = vpop.permute.xlu0 %3108
        %3110 = vrot.lane.b32.xlu0 %v3080, 28
        %v3111 = vpop.permute.xlu0 %3110
        %3112 = vrot.lane.b32.xlu0 %v3019, 28
        %v3113 = vpop.permute.xlu0 %3112
        %3114 = vrot.lane.b32.xlu0 %v3055, 32
        %v3115 = vpop.permute.xlu0 %3114
        %3116 = vrot.lane.b32.xlu0 %v3056, 32
        %v3117 = vpop.permute.xlu0 %3116
        %3118 = vrot.lane.b32.xlu0 %v3089, 32
        %v3119 = vpop.permute.xlu0 %3118
        %3120 = vrot.lane.b32.xlu0 %v3053, 32
        %v3121 = vpop.permute.xlu0 %3120
        %v3123 = vsel %vm1655, %v3008, %v3042
        %v3125 = vsel %vm1655, %v3009, %v3044
        %v3127 = vsel %vm1655, %v3010, %v3046
        %v3129 = vsel %vm1655, %v3011, %v3048
        %v3131 = vsel %vm1688, %v3123, %v3058
        %v3133 = vsel %vm1688, %v3125, %v3060
        %v3135 = vsel %vm1688, %v3127, %v3062
        %v3137 = vsel %vm1688, %v3129, %v3064
        %v3139 = vsel %vm1721, %v3131, %v3067
        %v3141 = vsel %vm1721, %v3133, %v3069
        %v3143 = vsel %vm1721, %v3135, %v3071
        %v3145 = vsel %vm1721, %v3137, %v3073
        %v3147 = vsel %vm1754, %v3139, %v3082
        %v3149 = vsel %vm1754, %v3141, %v3084
        %v3151 = vsel %vm1754, %v3143, %v3086
        %v3153 = vsel %vm1754, %v3145, %v3088
        %v3155 = vsel %vm1787, %v3147, %v3091
        %v3157 = vsel %vm1787, %v3149, %v3093
        %v3159 = vsel %vm1787, %v3151, %v3095
        %v3161 = vsel %vm1787, %v3153, %v3097
        %v3163 = vsel %vm1820, %v3155, %v3099
        %v3165 = vsel %vm1820, %v3157, %v3101
        %v3167 = vsel %vm1820, %v3159, %v3103
        %v3169 = vsel %vm1820, %v3161, %v3105
        %v3171 = vsel %vm1853, %v3163, %v3107
        %v3173 = vsel %vm1853, %v3165, %v3109
        %v3175 = vsel %vm1853, %v3167, %v3111
        %v3177 = vsel %vm1853, %v3169, %v3113
        %v3179 = vsel %vm468, %v3171, %v3115
        %v3181 = vsel %vm468, %v3173, %v3117
        %v3183 = vsel %vm468, %v3175, %v3119
        %v3185 = vsel %vm468, %v3177, %v3121
        %v3190 = vcombine.low %v3179, %v3181
        %v3191 = vcombine.low %v3183, %v3185
        %v3193 = vunpack.c.l.s4 1983009808
        %v3194 = vunpack.c.0.s8 %v3193
        %v3195 = vlaneseq
        %v3196 = vshrl.u32 %v3195, 7
        %v3197 = vsub.s32 %v3194, %v3196
        %v3198 = vrot.slane %v3190, %v3197
        %v3200 = vunpack.c.l.s4 1983009808
        %v3201 = vunpack.c.0.s8 %v3200
        %v3202 = vlaneseq
        %v3203 = vshrl.u32 %v3202, 7
        %v3204 = vsub.s32 %v3201, %v3203
        %v3205 = vrot.slane %v3191, %v3204
        %v3206 = vcombine.low %v3198, %v3205
        %v3212 = vunpack.c.l.b16 %v2876
        %v3213 = vunpack.c.l.b16 %v2877
        %v3214 = vunpack.c.l.b16 %v2878
        %v3215 = vunpack.c.l.b16 %v2879
        %v3216 = vunpack.c.l.b16 %v2880
        %v3217 = vpack.c.b16 %v3213, %v3212
        %v3218 = vpack.c.b16 %v3215, %v3214
        %v3219 = vpack.c.b16 %v3216, %v3216
        %v3223 = vsel %vm1933, %v3206, 0
        %v3226 = vsel %vm1966, %v3219, 0
        %3228 = vmatprep.subr.bf16.mxu0 0
        %3229 = vmatpush1.bf16.msra.mxu0 %v3217
        %3230 = vmatprep.subr.bf16.mxu0 0
        %3231 = vmatpush1.bf16.msra.mxu0 %v3218
        %3232 = vmatprep.subr.bf16.mxu0 0
        %3233 = vmatpush1.bf16.msra.mxu0 %v3226
        %3234 = vmatprep.subr.bf16.mxu0 0
        %3235 = vmatpush1.bf16.msra.mxu0 0
        %3236 = vmatprep.subr.bf16.mxu0 0
        %3237 = vmatpush1.bf16.msra.mxu0 0
        %3238 = vmatprep.subr.bf16.mxu0 0
        %3239 = vmatpush1.bf16.msra.mxu0 0
        %3240 = vmatprep.subr.bf16.mxu0 0
        %3241 = vmatpush1.bf16.msra.mxu0 0
        %3242 = vmatprep.subr.bf16.mxu0 0
        %3243 = vmatpush1.bf16.msra.mxu0 0
        %3244 = vmatprep.subr.bf16.mxu0 0
        %3245 = vmatpush1.bf16.msra.mxu0 0
        %3246 = vmatprep.subr.bf16.mxu0 0
        %3247 = vmatpush1.bf16.msra.mxu0 0
        %3248 = vmatprep.subr.bf16.mxu0 0
        %3249 = vmatpush1.bf16.msra.mxu0 0
        %3250 = vmatprep.subr.bf16.mxu0 0
        %3251 = vmatpush1.bf16.msra.mxu0 0
        %3252 = vmatprep.subr.bf16.mxu0 0
        %3253 = vmatpush1.bf16.msra.mxu0 0
        %3254 = vmatprep.subr.bf16.mxu0 0
        %3255 = vmatpush1.bf16.msra.mxu0 0
        %3256 = vmatprep.subr.bf16.mxu0 0
        %3257 = vmatpush1.bf16.msra.mxu0 0
        %3258 = vmatprep.subr.bf16.mxu0 0
        %3259 = vmatpush1.bf16.msra.mxu0 0
        %3260 = vmatprep.mubr.bf16.mxu0 0
        %3261 = vmatmul.mubr.bf16.gmra.mrb[0].mxu0 %v3223
        %v3262 = vpop.f32.mrb[0].mxu0
        %v3263 = vadd.f32 0.0, %v3262
        %v3264 = vpop.f32.mrb[0].mxu0
        %v3265 = vpop.f32.mrb[0].mxu0
        %v3266 = vadd.f32 0.0, %v3265
        %v3267 = vpop.f32.mrb[0].mxu0
        %3268 = vdwg.mxu0
        %v3269 = vlaneseq
        %v3270 = vshrl.u32 %v3269, 7
        %v3271 = vsub.s32 0, %v3270
        %v3272 = vrot.slane %v2881, %v3271
        %v3273 = vmul.f32 %v3263, %v3272
        %v3274 = vmul.f32 %v3266, %v3272
        %v3275 = vlaneseq
        %v3276 = vshrl.u32 %v3275, 7
        %v3277 = vsub.s32 1, %v3276
        %v3278 = vrot.slane %v2881, %v3277
        %v3279 = vadd.f32 %v3273, %v3278
        %v3280 = vadd.f32 %v3274, %v3278
        %v3283 = vcombine.high %v3279, %v3279
        %v3284 = vcombine.high %v3280, %v3280
        %v3287 = vpack.c.bf16 %v3279, %v3279
        %v3288 = vpack.c.bf16 %v3283, %v3283
        %v3289 = vpack.c.bf16 %v3280, %v3280
        %v3290 = vpack.c.bf16 %v3284, %v3284
        %vm3291 = vcmask 25600
        %3292 = vst.msk [vmem:[%s392] sm:$0x3] %vm3291, %v3287
        %3293 = vst.msk [vmem:[%s392 + $0x2] sm:$0x3] %vm3291, %v3288
        %3294 = vst.msk [vmem:[%s392 + $0x4] sm:$0x3] %vm3291, %v3289
        %3295 = vst.msk [vmem:[%s392 + $0x6] sm:$0x3] %vm3291, %v3290
        %p3296 = scmp.lt.s32.totalorder %s28, 1
        %s3297 = scalar_select %p3296, %s28, 1
        %s3298 = smul.addr %s3297, 32
        %s3299 = smul.addr %s3298, 4
        %s3300 = scalar_lea.vmem %s8, %s3299
        %p3301 = scmp.lt.s32.totalorder %s28, 1
        %s3302 = scalar_select %p3301, %s28, 1
        %s3303 = smul.addr %s3302, 32
        %s3304 = smul.addr %s3303, 4
        %s3305 = scalar_lea.vmem %s9, %s3304
        %s3306 = sand.u32 %s261, 1
        %s3307 = scalar_lea.sflag [#allocation4], %s3306
        %s3308 = sand.u32 %s261, 1
        %s3309 = smul.addr %s3308, 8
        %s3310 = scalar_lea.vmem [#allocation5], %s3309
        // Predicated region
        $region57: #{tpu_custom_call.1} parent=51 // pred_check
          %p3311 = pneg %p219
        $region58: #{tpu_custom_call.1} parent=51 // pred_check_branch
          %3313 = sbr.rel (%p3311) target = $region60
        $region59: #{tpu_custom_call.1} parent=51 // pred_region
          _
        $region60: #{tpu_custom_call.1} parent=51 // pred_fallthru
          _
        // Predicated region
        $region61: #{tpu_custom_call.1} parent=51 // pred_check
          %p3314 = pneg %p245
        $region62: #{tpu_custom_call.1} parent=51 // pred_check_branch
          %3316 = sbr.rel (%p3314) target = $region64
        $region63: #{tpu_custom_call.1} parent=51 // pred_region
          _
        $region64: #{tpu_custom_call.1} parent=51 // pred_fallthru
          _
        // Predicated region
        $region65: #{tpu_custom_call.1} parent=51 // pred_check
          %p3317 = pneg %p271
        $region66: #{tpu_custom_call.1} parent=51 // pred_check_branch
          %3319 = sbr.rel (%p3317) target = $region68
        $region67: #{tpu_custom_call.1} parent=51 // pred_region
          %s3321 = ssub.s32 128, 128
          %3322 = vsyncadd %s3307, %s3321
          %s3323 = smul.addr %s28, 4
          %s3324 = smul.addr %s3323, 32
          %s3325 = scalar_lea.hbm %s10, %s3324
          %s3326 = sshll.u32 %s3310, 4
          %s3327 = int_to_ptr.vmem [resolvable:$true] %s3326
          %3332 = dma.vmem_to_hbm [thread:$0]  %s3327, 128, %s3325, %s3307, 32, 32, 2
        $region68: #{tpu_custom_call.1} parent=51 // pred_fallthru
          _
      $region52: #{tpu_custom_call.1} parent=5 // pred_fallthru
        _
      %p3333 = scmp.le.s32.totalorder 2, %s23
      // Predicated region
      $region69: #{tpu_custom_call.1} parent=5 // pred_check
        %p3334 = pneg %p3333
      $region70: #{tpu_custom_call.1} parent=5 // pred_check_branch
        %3336 = sbr.rel (%p3334) target = $region72
      $region71: #{tpu_custom_call.1} parent=5 // pred_region
        %s3337 = ssub.s32 %s23, 2
        // Predicated region
        $region73: #{tpu_custom_call.1} parent=71 // pred_check
          %p3338 = pneg %p225
        $region74: #{tpu_custom_call.1} parent=71 // pred_check_branch
          %3340 = sbr.rel (%p3338) target = $region76
        $region75: #{tpu_custom_call.1} parent=71 // pred_region
          %p3341 = scmp.lt.s32.totalorder %s29, 1
          %s3342 = scalar_select %p3341, %s29, 1
          %s3343 = smul.addr %s3342, 32
          %s3344 = smul.addr %s3343, 4
          %s3345 = scalar_lea.vmem %s8, %s3344
        $region76: #{tpu_custom_call.1} parent=71 // pred_fallthru
          _
        // Predicated region
        $region77: #{tpu_custom_call.1} parent=71 // pred_check
          %p3346 = pneg %p251
        $region78: #{tpu_custom_call.1} parent=71 // pred_check_branch
          %3348 = sbr.rel (%p3346) target = $region80
        $region79: #{tpu_custom_call.1} parent=71 // pred_region
          %p3349 = scmp.lt.s32.totalorder %s29, 1
          %s3350 = scalar_select %p3349, %s29, 1
          %s3351 = smul.addr %s3350, 32
          %s3352 = smul.addr %s3351, 4
          %s3353 = scalar_lea.vmem %s9, %s3352
        $region80: #{tpu_custom_call.1} parent=71 // pred_fallthru
          _
        // Predicated region
        $region81: #{tpu_custom_call.1} parent=71 // pred_check
          %p3354 = pneg %p277
        $region82: #{tpu_custom_call.1} parent=71 // pred_check_branch
          %3356 = sbr.rel (%p3354) target = $region84
        $region83: #{tpu_custom_call.1} parent=71 // pred_region
          %s3357 = sand.u32 %s262, 1
          %s3358 = scalar_lea.sflag [#allocation4], %s3357
          %s3359 = sand.u32 %s262, 1
          %s3360 = smul.addr %s3359, 8
          %s3361 = scalar_lea.vmem [#allocation5], %s3360
          %3362 = dma.done %s3358, 128
        $region84: #{tpu_custom_call.1} parent=71 // pred_fallthru
          _
      $region72: #{tpu_custom_call.1} parent=5 // pred_fallthru
        _
    $region6: #{tpu_custom_call.1} parent=1 // loop_footer
      %s27 = sadd.s32 1, %s23
    $region7: #{tpu_custom_call.1} parent=1 // loop_footer_branch
      %22 = sbr.rel target = $region3
    $region8: #{tpu_custom_call.1} parent=1 // loop_exit
      _
    %3363 = vsyncpa [#allocation3], 1
    %s3364 = scalar_lea.sflag [#allocation3], 1
    %3365 = vsyncpa %s3364, 1
    %3366 = vsyncpa [#allocation4], 1
    %s3367 = scalar_lea.sflag [#allocation4], 1
    %3368 = vsyncpa %s3367, 1

</llo_original>
